<compile_context>
chip_gen: v6e
topology: v6e:2x2x1
jax: 0.10.0
libtpu: 0.0.40
codegen_flags: <defaults>
</compile_context>

<pallas_src>
import math

import jax
import jax.numpy as jnp
from jax import lax
from jax.experimental import pallas as pl
from jax.experimental.pallas import tpu as pltpu


NEG = -1e9


class Args:
    d_model = 32
    n_heads = 4
    d_queries = 8          # d_model // n_heads
    d_values = 8
    d_inner = 64
    n_decoder_layers = 2
    dropout = 0.0          # eval-mode dropout == identity
    norm_eps = 1e-5
    maxlen = 16
    positional_encoding_type = "sinusoidal"
    latent_repr_type = ""  # no 't' -> vae_t = False
    use_admin = False


# --------------------------- parameter construction -------------------------

def sinusoidal_positional_encoding(maxlen, d_model):
    pos = jnp.arange(maxlen, dtype=jnp.float32)[:, None]
    i = jnp.arange(d_model, dtype=jnp.float32)[None, :]
    angle = pos / jnp.power(10000.0, (2.0 * jnp.floor(i / 2.0)) / d_model)
    pe = jnp.where((jnp.arange(d_model) % 2) == 0, jnp.sin(angle), jnp.cos(angle))
    return pe.astype(jnp.float32)  # (maxlen, d_model)


def init_params(key, args, vocab_size):
    D, H, Dq, Dv, Di, L = (args.d_model, args.n_heads, args.d_queries,
                           args.d_values, args.d_inner, args.n_decoder_layers)
    HDq, HDv = H * Dq, H * Dv

    def dense_stack(k, fan_in, fan_out):
        kw, kb = jax.random.split(k)
        lim = 1.0 / math.sqrt(fan_in)
        w = jax.random.uniform(kw, (L, fan_in, fan_out), jnp.float32, -lim, lim)
        b = jax.random.uniform(kb, (L, 1, fan_out), jnp.float32, -lim, lim)
        return w, b

    def dense2(k, fan_in, fan_out):
        kw, kb = jax.random.split(k)
        lim = 1.0 / math.sqrt(fan_in)
        w = jax.random.uniform(kw, (fan_in, fan_out), jnp.float32, -lim, lim)
        b = jax.random.uniform(kb, (1, fan_out), jnp.float32, -lim, lim)
        return w, b

    keys = jax.random.split(key, 20)
    p = {
        "emb": jax.random.normal(keys[0], (vocab_size, D), jnp.float32) * 0.02,
        "pos_enc": sinusoidal_positional_encoding(args.maxlen, D),
        "final_ln_g": jnp.ones((1, D), jnp.float32),
        "final_ln_b": jnp.zeros((1, D), jnp.float32),
        "sa_ln_g": jnp.ones((L, 1, D), jnp.float32),
        "sa_ln_b": jnp.zeros((L, 1, D), jnp.float32),
        "ca_ln_g": jnp.ones((L, 1, D), jnp.float32),
        "ca_ln_b": jnp.zeros((L, 1, D), jnp.float32),
        "fc_ln_g": jnp.ones((L, 1, D), jnp.float32),
        "fc_ln_b": jnp.zeros((L, 1, D), jnp.float32),
    }
    p["cls_w"], p["cls_b"] = dense2(keys[1], D, vocab_size)
    # self-attention (separate Q/K/V projections -> lane-0-aligned results)
    p["sa_wq"], p["sa_bq"] = dense_stack(keys[2], D, HDq)
    p["sa_wk"], p["sa_bk"] = dense_stack(keys[3], D, HDq)
    p["sa_wv"], p["sa_bv"] = dense_stack(keys[4], D, HDv)
    p["sa_wo"], p["sa_bo"] = dense_stack(keys[5], HDv, D)
    # cross-attention (Q from decoder, K/V from encoder)
    p["ca_wq"], p["ca_bq"] = dense_stack(keys[6], D, HDq)
    p["ca_wk"], p["ca_bk"] = dense_stack(keys[7], D, HDq)
    p["ca_wv"], p["ca_bv"] = dense_stack(keys[8], D, HDv)
    p["ca_wo"], p["ca_bo"] = dense_stack(keys[9], HDv, D)
    # position-wise FCN
    p["fc_w1"], p["fc_b1"] = dense_stack(keys[10], D, Di)
    p["fc_w2"], p["fc_b2"] = dense_stack(keys[11], Di, D)
    return p


LAYER_KEYS = ["sa_ln_g", "sa_ln_b", "sa_wq", "sa_bq", "sa_wk", "sa_bk",
              "sa_wv", "sa_bv", "sa_wo", "sa_bo",
              "ca_ln_g", "ca_ln_b", "ca_wq", "ca_bq", "ca_wk", "ca_bk",
              "ca_wv", "ca_bv", "ca_wo", "ca_bo",
              "fc_ln_g", "fc_ln_b", "fc_w1", "fc_b1", "fc_w2", "fc_b2"]


# ------------------------------ fused kernel --------------------------------

def make_decoder_kernel(args, B, Tq, Tk):
    D, H, Dq, Dv, Di, L = (args.d_model, args.n_heads, args.d_queries,
                           args.d_values, args.d_inner, args.n_decoder_layers)
    HDq, HDv = H * Dq, H * Dv
    N, M = B * Tq, B * Tk            # flattened decoder / encoder row counts
    eps = args.norm_eps
    scale = 1.0 / math.sqrt(Dq)
    f32 = jnp.float32

    def layernorm(x, g, b):
        mu = jnp.mean(x, axis=-1, keepdims=True)
        var = jnp.mean(jnp.square(x - mu), axis=-1, keepdims=True)
        return (x - mu) * lax.rsqrt(var + eps) * g + b

    def attention(xq_ln, kv_src, wq, bq, wk, bk, wv, bv, wo, bo,
                  bias, qmask, cmask):
        # xq_ln:(N,D) kv_src:(M_kv,D) bias:(H*N,M_kv) qmask:(H*N,HDq) cmask:(H*N,HDv)
        q = jnp.dot(xq_ln, wq, preferred_element_type=f32) + bq     # (N, HDq)
        k = jnp.dot(kv_src, wk, preferred_element_type=f32) + bk    # (M_kv, HDq)
        v = jnp.dot(kv_src, wv, preferred_element_type=f32) + bv    # (M_kv, HDv)
        # Head-stacked rows: replicate Q along sublanes, zero non-head channels.
        q_blk = jnp.concatenate([q] * H, axis=0) * qmask            # (H*N, HDq)
        # One score matmul for all heads & batches; bias already holds
        # causal + key-padding + batch-block masking for every head row.
        s = lax.dot_general(q_blk, k, (((1,), (1,)), ((), ())),
                            preferred_element_type=f32) * scale + bias
        m = jnp.max(s, axis=-1, keepdims=True)
        p = jnp.exp(s - m)
        denom = jnp.sum(p, axis=-1, keepdims=True)
        p = p * pl.reciprocal(denom, approx=True)
        # One context matmul; keep only each row-block's own head channels.
        c = jnp.dot(p, v, preferred_element_type=f32) * cmask       # (H*N, HDv)
        merged = c[0:N]                                             # head merge:
        for h in range(1, H):                                       # 3 aligned
            merged = merged + c[h * N:(h + 1) * N]                  # sublane adds
        # Single output projection against the whole Wo.
        return jnp.dot(merged, wo, preferred_element_type=f32) + bo  # (N, D)

    def kernel(x0_ref, enc_ref, sab_ref, cab_ref, qmask_ref, cmask_ref, *rest):
        (sa_ln_g, sa_ln_b, sa_wq, sa_bq, sa_wk, sa_bk, sa_wv, sa_bv, sa_wo, sa_bo,
         ca_ln_g, ca_ln_b, ca_wq, ca_bq, ca_wk, ca_bk, ca_wv, ca_bv, ca_wo, ca_bo,
         fc_ln_g, fc_ln_b, fc_w1, fc_b1, fc_w2, fc_b2,
         fin_g, fin_b, cls_w, cls_b, out_ref) = rest

        x = x0_ref[...]            # (N, D)
        enc = enc_ref[...]         # (M, D)
        sab = sab_ref[...]         # (H*N, N)
        cab = cab_ref[...]         # (H*N, M)
        qmask = qmask_ref[...]     # (H*N, HDq)
        cmask = cmask_ref[...]     # (H*N, HDv)

        # L is small and static -> unrolled layer loop, static weight indexing.
        for li in range(L):
            # -------- self-attention (pre-LN) --------
            h = layernorm(x, sa_ln_g[li], sa_ln_b[li])
            x = x + attention(h, h,
                              sa_wq[li], sa_bq[li], sa_wk[li], sa_bk[li],
                              sa_wv[li], sa_bv[li], sa_wo[li], sa_bo[li],
                              sab, qmask, cmask)
            # -------- cross-attention (Q normalized, K/V from raw encoder) ----
            hq = layernorm(x, ca_ln_g[li], ca_ln_b[li])
            x = x + attention(hq, enc,
                              ca_wq[li], ca_bq[li], ca_wk[li], ca_bk[li],
                              ca_wv[li], ca_bv[li], ca_wo[li], ca_bo[li],
                              cab, qmask, cmask)
            # -------- position-wise FCN (pre-LN) --------
            hf = layernorm(x, fc_ln_g[li], fc_ln_b[li])
            h1 = jnp.maximum(
                jnp.dot(hf, fc_w1[li], preferred_element_type=f32) + fc_b1[li],
                0.0)
            x = x + jnp.dot(h1, fc_w2[li], preferred_element_type=f32) + fc_b2[li]

        # -------- final LayerNorm + classifier (lane-dense vocab output) ------
        y = layernorm(x, fin_g[...], fin_b[...])
        logits = jnp.dot(y, cls_w[...], preferred_element_type=f32) + cls_b[...]
        out_ref[...] = logits.astype(out_ref.dtype)

    return kernel


# ------------------------------ decoder forward ------------------------------

def decoder_forward(params, args, decoder_tokens, encoder_sequences,
                    src_key_padding_mask, tgt_key_padding_mask):
    """
    decoder_tokens:        int32 (B, Tq)
    encoder_sequences:     f32   (B, Tk, d_model)
    src_key_padding_mask:  bool  (B, Tk)   True = padding
    tgt_key_padding_mask:  bool  (B, Tq)   True = padding
    Returns the same tuple structure as the PyTorch Decoder (VAE / MoE outputs
    are None / [] in this configuration).
    """
    B, Tq = decoder_tokens.shape
    Tk = encoder_sequences.shape[1]
    D, H, Dq, Dv = args.d_model, args.n_heads, args.d_queries, args.d_values
    N, M = B * Tq, B * Tk
    V = params["cls_w"].shape[1]

    # embedding gather (glue) * sqrt(d_model) + positional encoding; dropout = id
    # TODO(synk): VAE reparameterized embedding (latent_repr_type with 't') is
    # config-gated off and not reproduced here.
    emb = jnp.take(params["emb"], decoder_tokens, axis=0) * math.sqrt(D)
    x0 = (emb + params["pos_enc"][None, :Tq, :]).astype(jnp.float32).reshape(N, D)
    enc = encoder_sequences.astype(jnp.float32).reshape(M, D)

    # Fused additive biases (causal + key padding + batch block-diagonal),
    # tiled over heads once in the wrapper -> tiny const VMEM inputs.
    qb = jnp.arange(N) // Tq
    qi = jnp.arange(N) % Tq
    kb_t = jnp.arange(N) // Tq
    ki_t = jnp.arange(N) % Tq
    tgt_nopad = jnp.logical_not(tgt_key_padding_mask.reshape(N))
    sa_ok = ((qb[:, None] == kb_t[None, :])
             & (ki_t[None, :] <= qi[:, None])
             & tgt_nopad[None, :])
    sa_bias = jnp.tile(jnp.where(sa_ok, 0.0, NEG).astype(jnp.float32), (H, 1))

    kb_s = jnp.arange(M) // Tk
    src_nopad = jnp.logical_not(src_key_padding_mask.reshape(M))
    ca_ok = (qb[:, None] == kb_s[None, :]) & src_nopad[None, :]
    ca_bias = jnp.tile(jnp.where(ca_ok, 0.0, NEG).astype(jnp.float32), (H, 1))

    # Head channel-selection masks for the row-stacked attention.
    row_head = jnp.arange(H * N) // N
    q_headmask = (row_head[:, None] ==
                  (jnp.arange(H * Dq) // Dq)[None, :]).astype(jnp.float32)
    ctx_headmask = (row_head[:, None] ==
                    (jnp.arange(H * Dv) // Dv)[None, :]).astype(jnp.float32)

    inputs = ([x0, enc, sa_bias, ca_bias, q_headmask, ctx_headmask]
              + [params[k] for k in LAYER_KEYS]
              + [params["final_ln_g"], params["final_ln_b"],
                 params["cls_w"], params["cls_b"]])

    kernel = make_decoder_kernel(args, B, Tq, Tk)
    vmem = pl.BlockSpec(memory_space=pltpu.MemorySpace.VMEM)

    # Single grid step (grid=()): everything is resident in VMEM for one shot;
    # no per-step overhead and every weight is DMA'd exactly once.
    logits = pl.pallas_call(
        kernel,
        out_shape=jax.ShapeDtypeStruct((N, V), jnp.float32),
        in_specs=[vmem] * len(inputs),
        out_specs=vmem,
    )(*inputs)

    logits = logits.reshape(B, Tq, V)

    # Non-VAE config: every mu/logvar is None; non-MoE FCN: gating_variances = []
    # TODO(synk): admin_torch residuals and MoE gating variances are
    # config-gated off; not reproduced here.
    none2 = (None, None)
    return (logits, none2, none2, none2, none2, none2, none2, none2, [])


# --------------------------- pure-JAX reference ------------------------------

def decoder_forward_ref(params, args, decoder_tokens, encoder_sequences,
                        src_key_padding_mask, tgt_key_padding_mask):
    B, Tq = decoder_tokens.shape
    D, H, Dq, Dv, L = (args.d_model, args.n_heads, args.d_queries,
                       args.d_values, args.n_decoder_layers)
    eps = args.norm_eps
    scale = 1.0 / math.sqrt(Dq)

    def ln(x, g, b):
        mu = jnp.mean(x, -1, keepdims=True)
        var = jnp.mean(jnp.square(x - mu), -1, keepdims=True)
        return (x - mu) * lax.rsqrt(var + eps) * g + b

    def heads(t, dh):
        Bb, T, _ = t.shape
        return t.reshape(Bb, T, H, dh).transpose(0, 2, 1, 3)

    def merge(t):
        Bb, Hh, T, dh = t.shape
        return t.transpose(0, 2, 1, 3).reshape(Bb, T, Hh * dh)

    def attn(q, k, v, bias):
        s = jnp.einsum("bhqd,bhkd->bhqk", q, k) * scale + bias
        p = jax.nn.softmax(s, axis=-1)
        return jnp.einsum("bhqk,bhkd->bhqd", p, v)

    emb = jnp.take(params["emb"], decoder_tokens, axis=0) * math.sqrt(D)
    x = emb + params["pos_enc"][None, :Tq, :]
    causal = jnp.where(jnp.arange(Tq)[None, :] > jnp.arange(Tq)[:, None], NEG, 0.0)
    tgt_bias = jnp.where(tgt_key_padding_mask, NEG, 0.0)[:, None, None, :]
    src_bias = jnp.where(src_key_padding_mask, NEG, 0.0)[:, None, None, :]
    enc = encoder_sequences

    for li in range(L):
        h = ln(x, params["sa_ln_g"][li, 0], params["sa_ln_b"][li, 0])
        q = h @ params["sa_wq"][li] + params["sa_bq"][li, 0]
        k = h @ params["sa_wk"][li] + params["sa_bk"][li, 0]
        v = h @ params["sa_wv"][li] + params["sa_bv"][li, 0]
        ctx = merge(attn(heads(q, Dq), heads(k, Dq), heads(v, Dv),
                         causal[None, None] + tgt_bias))
        x = ctx @ params["sa_wo"][li] + params["sa_bo"][li, 0] + x

        hq = ln(x, params["ca_ln_g"][li, 0], params["ca_ln_b"][li, 0])
        q = hq @ params["ca_wq"][li] + params["ca_bq"][li, 0]
        k = enc @ params["ca_wk"][li] + params["ca_bk"][li, 0]
        v = enc @ params["ca_wv"][li] + params["ca_bv"][li, 0]
        ctx = merge(attn(heads(q, Dq), heads(k, Dq), heads(v, Dv), src_bias))
        x = ctx @ params["ca_wo"][li] + params["ca_bo"][li, 0] + x

        hf = ln(x, params["fc_ln_g"][li, 0], params["fc_ln_b"][li, 0])
        h1 = jax.nn.relu(hf @ params["fc_w1"][li] + params["fc_b1"][li, 0])
        x = h1 @ params["fc_w2"][li] + params["fc_b2"][li, 0] + x

    y = ln(x, params["final_ln_g"][0], params["final_ln_b"][0])
    return y @ params["cls_w"] + params["cls_b"][0]


# ----------------------------------- main ------------------------------------

if __name__ == "__main__":
    args = Args()
    vocab_size = 128          # 128 -> lane-dense classifier output
    B, Tq, Tk = 2, 8, 8

    key = jax.random.PRNGKey(0)
    k_par, k_tok, k_enc = jax.random.split(key, 3)
    params = init_params(k_par, args, vocab_size)

    decoder_tokens = jax.random.randint(k_tok, (B, Tq), 0, vocab_size, jnp.int32)
    encoder_sequences = jax.random.normal(k_enc, (B, Tk, args.d_model), jnp.float32)
    src_key_padding_mask = jnp.zeros((B, Tk), jnp.bool_).at[:, Tk - 1].set(True)
    tgt_key_padding_mask = jnp.zeros((B, Tq), jnp.bool_).at[:, Tq - 1].set(True)

    @jax.jit
    def fwd(params, tokens, enc, spm, tpm):
        return decoder_forward(params, args, tokens, enc, spm, tpm)

    out = fwd(params, decoder_tokens, encoder_sequences,
              src_key_padding_mask, tgt_key_padding_mask)
    logits = out[0]
    jax.block_until_ready(logits)

    assert logits.shape == (B, Tq, vocab_size)
    assert bool(jnp.all(jnp.isfinite(logits)))

    ref = decoder_forward_ref(params, args, decoder_tokens, encoder_sequences,
                              src_key_padding_mask, tgt_key_padding_mask)
    max_err = float(jnp.max(jnp.abs(logits - ref)))
    assert max_err < 1e-1, f"max abs err vs reference: {max_err}"

    print("KERNEL_OK")
</pallas_src>

<mosaic_0001>
module attributes {stable_mosaic.version = 11 : i64} {
  func.func @kernel(%arg0: memref<16x32xf32, #tpu.memory_space<vmem>>, %arg1: memref<16x32xf32, #tpu.memory_space<vmem>>, %arg2: memref<64x16xf32, #tpu.memory_space<vmem>>, %arg3: memref<64x16xf32, #tpu.memory_space<vmem>>, %arg4: memref<64x32xf32, #tpu.memory_space<vmem>>, %arg5: memref<64x32xf32, #tpu.memory_space<vmem>>, %arg6: memref<2x1x32xf32, #tpu.memory_space<vmem>>, %arg7: memref<2x1x32xf32, #tpu.memory_space<vmem>>, %arg8: memref<2x32x32xf32, #tpu.memory_space<vmem>>, %arg9: memref<2x1x32xf32, #tpu.memory_space<vmem>>, %arg10: memref<2x32x32xf32, #tpu.memory_space<vmem>>, %arg11: memref<2x1x32xf32, #tpu.memory_space<vmem>>, %arg12: memref<2x32x32xf32, #tpu.memory_space<vmem>>, %arg13: memref<2x1x32xf32, #tpu.memory_space<vmem>>, %arg14: memref<2x32x32xf32, #tpu.memory_space<vmem>>, %arg15: memref<2x1x32xf32, #tpu.memory_space<vmem>>, %arg16: memref<2x1x32xf32, #tpu.memory_space<vmem>>, %arg17: memref<2x1x32xf32, #tpu.memory_space<vmem>>, %arg18: memref<2x32x32xf32, #tpu.memory_space<vmem>>, %arg19: memref<2x1x32xf32, #tpu.memory_space<vmem>>, %arg20: memref<2x32x32xf32, #tpu.memory_space<vmem>>, %arg21: memref<2x1x32xf32, #tpu.memory_space<vmem>>, %arg22: memref<2x32x32xf32, #tpu.memory_space<vmem>>, %arg23: memref<2x1x32xf32, #tpu.memory_space<vmem>>, %arg24: memref<2x32x32xf32, #tpu.memory_space<vmem>>, %arg25: memref<2x1x32xf32, #tpu.memory_space<vmem>>, %arg26: memref<2x1x32xf32, #tpu.memory_space<vmem>>, %arg27: memref<2x1x32xf32, #tpu.memory_space<vmem>>, %arg28: memref<2x32x64xf32, #tpu.memory_space<vmem>>, %arg29: memref<2x1x64xf32, #tpu.memory_space<vmem>>, %arg30: memref<2x64x32xf32, #tpu.memory_space<vmem>>, %arg31: memref<2x1x32xf32, #tpu.memory_space<vmem>>, %arg32: memref<1x32xf32, #tpu.memory_space<vmem>>, %arg33: memref<1x32xf32, #tpu.memory_space<vmem>>, %arg34: memref<32x128xf32, #tpu.memory_space<vmem>>, %arg35: memref<1x128xf32, #tpu.memory_space<vmem>>, %arg36: memref<16x128xf32, #tpu.memory_space<vmem>>) attributes {dimension_semantics = [], scalar_prefetch = 0 : i64, scratch_operands = 0 : i64, tpu.core_type = #tpu.core_type<tc>} {
    %c0 = arith.constant 0 : index
    %c0_0 = arith.constant 0 : index
    %0 = vector.load %arg0[%c0, %c0_0] : memref<16x32xf32, #tpu.memory_space<vmem>>, vector<16x32xf32>
    %c0_1 = arith.constant 0 : index
    %c0_2 = arith.constant 0 : index
    %1 = vector.load %arg1[%c0_1, %c0_2] : memref<16x32xf32, #tpu.memory_space<vmem>>, vector<16x32xf32>
    %c0_3 = arith.constant 0 : index
    %c0_4 = arith.constant 0 : index
    %2 = vector.load %arg2[%c0_3, %c0_4] : memref<64x16xf32, #tpu.memory_space<vmem>>, vector<64x16xf32>
    %c0_5 = arith.constant 0 : index
    %c0_6 = arith.constant 0 : index
    %3 = vector.load %arg3[%c0_5, %c0_6] : memref<64x16xf32, #tpu.memory_space<vmem>>, vector<64x16xf32>
    %c0_7 = arith.constant 0 : index
    %c0_8 = arith.constant 0 : index
    %4 = vector.load %arg4[%c0_7, %c0_8] : memref<64x32xf32, #tpu.memory_space<vmem>>, vector<64x32xf32>
    %c0_9 = arith.constant 0 : index
    %c0_10 = arith.constant 0 : index
    %5 = vector.load %arg5[%c0_9, %c0_10] : memref<64x32xf32, #tpu.memory_space<vmem>>, vector<64x32xf32>
    %c0_11 = arith.constant 0 : index
    %c0_12 = arith.constant 0 : index
    %c0_13 = arith.constant 0 : index
    %6 = vector.load %arg6[%c0_11, %c0_12, %c0_13] : memref<2x1x32xf32, #tpu.memory_space<vmem>>, vector<1x1x32xf32>
    %7 = vector.shape_cast %6 : vector<1x1x32xf32> to vector<1x32xf32>
    %c0_14 = arith.constant 0 : index
    %c0_15 = arith.constant 0 : index
    %c0_16 = arith.constant 0 : index
    %8 = vector.load %arg7[%c0_14, %c0_15, %c0_16] : memref<2x1x32xf32, #tpu.memory_space<vmem>>, vector<1x1x32xf32>
    %9 = vector.shape_cast %8 : vector<1x1x32xf32> to vector<1x32xf32>
    %cst = arith.constant dense<0.000000e+00> : vector<16xf32>
    %10 = vector.multi_reduction <add>, %0, %cst [1] : vector<16x32xf32> to vector<16xf32>
    %11 = vector.shape_cast %10 : vector<16xf32> to vector<16x1xf32>
    %cst_17 = arith.constant 3.200000e+01 : f32
    %12 = vector.broadcast %cst_17 : f32 to vector<16x1xf32>
    %13 = arith.divf %11, %12 : vector<16x1xf32>
    %14 = vector.broadcast %13 : vector<16x1xf32> to vector<16x32xf32>
    %15 = arith.subf %0, %14 : vector<16x32xf32>
    %16 = arith.mulf %15, %15 : vector<16x32xf32>
    %cst_18 = arith.constant dense<0.000000e+00> : vector<16xf32>
    %17 = vector.multi_reduction <add>, %16, %cst_18 [1] : vector<16x32xf32> to vector<16xf32>
    %18 = vector.shape_cast %17 : vector<16xf32> to vector<16x1xf32>
    %cst_19 = arith.constant 3.200000e+01 : f32
    %19 = vector.broadcast %cst_19 : f32 to vector<16x1xf32>
    %20 = arith.divf %18, %19 : vector<16x1xf32>
    %21 = vector.broadcast %13 : vector<16x1xf32> to vector<16x32xf32>
    %22 = arith.subf %0, %21 : vector<16x32xf32>
    %cst_20 = arith.constant 9.99999974E-6 : f32
    %23 = vector.broadcast %cst_20 : f32 to vector<16x1xf32>
    %24 = arith.addf %20, %23 : vector<16x1xf32>
    %25 = math.rsqrt %24 : vector<16x1xf32>
    %26 = vector.broadcast %25 : vector<16x1xf32> to vector<16x32xf32>
    %27 = arith.mulf %22, %26 : vector<16x32xf32>
    %28 = vector.broadcast %7 : vector<1x32xf32> to vector<16x32xf32>
    %29 = arith.mulf %27, %28 : vector<16x32xf32>
    %30 = vector.broadcast %9 : vector<1x32xf32> to vector<16x32xf32>
    %31 = arith.addf %29, %30 : vector<16x32xf32>
    %c0_21 = arith.constant 0 : index
    %c0_22 = arith.constant 0 : index
    %c0_23 = arith.constant 0 : index
    %32 = vector.load %arg8[%c0_21, %c0_22, %c0_23] : memref<2x32x32xf32, #tpu.memory_space<vmem>>, vector<1x32x32xf32>
    %33 = vector.shape_cast %32 : vector<1x32x32xf32> to vector<32x32xf32>
    %c0_24 = arith.constant 0 : index
    %c0_25 = arith.constant 0 : index
    %c0_26 = arith.constant 0 : index
    %34 = vector.load %arg9[%c0_24, %c0_25, %c0_26] : memref<2x1x32xf32, #tpu.memory_space<vmem>>, vector<1x1x32xf32>
    %35 = vector.shape_cast %34 : vector<1x1x32xf32> to vector<1x32xf32>
    %c0_27 = arith.constant 0 : index
    %c0_28 = arith.constant 0 : index
    %c0_29 = arith.constant 0 : index
    %36 = vector.load %arg10[%c0_27, %c0_28, %c0_29] : memref<2x32x32xf32, #tpu.memory_space<vmem>>, vector<1x32x32xf32>
    %37 = vector.shape_cast %36 : vector<1x32x32xf32> to vector<32x32xf32>
    %c0_30 = arith.constant 0 : index
    %c0_31 = arith.constant 0 : index
    %c0_32 = arith.constant 0 : index
    %38 = vector.load %arg11[%c0_30, %c0_31, %c0_32] : memref<2x1x32xf32, #tpu.memory_space<vmem>>, vector<1x1x32xf32>
    %39 = vector.shape_cast %38 : vector<1x1x32xf32> to vector<1x32xf32>
    %c0_33 = arith.constant 0 : index
    %c0_34 = arith.constant 0 : index
    %c0_35 = arith.constant 0 : index
    %40 = vector.load %arg12[%c0_33, %c0_34, %c0_35] : memref<2x32x32xf32, #tpu.memory_space<vmem>>, vector<1x32x32xf32>
    %41 = vector.shape_cast %40 : vector<1x32x32xf32> to vector<32x32xf32>
    %c0_36 = arith.constant 0 : index
    %c0_37 = arith.constant 0 : index
    %c0_38 = arith.constant 0 : index
    %42 = vector.load %arg13[%c0_36, %c0_37, %c0_38] : memref<2x1x32xf32, #tpu.memory_space<vmem>>, vector<1x1x32xf32>
    %43 = vector.shape_cast %42 : vector<1x1x32xf32> to vector<1x32xf32>
    %c0_39 = arith.constant 0 : index
    %c0_40 = arith.constant 0 : index
    %c0_41 = arith.constant 0 : index
    %44 = vector.load %arg14[%c0_39, %c0_40, %c0_41] : memref<2x32x32xf32, #tpu.memory_space<vmem>>, vector<1x32x32xf32>
    %45 = vector.shape_cast %44 : vector<1x32x32xf32> to vector<32x32xf32>
    %c0_42 = arith.constant 0 : index
    %c0_43 = arith.constant 0 : index
    %c0_44 = arith.constant 0 : index
    %46 = vector.load %arg15[%c0_42, %c0_43, %c0_44] : memref<2x1x32xf32, #tpu.memory_space<vmem>>, vector<1x1x32xf32>
    %47 = vector.shape_cast %46 : vector<1x1x32xf32> to vector<1x32xf32>
    %cst_45 = arith.constant dense<0.000000e+00> : vector<16x32xf32>
    %48 = tpu.matmul %31, %33, %cst_45 {dimension_numbers = #tpu.dot_dimension_numbers<[1], [0], [0], [1], [0, 0, 1, 1], [], []>} : vector<16x32xf32>, vector<32x32xf32>, vector<16x32xf32> -> vector<16x32xf32>
    %49 = vector.broadcast %35 : vector<1x32xf32> to vector<16x32xf32>
    %50 = arith.addf %48, %49 : vector<16x32xf32>
    %cst_46 = arith.constant dense<0.000000e+00> : vector<16x32xf32>
    %51 = tpu.matmul %31, %37, %cst_46 {dimension_numbers = #tpu.dot_dimension_numbers<[1], [0], [0], [1], [0, 0, 1, 1], [], []>} : vector<16x32xf32>, vector<32x32xf32>, vector<16x32xf32> -> vector<16x32xf32>
    %52 = vector.broadcast %39 : vector<1x32xf32> to vector<16x32xf32>
    %53 = arith.addf %51, %52 : vector<16x32xf32>
    %cst_47 = arith.constant dense<0.000000e+00> : vector<16x32xf32>
    %54 = tpu.matmul %31, %41, %cst_47 {dimension_numbers = #tpu.dot_dimension_numbers<[1], [0], [0], [1], [0, 0, 1, 1], [], []>} : vector<16x32xf32>, vector<32x32xf32>, vector<16x32xf32> -> vector<16x32xf32>
    %55 = vector.broadcast %43 : vector<1x32xf32> to vector<16x32xf32>
    %56 = arith.addf %54, %55 : vector<16x32xf32>
    %57 = tpu.concatenate %50, %50, %50, %50 in 0 : vector<16x32xf32>, vector<16x32xf32>, vector<16x32xf32>, vector<16x32xf32> -> vector<64x32xf32>
    %58 = arith.mulf %57, %4 : vector<64x32xf32>
    %cst_48 = arith.constant dense<0.000000e+00> : vector<64x16xf32>
    %59 = tpu.matmul %58, %53, %cst_48 {dimension_numbers = #tpu.dot_dimension_numbers<[1], [1], [0], [0], [0, 0, 1, 0], [], []>} : vector<64x32xf32>, vector<16x32xf32>, vector<64x16xf32> -> vector<64x16xf32>
    %cst_49 = arith.constant 0.353553385 : f32
    %60 = vector.broadcast %cst_49 : f32 to vector<64x16xf32>
    %61 = arith.mulf %59, %60 : vector<64x16xf32>
    %62 = arith.addf %61, %2 : vector<64x16xf32>
    %cst_50 = arith.constant dense<0xFF800000> : vector<64xf32>
    %63 = vector.multi_reduction <maximumf>, %62, %cst_50 [1] : vector<64x16xf32> to vector<64xf32>
    %64 = vector.shape_cast %63 : vector<64xf32> to vector<64x1xf32>
    %65 = vector.broadcast %64 : vector<64x1xf32> to vector<64x16xf32>
    %66 = arith.subf %62, %65 : vector<64x16xf32>
    %67 = math.exp %66 : vector<64x16xf32>
    %cst_51 = arith.constant dense<0.000000e+00> : vector<64xf32>
    %68 = vector.multi_reduction <add>, %67, %cst_51 [1] : vector<64x16xf32> to vector<64xf32>
    %69 = vector.shape_cast %68 : vector<64xf32> to vector<64x1xf32>
    %70 = tpu.reciprocal %69 {approx = true} : vector<64x1xf32> -> vector<64x1xf32>
    %71 = vector.broadcast %70 : vector<64x1xf32> to vector<64x16xf32>
    %72 = arith.mulf %67, %71 : vector<64x16xf32>
    %cst_52 = arith.constant dense<0.000000e+00> : vector<64x32xf32>
    %73 = tpu.matmul %72, %56, %cst_52 {dimension_numbers = #tpu.dot_dimension_numbers<[1], [0], [0], [1], [0, 0, 1, 1], [], []>} : vector<64x16xf32>, vector<16x32xf32>, vector<64x32xf32> -> vector<64x32xf32>
    %74 = arith.mulf %73, %5 : vector<64x32xf32>
    %75 = vector.extract_strided_slice %74 {offsets = [0, 0], sizes = [16, 32], strides = [1, 1]} : vector<64x32xf32> to vector<16x32xf32>
    %76 = vector.extract_strided_slice %74 {offsets = [16, 0], sizes = [16, 32], strides = [1, 1]} : vector<64x32xf32> to vector<16x32xf32>
    %77 = arith.addf %75, %76 : vector<16x32xf32>
    %78 = vector.extract_strided_slice %74 {offsets = [32, 0], sizes = [16, 32], strides = [1, 1]} : vector<64x32xf32> to vector<16x32xf32>
    %79 = arith.addf %77, %78 : vector<16x32xf32>
    %80 = vector.extract_strided_slice %74 {offsets = [48, 0], sizes = [16, 32], strides = [1, 1]} : vector<64x32xf32> to vector<16x32xf32>
    %81 = arith.addf %79, %80 : vector<16x32xf32>
    %cst_53 = arith.constant dense<0.000000e+00> : vector<16x32xf32>
    %82 = tpu.matmul %81, %45, %cst_53 {dimension_numbers = #tpu.dot_dimension_numbers<[1], [0], [0], [1], [0, 0, 1, 1], [], []>} : vector<16x32xf32>, vector<32x32xf32>, vector<16x32xf32> -> vector<16x32xf32>
    %83 = vector.broadcast %47 : vector<1x32xf32> to vector<16x32xf32>
    %84 = arith.addf %82, %83 : vector<16x32xf32>
    %85 = arith.addf %0, %84 : vector<16x32xf32>
    %c0_54 = arith.constant 0 : index
    %c0_55 = arith.constant 0 : index
    %c0_56 = arith.constant 0 : index
    %86 = vector.load %arg16[%c0_54, %c0_55, %c0_56] : memref<2x1x32xf32, #tpu.memory_space<vmem>>, vector<1x1x32xf32>
    %87 = vector.shape_cast %86 : vector<1x1x32xf32> to vector<1x32xf32>
    %c0_57 = arith.constant 0 : index
    %c0_58 = arith.constant 0 : index
    %c0_59 = arith.constant 0 : index
    %88 = vector.load %arg17[%c0_57, %c0_58, %c0_59] : memref<2x1x32xf32, #tpu.memory_space<vmem>>, vector<1x1x32xf32>
    %89 = vector.shape_cast %88 : vector<1x1x32xf32> to vector<1x32xf32>
    %cst_60 = arith.constant dense<0.000000e+00> : vector<16xf32>
    %90 = vector.multi_reduction <add>, %85, %cst_60 [1] : vector<16x32xf32> to vector<16xf32>
    %91 = vector.shape_cast %90 : vector<16xf32> to vector<16x1xf32>
    %cst_61 = arith.constant 3.200000e+01 : f32
    %92 = vector.broadcast %cst_61 : f32 to vector<16x1xf32>
    %93 = arith.divf %91, %92 : vector<16x1xf32>
    %94 = vector.broadcast %93 : vector<16x1xf32> to vector<16x32xf32>
    %95 = arith.subf %85, %94 : vector<16x32xf32>
    %96 = arith.mulf %95, %95 : vector<16x32xf32>
    %cst_62 = arith.constant dense<0.000000e+00> : vector<16xf32>
    %97 = vector.multi_reduction <add>, %96, %cst_62 [1] : vector<16x32xf32> to vector<16xf32>
    %98 = vector.shape_cast %97 : vector<16xf32> to vector<16x1xf32>
    %cst_63 = arith.constant 3.200000e+01 : f32
    %99 = vector.broadcast %cst_63 : f32 to vector<16x1xf32>
    %100 = arith.divf %98, %99 : vector<16x1xf32>
    %101 = vector.broadcast %93 : vector<16x1xf32> to vector<16x32xf32>
    %102 = arith.subf %85, %101 : vector<16x32xf32>
    %cst_64 = arith.constant 9.99999974E-6 : f32
    %103 = vector.broadcast %cst_64 : f32 to vector<16x1xf32>
    %104 = arith.addf %100, %103 : vector<16x1xf32>
    %105 = math.rsqrt %104 : vector<16x1xf32>
    %106 = vector.broadcast %105 : vector<16x1xf32> to vector<16x32xf32>
    %107 = arith.mulf %102, %106 : vector<16x32xf32>
    %108 = vector.broadcast %87 : vector<1x32xf32> to vector<16x32xf32>
    %109 = arith.mulf %107, %108 : vector<16x32xf32>
    %110 = vector.broadcast %89 : vector<1x32xf32> to vector<16x32xf32>
    %111 = arith.addf %109, %110 : vector<16x32xf32>
    %c0_65 = arith.constant 0 : index
    %c0_66 = arith.constant 0 : index
    %c0_67 = arith.constant 0 : index
    %112 = vector.load %arg18[%c0_65, %c0_66, %c0_67] : memref<2x32x32xf32, #tpu.memory_space<vmem>>, vector<1x32x32xf32>
    %113 = vector.shape_cast %112 : vector<1x32x32xf32> to vector<32x32xf32>
    %c0_68 = arith.constant 0 : index
    %c0_69 = arith.constant 0 : index
    %c0_70 = arith.constant 0 : index
    %114 = vector.load %arg19[%c0_68, %c0_69, %c0_70] : memref<2x1x32xf32, #tpu.memory_space<vmem>>, vector<1x1x32xf32>
    %115 = vector.shape_cast %114 : vector<1x1x32xf32> to vector<1x32xf32>
    %c0_71 = arith.constant 0 : index
    %c0_72 = arith.constant 0 : index
    %c0_73 = arith.constant 0 : index
    %116 = vector.load %arg20[%c0_71, %c0_72, %c0_73] : memref<2x32x32xf32, #tpu.memory_space<vmem>>, vector<1x32x32xf32>
    %117 = vector.shape_cast %116 : vector<1x32x32xf32> to vector<32x32xf32>
    %c0_74 = arith.constant 0 : index
    %c0_75 = arith.constant 0 : index
    %c0_76 = arith.constant 0 : index
    %118 = vector.load %arg21[%c0_74, %c0_75, %c0_76] : memref<2x1x32xf32, #tpu.memory_space<vmem>>, vector<1x1x32xf32>
    %119 = vector.shape_cast %118 : vector<1x1x32xf32> to vector<1x32xf32>
    %c0_77 = arith.constant 0 : index
    %c0_78 = arith.constant 0 : index
    %c0_79 = arith.constant 0 : index
    %120 = vector.load %arg22[%c0_77, %c0_78, %c0_79] : memref<2x32x32xf32, #tpu.memory_space<vmem>>, vector<1x32x32xf32>
    %121 = vector.shape_cast %120 : vector<1x32x32xf32> to vector<32x32xf32>
    %c0_80 = arith.constant 0 : index
    %c0_81 = arith.constant 0 : index
    %c0_82 = arith.constant 0 : index
    %122 = vector.load %arg23[%c0_80, %c0_81, %c0_82] : memref<2x1x32xf32, #tpu.memory_space<vmem>>, vector<1x1x32xf32>
    %123 = vector.shape_cast %122 : vector<1x1x32xf32> to vector<1x32xf32>
    %c0_83 = arith.constant 0 : index
    %c0_84 = arith.constant 0 : index
    %c0_85 = arith.constant 0 : index
    %124 = vector.load %arg24[%c0_83, %c0_84, %c0_85] : memref<2x32x32xf32, #tpu.memory_space<vmem>>, vector<1x32x32xf32>
    %125 = vector.shape_cast %124 : vector<1x32x32xf32> to vector<32x32xf32>
    %c0_86 = arith.constant 0 : index
    %c0_87 = arith.constant 0 : index
    %c0_88 = arith.constant 0 : index
    %126 = vector.load %arg25[%c0_86, %c0_87, %c0_88] : memref<2x1x32xf32, #tpu.memory_space<vmem>>, vector<1x1x32xf32>
    %127 = vector.shape_cast %126 : vector<1x1x32xf32> to vector<1x32xf32>
    %cst_89 = arith.constant dense<0.000000e+00> : vector<16x32xf32>
    %128 = tpu.matmul %111, %113, %cst_89 {dimension_numbers = #tpu.dot_dimension_numbers<[1], [0], [0], [1], [0, 0, 1, 1], [], []>} : vector<16x32xf32>, vector<32x32xf32>, vector<16x32xf32> -> vector<16x32xf32>
    %129 = vector.broadcast %115 : vector<1x32xf32> to vector<16x32xf32>
    %130 = arith.addf %128, %129 : vector<16x32xf32>
    %cst_90 = arith.constant dense<0.000000e+00> : vector<16x32xf32>
    %131 = tpu.matmul %1, %117, %cst_90 {dimension_numbers = #tpu.dot_dimension_numbers<[1], [0], [0], [1], [0, 0, 1, 1], [], []>} : vector<16x32xf32>, vector<32x32xf32>, vector<16x32xf32> -> vector<16x32xf32>
    %132 = vector.broadcast %119 : vector<1x32xf32> to vector<16x32xf32>
    %133 = arith.addf %131, %132 : vector<16x32xf32>
    %cst_91 = arith.constant dense<0.000000e+00> : vector<16x32xf32>
    %134 = tpu.matmul %1, %121, %cst_91 {dimension_numbers = #tpu.dot_dimension_numbers<[1], [0], [0], [1], [0, 0, 1, 1], [], []>} : vector<16x32xf32>, vector<32x32xf32>, vector<16x32xf32> -> vector<16x32xf32>
    %135 = vector.broadcast %123 : vector<1x32xf32> to vector<16x32xf32>
    %136 = arith.addf %134, %135 : vector<16x32xf32>
    %137 = tpu.concatenate %130, %130, %130, %130 in 0 : vector<16x32xf32>, vector<16x32xf32>, vector<16x32xf32>, vector<16x32xf32> -> vector<64x32xf32>
    %138 = arith.mulf %137, %4 : vector<64x32xf32>
    %cst_92 = arith.constant dense<0.000000e+00> : vector<64x16xf32>
    %139 = tpu.matmul %138, %133, %cst_92 {dimension_numbers = #tpu.dot_dimension_numbers<[1], [1], [0], [0], [0, 0, 1, 0], [], []>} : vector<64x32xf32>, vector<16x32xf32>, vector<64x16xf32> -> vector<64x16xf32>
    %cst_93 = arith.constant 0.353553385 : f32
    %140 = vector.broadcast %cst_93 : f32 to vector<64x16xf32>
    %141 = arith.mulf %139, %140 : vector<64x16xf32>
    %142 = arith.addf %141, %3 : vector<64x16xf32>
    %cst_94 = arith.constant dense<0xFF800000> : vector<64xf32>
    %143 = vector.multi_reduction <maximumf>, %142, %cst_94 [1] : vector<64x16xf32> to vector<64xf32>
    %144 = vector.shape_cast %143 : vector<64xf32> to vector<64x1xf32>
    %145 = vector.broadcast %144 : vector<64x1xf32> to vector<64x16xf32>
    %146 = arith.subf %142, %145 : vector<64x16xf32>
    %147 = math.exp %146 : vector<64x16xf32>
    %cst_95 = arith.constant dense<0.000000e+00> : vector<64xf32>
    %148 = vector.multi_reduction <add>, %147, %cst_95 [1] : vector<64x16xf32> to vector<64xf32>
    %149 = vector.shape_cast %148 : vector<64xf32> to vector<64x1xf32>
    %150 = tpu.reciprocal %149 {approx = true} : vector<64x1xf32> -> vector<64x1xf32>
    %151 = vector.broadcast %150 : vector<64x1xf32> to vector<64x16xf32>
    %152 = arith.mulf %147, %151 : vector<64x16xf32>
    %cst_96 = arith.constant dense<0.000000e+00> : vector<64x32xf32>
    %153 = tpu.matmul %152, %136, %cst_96 {dimension_numbers = #tpu.dot_dimension_numbers<[1], [0], [0], [1], [0, 0, 1, 1], [], []>} : vector<64x16xf32>, vector<16x32xf32>, vector<64x32xf32> -> vector<64x32xf32>
    %154 = arith.mulf %153, %5 : vector<64x32xf32>
    %155 = vector.extract_strided_slice %154 {offsets = [0, 0], sizes = [16, 32], strides = [1, 1]} : vector<64x32xf32> to vector<16x32xf32>
    %156 = vector.extract_strided_slice %154 {offsets = [16, 0], sizes = [16, 32], strides = [1, 1]} : vector<64x32xf32> to vector<16x32xf32>
    %157 = arith.addf %155, %156 : vector<16x32xf32>
    %158 = vector.extract_strided_slice %154 {offsets = [32, 0], sizes = [16, 32], strides = [1, 1]} : vector<64x32xf32> to vector<16x32xf32>
    %159 = arith.addf %157, %158 : vector<16x32xf32>
    %160 = vector.extract_strided_slice %154 {offsets = [48, 0], sizes = [16, 32], strides = [1, 1]} : vector<64x32xf32> to vector<16x32xf32>
    %161 = arith.addf %159, %160 : vector<16x32xf32>
    %cst_97 = arith.constant dense<0.000000e+00> : vector<16x32xf32>
    %162 = tpu.matmul %161, %125, %cst_97 {dimension_numbers = #tpu.dot_dimension_numbers<[1], [0], [0], [1], [0, 0, 1, 1], [], []>} : vector<16x32xf32>, vector<32x32xf32>, vector<16x32xf32> -> vector<16x32xf32>
    %163 = vector.broadcast %127 : vector<1x32xf32> to vector<16x32xf32>
    %164 = arith.addf %162, %163 : vector<16x32xf32>
    %165 = arith.addf %85, %164 : vector<16x32xf32>
    %c0_98 = arith.constant 0 : index
    %c0_99 = arith.constant 0 : index
    %c0_100 = arith.constant 0 : index
    %166 = vector.load %arg26[%c0_98, %c0_99, %c0_100] : memref<2x1x32xf32, #tpu.memory_space<vmem>>, vector<1x1x32xf32>
    %167 = vector.shape_cast %166 : vector<1x1x32xf32> to vector<1x32xf32>
    %c0_101 = arith.constant 0 : index
    %c0_102 = arith.constant 0 : index
    %c0_103 = arith.constant 0 : index
    %168 = vector.load %arg27[%c0_101, %c0_102, %c0_103] : memref<2x1x32xf32, #tpu.memory_space<vmem>>, vector<1x1x32xf32>
    %169 = vector.shape_cast %168 : vector<1x1x32xf32> to vector<1x32xf32>
    %cst_104 = arith.constant dense<0.000000e+00> : vector<16xf32>
    %170 = vector.multi_reduction <add>, %165, %cst_104 [1] : vector<16x32xf32> to vector<16xf32>
    %171 = vector.shape_cast %170 : vector<16xf32> to vector<16x1xf32>
    %cst_105 = arith.constant 3.200000e+01 : f32
    %172 = vector.broadcast %cst_105 : f32 to vector<16x1xf32>
    %173 = arith.divf %171, %172 : vector<16x1xf32>
    %174 = vector.broadcast %173 : vector<16x1xf32> to vector<16x32xf32>
    %175 = arith.subf %165, %174 : vector<16x32xf32>
    %176 = arith.mulf %175, %175 : vector<16x32xf32>
    %cst_106 = arith.constant dense<0.000000e+00> : vector<16xf32>
    %177 = vector.multi_reduction <add>, %176, %cst_106 [1] : vector<16x32xf32> to vector<16xf32>
    %178 = vector.shape_cast %177 : vector<16xf32> to vector<16x1xf32>
    %cst_107 = arith.constant 3.200000e+01 : f32
    %179 = vector.broadcast %cst_107 : f32 to vector<16x1xf32>
    %180 = arith.divf %178, %179 : vector<16x1xf32>
    %181 = vector.broadcast %173 : vector<16x1xf32> to vector<16x32xf32>
    %182 = arith.subf %165, %181 : vector<16x32xf32>
    %cst_108 = arith.constant 9.99999974E-6 : f32
    %183 = vector.broadcast %cst_108 : f32 to vector<16x1xf32>
    %184 = arith.addf %180, %183 : vector<16x1xf32>
    %185 = math.rsqrt %184 : vector<16x1xf32>
    %186 = vector.broadcast %185 : vector<16x1xf32> to vector<16x32xf32>
    %187 = arith.mulf %182, %186 : vector<16x32xf32>
    %188 = vector.broadcast %167 : vector<1x32xf32> to vector<16x32xf32>
    %189 = arith.mulf %187, %188 : vector<16x32xf32>
    %190 = vector.broadcast %169 : vector<1x32xf32> to vector<16x32xf32>
    %191 = arith.addf %189, %190 : vector<16x32xf32>
    %c0_109 = arith.constant 0 : index
    %c0_110 = arith.constant 0 : index
    %c0_111 = arith.constant 0 : index
    %192 = vector.load %arg28[%c0_109, %c0_110, %c0_111] : memref<2x32x64xf32, #tpu.memory_space<vmem>>, vector<1x32x64xf32>
    %193 = vector.shape_cast %192 : vector<1x32x64xf32> to vector<32x64xf32>
    %cst_112 = arith.constant dense<0.000000e+00> : vector<16x64xf32>
    %194 = tpu.matmul %191, %193, %cst_112 {dimension_numbers = #tpu.dot_dimension_numbers<[1], [0], [0], [1], [0, 0, 1, 1], [], []>} : vector<16x32xf32>, vector<32x64xf32>, vector<16x64xf32> -> vector<16x64xf32>
    %c0_113 = arith.constant 0 : index
    %c0_114 = arith.constant 0 : index
    %c0_115 = arith.constant 0 : index
    %195 = vector.load %arg29[%c0_113, %c0_114, %c0_115] : memref<2x1x64xf32, #tpu.memory_space<vmem>>, vector<1x1x64xf32>
    %196 = vector.shape_cast %195 : vector<1x1x64xf32> to vector<1x64xf32>
    %197 = vector.broadcast %196 : vector<1x64xf32> to vector<16x64xf32>
    %198 = arith.addf %194, %197 : vector<16x64xf32>
    %cst_116 = arith.constant 0.000000e+00 : f32
    %199 = vector.broadcast %cst_116 : f32 to vector<16x64xf32>
    %200 = arith.maximumf %198, %199 : vector<16x64xf32>
    %c0_117 = arith.constant 0 : index
    %c0_118 = arith.constant 0 : index
    %c0_119 = arith.constant 0 : index
    %201 = vector.load %arg30[%c0_117, %c0_118, %c0_119] : memref<2x64x32xf32, #tpu.memory_space<vmem>>, vector<1x64x32xf32>
    %202 = vector.shape_cast %201 : vector<1x64x32xf32> to vector<64x32xf32>
    %cst_120 = arith.constant dense<0.000000e+00> : vector<16x32xf32>
    %203 = tpu.matmul %200, %202, %cst_120 {dimension_numbers = #tpu.dot_dimension_numbers<[1], [0], [0], [1], [0, 0, 1, 1], [], []>} : vector<16x64xf32>, vector<64x32xf32>, vector<16x32xf32> -> vector<16x32xf32>
    %204 = arith.addf %165, %203 : vector<16x32xf32>
    %c0_121 = arith.constant 0 : index
    %c0_122 = arith.constant 0 : index
    %c0_123 = arith.constant 0 : index
    %205 = vector.load %arg31[%c0_121, %c0_122, %c0_123] : memref<2x1x32xf32, #tpu.memory_space<vmem>>, vector<1x1x32xf32>
    %206 = vector.shape_cast %205 : vector<1x1x32xf32> to vector<1x32xf32>
    %207 = vector.broadcast %206 : vector<1x32xf32> to vector<16x32xf32>
    %208 = arith.addf %204, %207 : vector<16x32xf32>
    %c1 = arith.constant 1 : index
    %c0_124 = arith.constant 0 : index
    %c0_125 = arith.constant 0 : index
    %209 = vector.load %arg6[%c1, %c0_124, %c0_125] : memref<2x1x32xf32, #tpu.memory_space<vmem>>, vector<1x1x32xf32>
    %210 = vector.shape_cast %209 : vector<1x1x32xf32> to vector<1x32xf32>
    %c1_126 = arith.constant 1 : index
    %c0_127 = arith.constant 0 : index
    %c0_128 = arith.constant 0 : index
    %211 = vector.load %arg7[%c1_126, %c0_127, %c0_128] : memref<2x1x32xf32, #tpu.memory_space<vmem>>, vector<1x1x32xf32>
    %212 = vector.shape_cast %211 : vector<1x1x32xf32> to vector<1x32xf32>
    %cst_129 = arith.constant dense<0.000000e+00> : vector<16xf32>
    %213 = vector.multi_reduction <add>, %208, %cst_129 [1] : vector<16x32xf32> to vector<16xf32>
    %214 = vector.shape_cast %213 : vector<16xf32> to vector<16x1xf32>
    %cst_130 = arith.constant 3.200000e+01 : f32
    %215 = vector.broadcast %cst_130 : f32 to vector<16x1xf32>
    %216 = arith.divf %214, %215 : vector<16x1xf32>
    %217 = vector.broadcast %216 : vector<16x1xf32> to vector<16x32xf32>
    %218 = arith.subf %208, %217 : vector<16x32xf32>
    %219 = arith.mulf %218, %218 : vector<16x32xf32>
    %cst_131 = arith.constant dense<0.000000e+00> : vector<16xf32>
    %220 = vector.multi_reduction <add>, %219, %cst_131 [1] : vector<16x32xf32> to vector<16xf32>
    %221 = vector.shape_cast %220 : vector<16xf32> to vector<16x1xf32>
    %cst_132 = arith.constant 3.200000e+01 : f32
    %222 = vector.broadcast %cst_132 : f32 to vector<16x1xf32>
    %223 = arith.divf %221, %222 : vector<16x1xf32>
    %224 = vector.broadcast %216 : vector<16x1xf32> to vector<16x32xf32>
    %225 = arith.subf %208, %224 : vector<16x32xf32>
    %cst_133 = arith.constant 9.99999974E-6 : f32
    %226 = vector.broadcast %cst_133 : f32 to vector<16x1xf32>
    %227 = arith.addf %223, %226 : vector<16x1xf32>
    %228 = math.rsqrt %227 : vector<16x1xf32>
    %229 = vector.broadcast %228 : vector<16x1xf32> to vector<16x32xf32>
    %230 = arith.mulf %225, %229 : vector<16x32xf32>
    %231 = vector.broadcast %210 : vector<1x32xf32> to vector<16x32xf32>
    %232 = arith.mulf %230, %231 : vector<16x32xf32>
    %233 = vector.broadcast %212 : vector<1x32xf32> to vector<16x32xf32>
    %234 = arith.addf %232, %233 : vector<16x32xf32>
    %c1_134 = arith.constant 1 : index
    %c0_135 = arith.constant 0 : index
    %c0_136 = arith.constant 0 : index
    %235 = vector.load %arg8[%c1_134, %c0_135, %c0_136] : memref<2x32x32xf32, #tpu.memory_space<vmem>>, vector<1x32x32xf32>
    %236 = vector.shape_cast %235 : vector<1x32x32xf32> to vector<32x32xf32>
    %c1_137 = arith.constant 1 : index
    %c0_138 = arith.constant 0 : index
    %c0_139 = arith.constant 0 : index
    %237 = vector.load %arg9[%c1_137, %c0_138, %c0_139] : memref<2x1x32xf32, #tpu.memory_space<vmem>>, vector<1x1x32xf32>
    %238 = vector.shape_cast %237 : vector<1x1x32xf32> to vector<1x32xf32>
    %c1_140 = arith.constant 1 : index
    %c0_141 = arith.constant 0 : index
    %c0_142 = arith.constant 0 : index
    %239 = vector.load %arg10[%c1_140, %c0_141, %c0_142] : memref<2x32x32xf32, #tpu.memory_space<vmem>>, vector<1x32x32xf32>
    %240 = vector.shape_cast %239 : vector<1x32x32xf32> to vector<32x32xf32>
    %c1_143 = arith.constant 1 : index
    %c0_144 = arith.constant 0 : index
    %c0_145 = arith.constant 0 : index
    %241 = vector.load %arg11[%c1_143, %c0_144, %c0_145] : memref<2x1x32xf32, #tpu.memory_space<vmem>>, vector<1x1x32xf32>
    %242 = vector.shape_cast %241 : vector<1x1x32xf32> to vector<1x32xf32>
    %c1_146 = arith.constant 1 : index
    %c0_147 = arith.constant 0 : index
    %c0_148 = arith.constant 0 : index
    %243 = vector.load %arg12[%c1_146, %c0_147, %c0_148] : memref<2x32x32xf32, #tpu.memory_space<vmem>>, vector<1x32x32xf32>
    %244 = vector.shape_cast %243 : vector<1x32x32xf32> to vector<32x32xf32>
    %c1_149 = arith.constant 1 : index
    %c0_150 = arith.constant 0 : index
    %c0_151 = arith.constant 0 : index
    %245 = vector.load %arg13[%c1_149, %c0_150, %c0_151] : memref<2x1x32xf32, #tpu.memory_space<vmem>>, vector<1x1x32xf32>
    %246 = vector.shape_cast %245 : vector<1x1x32xf32> to vector<1x32xf32>
    %c1_152 = arith.constant 1 : index
    %c0_153 = arith.constant 0 : index
    %c0_154 = arith.constant 0 : index
    %247 = vector.load %arg14[%c1_152, %c0_153, %c0_154] : memref<2x32x32xf32, #tpu.memory_space<vmem>>, vector<1x32x32xf32>
    %248 = vector.shape_cast %247 : vector<1x32x32xf32> to vector<32x32xf32>
    %c1_155 = arith.constant 1 : index
    %c0_156 = arith.constant 0 : index
    %c0_157 = arith.constant 0 : index
    %249 = vector.load %arg15[%c1_155, %c0_156, %c0_157] : memref<2x1x32xf32, #tpu.memory_space<vmem>>, vector<1x1x32xf32>
    %250 = vector.shape_cast %249 : vector<1x1x32xf32> to vector<1x32xf32>
    %cst_158 = arith.constant dense<0.000000e+00> : vector<16x32xf32>
    %251 = tpu.matmul %234, %236, %cst_158 {dimension_numbers = #tpu.dot_dimension_numbers<[1], [0], [0], [1], [0, 0, 1, 1], [], []>} : vector<16x32xf32>, vector<32x32xf32>, vector<16x32xf32> -> vector<16x32xf32>
    %252 = vector.broadcast %238 : vector<1x32xf32> to vector<16x32xf32>
    %253 = arith.addf %251, %252 : vector<16x32xf32>
    %cst_159 = arith.constant dense<0.000000e+00> : vector<16x32xf32>
    %254 = tpu.matmul %234, %240, %cst_159 {dimension_numbers = #tpu.dot_dimension_numbers<[1], [0], [0], [1], [0, 0, 1, 1], [], []>} : vector<16x32xf32>, vector<32x32xf32>, vector<16x32xf32> -> vector<16x32xf32>
    %255 = vector.broadcast %242 : vector<1x32xf32> to vector<16x32xf32>
    %256 = arith.addf %254, %255 : vector<16x32xf32>
    %cst_160 = arith.constant dense<0.000000e+00> : vector<16x32xf32>
    %257 = tpu.matmul %234, %244, %cst_160 {dimension_numbers = #tpu.dot_dimension_numbers<[1], [0], [0], [1], [0, 0, 1, 1], [], []>} : vector<16x32xf32>, vector<32x32xf32>, vector<16x32xf32> -> vector<16x32xf32>
    %258 = vector.broadcast %246 : vector<1x32xf32> to vector<16x32xf32>
    %259 = arith.addf %257, %258 : vector<16x32xf32>
    %260 = tpu.concatenate %253, %253, %253, %253 in 0 : vector<16x32xf32>, vector<16x32xf32>, vector<16x32xf32>, vector<16x32xf32> -> vector<64x32xf32>
    %261 = arith.mulf %260, %4 : vector<64x32xf32>
    %cst_161 = arith.constant dense<0.000000e+00> : vector<64x16xf32>
    %262 = tpu.matmul %261, %256, %cst_161 {dimension_numbers = #tpu.dot_dimension_numbers<[1], [1], [0], [0], [0, 0, 1, 0], [], []>} : vector<64x32xf32>, vector<16x32xf32>, vector<64x16xf32> -> vector<64x16xf32>
    %cst_162 = arith.constant 0.353553385 : f32
    %263 = vector.broadcast %cst_162 : f32 to vector<64x16xf32>
    %264 = arith.mulf %262, %263 : vector<64x16xf32>
    %265 = arith.addf %264, %2 : vector<64x16xf32>
    %cst_163 = arith.constant dense<0xFF800000> : vector<64xf32>
    %266 = vector.multi_reduction <maximumf>, %265, %cst_163 [1] : vector<64x16xf32> to vector<64xf32>
    %267 = vector.shape_cast %266 : vector<64xf32> to vector<64x1xf32>
    %268 = vector.broadcast %267 : vector<64x1xf32> to vector<64x16xf32>
    %269 = arith.subf %265, %268 : vector<64x16xf32>
    %270 = math.exp %269 : vector<64x16xf32>
    %cst_164 = arith.constant dense<0.000000e+00> : vector<64xf32>
    %271 = vector.multi_reduction <add>, %270, %cst_164 [1] : vector<64x16xf32> to vector<64xf32>
    %272 = vector.shape_cast %271 : vector<64xf32> to vector<64x1xf32>
    %273 = tpu.reciprocal %272 {approx = true} : vector<64x1xf32> -> vector<64x1xf32>
    %274 = vector.broadcast %273 : vector<64x1xf32> to vector<64x16xf32>
    %275 = arith.mulf %270, %274 : vector<64x16xf32>
    %cst_165 = arith.constant dense<0.000000e+00> : vector<64x32xf32>
    %276 = tpu.matmul %275, %259, %cst_165 {dimension_numbers = #tpu.dot_dimension_numbers<[1], [0], [0], [1], [0, 0, 1, 1], [], []>} : vector<64x16xf32>, vector<16x32xf32>, vector<64x32xf32> -> vector<64x32xf32>
    %277 = arith.mulf %276, %5 : vector<64x32xf32>
    %278 = vector.extract_strided_slice %277 {offsets = [0, 0], sizes = [16, 32], strides = [1, 1]} : vector<64x32xf32> to vector<16x32xf32>
    %279 = vector.extract_strided_slice %277 {offsets = [16, 0], sizes = [16, 32], strides = [1, 1]} : vector<64x32xf32> to vector<16x32xf32>
    %280 = arith.addf %278, %279 : vector<16x32xf32>
    %281 = vector.extract_strided_slice %277 {offsets = [32, 0], sizes = [16, 32], strides = [1, 1]} : vector<64x32xf32> to vector<16x32xf32>
    %282 = arith.addf %280, %281 : vector<16x32xf32>
    %283 = vector.extract_strided_slice %277 {offsets = [48, 0], sizes = [16, 32], strides = [1, 1]} : vector<64x32xf32> to vector<16x32xf32>
    %284 = arith.addf %282, %283 : vector<16x32xf32>
    %cst_166 = arith.constant dense<0.000000e+00> : vector<16x32xf32>
    %285 = tpu.matmul %284, %248, %cst_166 {dimension_numbers = #tpu.dot_dimension_numbers<[1], [0], [0], [1], [0, 0, 1, 1], [], []>} : vector<16x32xf32>, vector<32x32xf32>, vector<16x32xf32> -> vector<16x32xf32>
    %286 = vector.broadcast %250 : vector<1x32xf32> to vector<16x32xf32>
    %287 = arith.addf %285, %286 : vector<16x32xf32>
    %288 = arith.addf %208, %287 : vector<16x32xf32>
    %c1_167 = arith.constant 1 : index
    %c0_168 = arith.constant 0 : index
    %c0_169 = arith.constant 0 : index
    %289 = vector.load %arg16[%c1_167, %c0_168, %c0_169] : memref<2x1x32xf32, #tpu.memory_space<vmem>>, vector<1x1x32xf32>
    %290 = vector.shape_cast %289 : vector<1x1x32xf32> to vector<1x32xf32>
    %c1_170 = arith.constant 1 : index
    %c0_171 = arith.constant 0 : index
    %c0_172 = arith.constant 0 : index
    %291 = vector.load %arg17[%c1_170, %c0_171, %c0_172] : memref<2x1x32xf32, #tpu.memory_space<vmem>>, vector<1x1x32xf32>
    %292 = vector.shape_cast %291 : vector<1x1x32xf32> to vector<1x32xf32>
    %cst_173 = arith.constant dense<0.000000e+00> : vector<16xf32>
    %293 = vector.multi_reduction <add>, %288, %cst_173 [1] : vector<16x32xf32> to vector<16xf32>
    %294 = vector.shape_cast %293 : vector<16xf32> to vector<16x1xf32>
    %cst_174 = arith.constant 3.200000e+01 : f32
    %295 = vector.broadcast %cst_174 : f32 to vector<16x1xf32>
    %296 = arith.divf %294, %295 : vector<16x1xf32>
    %297 = vector.broadcast %296 : vector<16x1xf32> to vector<16x32xf32>
    %298 = arith.subf %288, %297 : vector<16x32xf32>
    %299 = arith.mulf %298, %298 : vector<16x32xf32>
    %cst_175 = arith.constant dense<0.000000e+00> : vector<16xf32>
    %300 = vector.multi_reduction <add>, %299, %cst_175 [1] : vector<16x32xf32> to vector<16xf32>
    %301 = vector.shape_cast %300 : vector<16xf32> to vector<16x1xf32>
    %cst_176 = arith.constant 3.200000e+01 : f32
    %302 = vector.broadcast %cst_176 : f32 to vector<16x1xf32>
    %303 = arith.divf %301, %302 : vector<16x1xf32>
    %304 = vector.broadcast %296 : vector<16x1xf32> to vector<16x32xf32>
    %305 = arith.subf %288, %304 : vector<16x32xf32>
    %cst_177 = arith.constant 9.99999974E-6 : f32
    %306 = vector.broadcast %cst_177 : f32 to vector<16x1xf32>
    %307 = arith.addf %303, %306 : vector<16x1xf32>
    %308 = math.rsqrt %307 : vector<16x1xf32>
    %309 = vector.broadcast %308 : vector<16x1xf32> to vector<16x32xf32>
    %310 = arith.mulf %305, %309 : vector<16x32xf32>
    %311 = vector.broadcast %290 : vector<1x32xf32> to vector<16x32xf32>
    %312 = arith.mulf %310, %311 : vector<16x32xf32>
    %313 = vector.broadcast %292 : vector<1x32xf32> to vector<16x32xf32>
    %314 = arith.addf %312, %313 : vector<16x32xf32>
    %c1_178 = arith.constant 1 : index
    %c0_179 = arith.constant 0 : index
    %c0_180 = arith.constant 0 : index
    %315 = vector.load %arg18[%c1_178, %c0_179, %c0_180] : memref<2x32x32xf32, #tpu.memory_space<vmem>>, vector<1x32x32xf32>
    %316 = vector.shape_cast %315 : vector<1x32x32xf32> to vector<32x32xf32>
    %c1_181 = arith.constant 1 : index
    %c0_182 = arith.constant 0 : index
    %c0_183 = arith.constant 0 : index
    %317 = vector.load %arg19[%c1_181, %c0_182, %c0_183] : memref<2x1x32xf32, #tpu.memory_space<vmem>>, vector<1x1x32xf32>
    %318 = vector.shape_cast %317 : vector<1x1x32xf32> to vector<1x32xf32>
    %c1_184 = arith.constant 1 : index
    %c0_185 = arith.constant 0 : index
    %c0_186 = arith.constant 0 : index
    %319 = vector.load %arg20[%c1_184, %c0_185, %c0_186] : memref<2x32x32xf32, #tpu.memory_space<vmem>>, vector<1x32x32xf32>
    %320 = vector.shape_cast %319 : vector<1x32x32xf32> to vector<32x32xf32>
    %c1_187 = arith.constant 1 : index
    %c0_188 = arith.constant 0 : index
    %c0_189 = arith.constant 0 : index
    %321 = vector.load %arg21[%c1_187, %c0_188, %c0_189] : memref<2x1x32xf32, #tpu.memory_space<vmem>>, vector<1x1x32xf32>
    %322 = vector.shape_cast %321 : vector<1x1x32xf32> to vector<1x32xf32>
    %c1_190 = arith.constant 1 : index
    %c0_191 = arith.constant 0 : index
    %c0_192 = arith.constant 0 : index
    %323 = vector.load %arg22[%c1_190, %c0_191, %c0_192] : memref<2x32x32xf32, #tpu.memory_space<vmem>>, vector<1x32x32xf32>
    %324 = vector.shape_cast %323 : vector<1x32x32xf32> to vector<32x32xf32>
    %c1_193 = arith.constant 1 : index
    %c0_194 = arith.constant 0 : index
    %c0_195 = arith.constant 0 : index
    %325 = vector.load %arg23[%c1_193, %c0_194, %c0_195] : memref<2x1x32xf32, #tpu.memory_space<vmem>>, vector<1x1x32xf32>
    %326 = vector.shape_cast %325 : vector<1x1x32xf32> to vector<1x32xf32>
    %c1_196 = arith.constant 1 : index
    %c0_197 = arith.constant 0 : index
    %c0_198 = arith.constant 0 : index
    %327 = vector.load %arg24[%c1_196, %c0_197, %c0_198] : memref<2x32x32xf32, #tpu.memory_space<vmem>>, vector<1x32x32xf32>
    %328 = vector.shape_cast %327 : vector<1x32x32xf32> to vector<32x32xf32>
    %c1_199 = arith.constant 1 : index
    %c0_200 = arith.constant 0 : index
    %c0_201 = arith.constant 0 : index
    %329 = vector.load %arg25[%c1_199, %c0_200, %c0_201] : memref<2x1x32xf32, #tpu.memory_space<vmem>>, vector<1x1x32xf32>
    %330 = vector.shape_cast %329 : vector<1x1x32xf32> to vector<1x32xf32>
    %cst_202 = arith.constant dense<0.000000e+00> : vector<16x32xf32>
    %331 = tpu.matmul %314, %316, %cst_202 {dimension_numbers = #tpu.dot_dimension_numbers<[1], [0], [0], [1], [0, 0, 1, 1], [], []>} : vector<16x32xf32>, vector<32x32xf32>, vector<16x32xf32> -> vector<16x32xf32>
    %332 = vector.broadcast %318 : vector<1x32xf32> to vector<16x32xf32>
    %333 = arith.addf %331, %332 : vector<16x32xf32>
    %cst_203 = arith.constant dense<0.000000e+00> : vector<16x32xf32>
    %334 = tpu.matmul %1, %320, %cst_203 {dimension_numbers = #tpu.dot_dimension_numbers<[1], [0], [0], [1], [0, 0, 1, 1], [], []>} : vector<16x32xf32>, vector<32x32xf32>, vector<16x32xf32> -> vector<16x32xf32>
    %335 = vector.broadcast %322 : vector<1x32xf32> to vector<16x32xf32>
    %336 = arith.addf %334, %335 : vector<16x32xf32>
    %cst_204 = arith.constant dense<0.000000e+00> : vector<16x32xf32>
    %337 = tpu.matmul %1, %324, %cst_204 {dimension_numbers = #tpu.dot_dimension_numbers<[1], [0], [0], [1], [0, 0, 1, 1], [], []>} : vector<16x32xf32>, vector<32x32xf32>, vector<16x32xf32> -> vector<16x32xf32>
    %338 = vector.broadcast %326 : vector<1x32xf32> to vector<16x32xf32>
    %339 = arith.addf %337, %338 : vector<16x32xf32>
    %340 = tpu.concatenate %333, %333, %333, %333 in 0 : vector<16x32xf32>, vector<16x32xf32>, vector<16x32xf32>, vector<16x32xf32> -> vector<64x32xf32>
    %341 = arith.mulf %340, %4 : vector<64x32xf32>
    %cst_205 = arith.constant dense<0.000000e+00> : vector<64x16xf32>
    %342 = tpu.matmul %341, %336, %cst_205 {dimension_numbers = #tpu.dot_dimension_numbers<[1], [1], [0], [0], [0, 0, 1, 0], [], []>} : vector<64x32xf32>, vector<16x32xf32>, vector<64x16xf32> -> vector<64x16xf32>
    %cst_206 = arith.constant 0.353553385 : f32
    %343 = vector.broadcast %cst_206 : f32 to vector<64x16xf32>
    %344 = arith.mulf %342, %343 : vector<64x16xf32>
    %345 = arith.addf %344, %3 : vector<64x16xf32>
    %cst_207 = arith.constant dense<0xFF800000> : vector<64xf32>
    %346 = vector.multi_reduction <maximumf>, %345, %cst_207 [1] : vector<64x16xf32> to vector<64xf32>
    %347 = vector.shape_cast %346 : vector<64xf32> to vector<64x1xf32>
    %348 = vector.broadcast %347 : vector<64x1xf32> to vector<64x16xf32>
    %349 = arith.subf %345, %348 : vector<64x16xf32>
    %350 = math.exp %349 : vector<64x16xf32>
    %cst_208 = arith.constant dense<0.000000e+00> : vector<64xf32>
    %351 = vector.multi_reduction <add>, %350, %cst_208 [1] : vector<64x16xf32> to vector<64xf32>
    %352 = vector.shape_cast %351 : vector<64xf32> to vector<64x1xf32>
    %353 = tpu.reciprocal %352 {approx = true} : vector<64x1xf32> -> vector<64x1xf32>
    %354 = vector.broadcast %353 : vector<64x1xf32> to vector<64x16xf32>
    %355 = arith.mulf %350, %354 : vector<64x16xf32>
    %cst_209 = arith.constant dense<0.000000e+00> : vector<64x32xf32>
    %356 = tpu.matmul %355, %339, %cst_209 {dimension_numbers = #tpu.dot_dimension_numbers<[1], [0], [0], [1], [0, 0, 1, 1], [], []>} : vector<64x16xf32>, vector<16x32xf32>, vector<64x32xf32> -> vector<64x32xf32>
    %357 = arith.mulf %356, %5 : vector<64x32xf32>
    %358 = vector.extract_strided_slice %357 {offsets = [0, 0], sizes = [16, 32], strides = [1, 1]} : vector<64x32xf32> to vector<16x32xf32>
    %359 = vector.extract_strided_slice %357 {offsets = [16, 0], sizes = [16, 32], strides = [1, 1]} : vector<64x32xf32> to vector<16x32xf32>
    %360 = arith.addf %358, %359 : vector<16x32xf32>
    %361 = vector.extract_strided_slice %357 {offsets = [32, 0], sizes = [16, 32], strides = [1, 1]} : vector<64x32xf32> to vector<16x32xf32>
    %362 = arith.addf %360, %361 : vector<16x32xf32>
    %363 = vector.extract_strided_slice %357 {offsets = [48, 0], sizes = [16, 32], strides = [1, 1]} : vector<64x32xf32> to vector<16x32xf32>
    %364 = arith.addf %362, %363 : vector<16x32xf32>
    %cst_210 = arith.constant dense<0.000000e+00> : vector<16x32xf32>
    %365 = tpu.matmul %364, %328, %cst_210 {dimension_numbers = #tpu.dot_dimension_numbers<[1], [0], [0], [1], [0, 0, 1, 1], [], []>} : vector<16x32xf32>, vector<32x32xf32>, vector<16x32xf32> -> vector<16x32xf32>
    %366 = vector.broadcast %330 : vector<1x32xf32> to vector<16x32xf32>
    %367 = arith.addf %365, %366 : vector<16x32xf32>
    %368 = arith.addf %288, %367 : vector<16x32xf32>
    %c1_211 = arith.constant 1 : index
    %c0_212 = arith.constant 0 : index
    %c0_213 = arith.constant 0 : index
    %369 = vector.load %arg26[%c1_211, %c0_212, %c0_213] : memref<2x1x32xf32, #tpu.memory_space<vmem>>, vector<1x1x32xf32>
    %370 = vector.shape_cast %369 : vector<1x1x32xf32> to vector<1x32xf32>
    %c1_214 = arith.constant 1 : index
    %c0_215 = arith.constant 0 : index
    %c0_216 = arith.constant 0 : index
    %371 = vector.load %arg27[%c1_214, %c0_215, %c0_216] : memref<2x1x32xf32, #tpu.memory_space<vmem>>, vector<1x1x32xf32>
    %372 = vector.shape_cast %371 : vector<1x1x32xf32> to vector<1x32xf32>
    %cst_217 = arith.constant dense<0.000000e+00> : vector<16xf32>
    %373 = vector.multi_reduction <add>, %368, %cst_217 [1] : vector<16x32xf32> to vector<16xf32>
    %374 = vector.shape_cast %373 : vector<16xf32> to vector<16x1xf32>
    %cst_218 = arith.constant 3.200000e+01 : f32
    %375 = vector.broadcast %cst_218 : f32 to vector<16x1xf32>
    %376 = arith.divf %374, %375 : vector<16x1xf32>
    %377 = vector.broadcast %376 : vector<16x1xf32> to vector<16x32xf32>
    %378 = arith.subf %368, %377 : vector<16x32xf32>
    %379 = arith.mulf %378, %378 : vector<16x32xf32>
    %cst_219 = arith.constant dense<0.000000e+00> : vector<16xf32>
    %380 = vector.multi_reduction <add>, %379, %cst_219 [1] : vector<16x32xf32> to vector<16xf32>
    %381 = vector.shape_cast %380 : vector<16xf32> to vector<16x1xf32>
    %cst_220 = arith.constant 3.200000e+01 : f32
    %382 = vector.broadcast %cst_220 : f32 to vector<16x1xf32>
    %383 = arith.divf %381, %382 : vector<16x1xf32>
    %384 = vector.broadcast %376 : vector<16x1xf32> to vector<16x32xf32>
    %385 = arith.subf %368, %384 : vector<16x32xf32>
    %cst_221 = arith.constant 9.99999974E-6 : f32
    %386 = vector.broadcast %cst_221 : f32 to vector<16x1xf32>
    %387 = arith.addf %383, %386 : vector<16x1xf32>
    %388 = math.rsqrt %387 : vector<16x1xf32>
    %389 = vector.broadcast %388 : vector<16x1xf32> to vector<16x32xf32>
    %390 = arith.mulf %385, %389 : vector<16x32xf32>
    %391 = vector.broadcast %370 : vector<1x32xf32> to vector<16x32xf32>
    %392 = arith.mulf %390, %391 : vector<16x32xf32>
    %393 = vector.broadcast %372 : vector<1x32xf32> to vector<16x32xf32>
    %394 = arith.addf %392, %393 : vector<16x32xf32>
    %c1_222 = arith.constant 1 : index
    %c0_223 = arith.constant 0 : index
    %c0_224 = arith.constant 0 : index
    %395 = vector.load %arg28[%c1_222, %c0_223, %c0_224] : memref<2x32x64xf32, #tpu.memory_space<vmem>>, vector<1x32x64xf32>
    %396 = vector.shape_cast %395 : vector<1x32x64xf32> to vector<32x64xf32>
    %cst_225 = arith.constant dense<0.000000e+00> : vector<16x64xf32>
    %397 = tpu.matmul %394, %396, %cst_225 {dimension_numbers = #tpu.dot_dimension_numbers<[1], [0], [0], [1], [0, 0, 1, 1], [], []>} : vector<16x32xf32>, vector<32x64xf32>, vector<16x64xf32> -> vector<16x64xf32>
    %c1_226 = arith.constant 1 : index
    %c0_227 = arith.constant 0 : index
    %c0_228 = arith.constant 0 : index
    %398 = vector.load %arg29[%c1_226, %c0_227, %c0_228] : memref<2x1x64xf32, #tpu.memory_space<vmem>>, vector<1x1x64xf32>
    %399 = vector.shape_cast %398 : vector<1x1x64xf32> to vector<1x64xf32>
    %400 = vector.broadcast %399 : vector<1x64xf32> to vector<16x64xf32>
    %401 = arith.addf %397, %400 : vector<16x64xf32>
    %cst_229 = arith.constant 0.000000e+00 : f32
    %402 = vector.broadcast %cst_229 : f32 to vector<16x64xf32>
    %403 = arith.maximumf %401, %402 : vector<16x64xf32>
    %c1_230 = arith.constant 1 : index
    %c0_231 = arith.constant 0 : index
    %c0_232 = arith.constant 0 : index
    %404 = vector.load %arg30[%c1_230, %c0_231, %c0_232] : memref<2x64x32xf32, #tpu.memory_space<vmem>>, vector<1x64x32xf32>
    %405 = vector.shape_cast %404 : vector<1x64x32xf32> to vector<64x32xf32>
    %cst_233 = arith.constant dense<0.000000e+00> : vector<16x32xf32>
    %406 = tpu.matmul %403, %405, %cst_233 {dimension_numbers = #tpu.dot_dimension_numbers<[1], [0], [0], [1], [0, 0, 1, 1], [], []>} : vector<16x64xf32>, vector<64x32xf32>, vector<16x32xf32> -> vector<16x32xf32>
    %407 = arith.addf %368, %406 : vector<16x32xf32>
    %c1_234 = arith.constant 1 : index
    %c0_235 = arith.constant 0 : index
    %c0_236 = arith.constant 0 : index
    %408 = vector.load %arg31[%c1_234, %c0_235, %c0_236] : memref<2x1x32xf32, #tpu.memory_space<vmem>>, vector<1x1x32xf32>
    %409 = vector.shape_cast %408 : vector<1x1x32xf32> to vector<1x32xf32>
    %410 = vector.broadcast %409 : vector<1x32xf32> to vector<16x32xf32>
    %411 = arith.addf %407, %410 : vector<16x32xf32>
    %c0_237 = arith.constant 0 : index
    %c0_238 = arith.constant 0 : index
    %412 = vector.load %arg32[%c0_237, %c0_238] : memref<1x32xf32, #tpu.memory_space<vmem>>, vector<1x32xf32>
    %c0_239 = arith.constant 0 : index
    %c0_240 = arith.constant 0 : index
    %413 = vector.load %arg33[%c0_239, %c0_240] : memref<1x32xf32, #tpu.memory_space<vmem>>, vector<1x32xf32>
    %cst_241 = arith.constant dense<0.000000e+00> : vector<16xf32>
    %414 = vector.multi_reduction <add>, %411, %cst_241 [1] : vector<16x32xf32> to vector<16xf32>
    %415 = vector.shape_cast %414 : vector<16xf32> to vector<16x1xf32>
    %cst_242 = arith.constant 3.200000e+01 : f32
    %416 = vector.broadcast %cst_242 : f32 to vector<16x1xf32>
    %417 = arith.divf %415, %416 : vector<16x1xf32>
    %418 = vector.broadcast %417 : vector<16x1xf32> to vector<16x32xf32>
    %419 = arith.subf %411, %418 : vector<16x32xf32>
    %420 = arith.mulf %419, %419 : vector<16x32xf32>
    %cst_243 = arith.constant dense<0.000000e+00> : vector<16xf32>
    %421 = vector.multi_reduction <add>, %420, %cst_243 [1] : vector<16x32xf32> to vector<16xf32>
    %422 = vector.shape_cast %421 : vector<16xf32> to vector<16x1xf32>
    %cst_244 = arith.constant 3.200000e+01 : f32
    %423 = vector.broadcast %cst_244 : f32 to vector<16x1xf32>
    %424 = arith.divf %422, %423 : vector<16x1xf32>
    %425 = vector.broadcast %417 : vector<16x1xf32> to vector<16x32xf32>
    %426 = arith.subf %411, %425 : vector<16x32xf32>
    %cst_245 = arith.constant 9.99999974E-6 : f32
    %427 = vector.broadcast %cst_245 : f32 to vector<16x1xf32>
    %428 = arith.addf %424, %427 : vector<16x1xf32>
    %429 = math.rsqrt %428 : vector<16x1xf32>
    %430 = vector.broadcast %429 : vector<16x1xf32> to vector<16x32xf32>
    %431 = arith.mulf %426, %430 : vector<16x32xf32>
    %432 = vector.broadcast %412 : vector<1x32xf32> to vector<16x32xf32>
    %433 = arith.mulf %431, %432 : vector<16x32xf32>
    %434 = vector.broadcast %413 : vector<1x32xf32> to vector<16x32xf32>
    %435 = arith.addf %433, %434 : vector<16x32xf32>
    %c0_246 = arith.constant 0 : index
    %c0_247 = arith.constant 0 : index
    %436 = vector.load %arg34[%c0_246, %c0_247] : memref<32x128xf32, #tpu.memory_space<vmem>>, vector<32x128xf32>
    %cst_248 = arith.constant dense<0.000000e+00> : vector<16x128xf32>
    %437 = tpu.matmul %435, %436, %cst_248 {dimension_numbers = #tpu.dot_dimension_numbers<[1], [0], [0], [1], [0, 0, 1, 1], [], []>} : vector<16x32xf32>, vector<32x128xf32>, vector<16x128xf32> -> vector<16x128xf32>
    %c0_249 = arith.constant 0 : index
    %c0_250 = arith.constant 0 : index
    %438 = vector.load %arg35[%c0_249, %c0_250] : memref<1x128xf32, #tpu.memory_space<vmem>>, vector<1x128xf32>
    %439 = vector.broadcast %438 : vector<1x128xf32> to vector<16x128xf32>
    %440 = arith.addf %437, %439 : vector<16x128xf32>
    %c0_251 = arith.constant 0 : index
    %c0_252 = arith.constant 0 : index
    %441 = vector.load %arg36[%c0_251, %c0_252] : memref<16x128xf32, #tpu.memory_space<vmem>>, vector<16x128xf32>
    tpu.vector_store %arg36[%c0_251, %c0_252], %440 {strides = array<i32>} : memref<16x128xf32, #tpu.memory_space<vmem>>, vector<16x128xf32>,
    return
  }
}

</mosaic_0001>

<llo_original>
// kernel: fwd.1
$region0: #{fwd.1}
  #allocation0 [shape = 'u32[]', space=smem, size = 0x4, offset = 0x4, fixed_abs, tag = 'smem constant byte address 0x4 - core index']
  #allocation1 [shape = 'u32[144,128]{1,0:T(1,128)}', space=vmem, size = 0x12000, scoped, tag = 'internal scratch']
  %s0 = inlined_call_operand.smem [shape: u32[37], index: -1, kind: input, shape index: {}]
  %s1 = sld [smem:[%s0]]
  %s2 = scalar_lea.smem %s0, 1
  %s3 = sld [smem:[%s2]]
  %s4 = scalar_lea.smem %s0, 2
  %s5 = sld [smem:[%s4]]
  %s6 = scalar_lea.smem %s0, 3
  %s7 = sld [smem:[%s6]]
  %s8 = scalar_lea.smem %s0, 4
  %s9 = sld [smem:[%s8]]
  %s10 = scalar_lea.smem %s0, 5
  %s11 = sld [smem:[%s10]]
  %s12 = scalar_lea.smem %s0, 6
  %s13 = sld [smem:[%s12]]
  %s14 = scalar_lea.smem %s0, 7
  %s15 = sld [smem:[%s14]]
  %s16 = scalar_lea.smem %s0, 8
  %s17 = sld [smem:[%s16]]
  %s18 = scalar_lea.smem %s0, 9
  %s19 = sld [smem:[%s18]]
  %s20 = scalar_lea.smem %s0, 10
  %s21 = sld [smem:[%s20]]
  %s22 = scalar_lea.smem %s0, 11
  %s23 = sld [smem:[%s22]]
  %s24 = scalar_lea.smem %s0, 12
  %s25 = sld [smem:[%s24]]
  %s26 = scalar_lea.smem %s0, 13
  %s27 = sld [smem:[%s26]]
  %s28 = scalar_lea.smem %s0, 14
  %s29 = sld [smem:[%s28]]
  %s30 = scalar_lea.smem %s0, 15
  %s31 = sld [smem:[%s30]]
  %s32 = scalar_lea.smem %s0, 16
  %s33 = sld [smem:[%s32]]
  %s34 = scalar_lea.smem %s0, 17
  %s35 = sld [smem:[%s34]]
  %s36 = scalar_lea.smem %s0, 18
  %s37 = sld [smem:[%s36]]
  %s38 = scalar_lea.smem %s0, 19
  %s39 = sld [smem:[%s38]]
  %s40 = scalar_lea.smem %s0, 20
  %s41 = sld [smem:[%s40]]
  %s42 = scalar_lea.smem %s0, 21
  %s43 = sld [smem:[%s42]]
  %s44 = scalar_lea.smem %s0, 22
  %s45 = sld [smem:[%s44]]
  %s46 = scalar_lea.smem %s0, 23
  %s47 = sld [smem:[%s46]]
  %s48 = scalar_lea.smem %s0, 24
  %s49 = sld [smem:[%s48]]
  %s50 = scalar_lea.smem %s0, 25
  %s51 = sld [smem:[%s50]]
  %s52 = scalar_lea.smem %s0, 26
  %s53 = sld [smem:[%s52]]
  %s54 = scalar_lea.smem %s0, 27
  %s55 = sld [smem:[%s54]]
  %s56 = scalar_lea.smem %s0, 28
  %s57 = sld [smem:[%s56]]
  %s58 = scalar_lea.smem %s0, 29
  %s59 = sld [smem:[%s58]]
  %s60 = scalar_lea.smem %s0, 30
  %s61 = sld [smem:[%s60]]
  %s62 = scalar_lea.smem %s0, 31
  %s63 = sld [smem:[%s62]]
  %s64 = scalar_lea.smem %s0, 32
  %s65 = sld [smem:[%s64]]
  %s66 = scalar_lea.smem %s0, 33
  %s67 = sld [smem:[%s66]]
  %s68 = scalar_lea.smem %s0, 34
  %s69 = sld [smem:[%s68]]
  %s70 = scalar_lea.smem %s0, 35
  %s71 = sld [smem:[%s70]]
  %s72 = scalar_lea.smem %s0, 36
  %s73 = sld [smem:[%s72]]
  %s74 = sld [smem:[#allocation0]]
  $region154: #{fwd.1} parent=0
    _
  %s76 = ssub.s32 1, %s74
  %s77 = scalar_select 0, %s76, %s74
  $region1: #{fwd.1} parent=0
    #allocation2 [shape = 'u8[8192]{0}', space=vmem, size = 0x2000, scoped, tag = 'output window, operand 0, single buffered']
    #allocation3 [shape = 's32[1]{0}', space=sflag, size = 0x4, scoped, tag = 'scoped memory for fwd.1']
    %78 = vsyncpa [#allocation3], 0
    // Predicated region
    $region2: #{fwd.1} parent=1 // pred_check
      _
    $region3: #{fwd.1} parent=1 // pred_check_branch
      %80 = sbr.rel (0) target = $region5
    $region4: #{fwd.1} parent=1 // pred_region
      _
    $region5: #{fwd.1} parent=1 // pred_fallthru
      _
    // Predicated region
    $region6: #{fwd.1} parent=1 // pred_check
      _
    $region7: #{fwd.1} parent=1 // pred_check_branch
      %82 = sbr.rel (0) target = $region9
    $region8: #{fwd.1} parent=1 // pred_region
      _
    $region9: #{fwd.1} parent=1 // pred_fallthru
      _
    // Predicated region
    $region10: #{fwd.1} parent=1 // pred_check
      _
    $region11: #{fwd.1} parent=1 // pred_check_branch
      %84 = sbr.rel (0) target = $region13
    $region12: #{fwd.1} parent=1 // pred_region
      _
    $region13: #{fwd.1} parent=1 // pred_fallthru
      _
    // Predicated region
    $region14: #{fwd.1} parent=1 // pred_check
      _
    $region15: #{fwd.1} parent=1 // pred_check_branch
      %86 = sbr.rel (0) target = $region17
    $region16: #{fwd.1} parent=1 // pred_region
      _
    $region17: #{fwd.1} parent=1 // pred_fallthru
      _
    // Predicated region
    $region18: #{fwd.1} parent=1 // pred_check
      _
    $region19: #{fwd.1} parent=1 // pred_check_branch
      %88 = sbr.rel (0) target = $region21
    $region20: #{fwd.1} parent=1 // pred_region
      _
    $region21: #{fwd.1} parent=1 // pred_fallthru
      _
    // Predicated region
    $region22: #{fwd.1} parent=1 // pred_check
      _
    $region23: #{fwd.1} parent=1 // pred_check_branch
      %90 = sbr.rel (0) target = $region25
    $region24: #{fwd.1} parent=1 // pred_region
      _
    $region25: #{fwd.1} parent=1 // pred_fallthru
      _
    // Predicated region
    $region26: #{fwd.1} parent=1 // pred_check
      _
    $region27: #{fwd.1} parent=1 // pred_check_branch
      %92 = sbr.rel (0) target = $region29
    $region28: #{fwd.1} parent=1 // pred_region
      _
    $region29: #{fwd.1} parent=1 // pred_fallthru
      _
    // Predicated region
    $region30: #{fwd.1} parent=1 // pred_check
      _
    $region31: #{fwd.1} parent=1 // pred_check_branch
      %94 = sbr.rel (0) target = $region33
    $region32: #{fwd.1} parent=1 // pred_region
      _
    $region33: #{fwd.1} parent=1 // pred_fallthru
      _
    // Predicated region
    $region34: #{fwd.1} parent=1 // pred_check
      _
    $region35: #{fwd.1} parent=1 // pred_check_branch
      %96 = sbr.rel (0) target = $region37
    $region36: #{fwd.1} parent=1 // pred_region
      _
    $region37: #{fwd.1} parent=1 // pred_fallthru
      _
    // Predicated region
    $region38: #{fwd.1} parent=1 // pred_check
      _
    $region39: #{fwd.1} parent=1 // pred_check_branch
      %98 = sbr.rel (0) target = $region41
    $region40: #{fwd.1} parent=1 // pred_region
      _
    $region41: #{fwd.1} parent=1 // pred_fallthru
      _
    // Predicated region
    $region42: #{fwd.1} parent=1 // pred_check
      _
    $region43: #{fwd.1} parent=1 // pred_check_branch
      %100 = sbr.rel (0) target = $region45
    $region44: #{fwd.1} parent=1 // pred_region
      _
    $region45: #{fwd.1} parent=1 // pred_fallthru
      _
    // Predicated region
    $region46: #{fwd.1} parent=1 // pred_check
      _
    $region47: #{fwd.1} parent=1 // pred_check_branch
      %102 = sbr.rel (0) target = $region49
    $region48: #{fwd.1} parent=1 // pred_region
      _
    $region49: #{fwd.1} parent=1 // pred_fallthru
      _
    // Predicated region
    $region50: #{fwd.1} parent=1 // pred_check
      _
    $region51: #{fwd.1} parent=1 // pred_check_branch
      %104 = sbr.rel (0) target = $region53
    $region52: #{fwd.1} parent=1 // pred_region
      _
    $region53: #{fwd.1} parent=1 // pred_fallthru
      _
    // Predicated region
    $region54: #{fwd.1} parent=1 // pred_check
      _
    $region55: #{fwd.1} parent=1 // pred_check_branch
      %106 = sbr.rel (0) target = $region57
    $region56: #{fwd.1} parent=1 // pred_region
      _
    $region57: #{fwd.1} parent=1 // pred_fallthru
      _
    // Predicated region
    $region58: #{fwd.1} parent=1 // pred_check
      _
    $region59: #{fwd.1} parent=1 // pred_check_branch
      %108 = sbr.rel (0) target = $region61
    $region60: #{fwd.1} parent=1 // pred_region
      _
    $region61: #{fwd.1} parent=1 // pred_fallthru
      _
    // Predicated region
    $region62: #{fwd.1} parent=1 // pred_check
      _
    $region63: #{fwd.1} parent=1 // pred_check_branch
      %110 = sbr.rel (0) target = $region65
    $region64: #{fwd.1} parent=1 // pred_region
      _
    $region65: #{fwd.1} parent=1 // pred_fallthru
      _
    // Predicated region
    $region66: #{fwd.1} parent=1 // pred_check
      _
    $region67: #{fwd.1} parent=1 // pred_check_branch
      %112 = sbr.rel (0) target = $region69
    $region68: #{fwd.1} parent=1 // pred_region
      _
    $region69: #{fwd.1} parent=1 // pred_fallthru
      _
    // Predicated region
    $region70: #{fwd.1} parent=1 // pred_check
      _
    $region71: #{fwd.1} parent=1 // pred_check_branch
      %114 = sbr.rel (0) target = $region73
    $region72: #{fwd.1} parent=1 // pred_region
      _
    $region73: #{fwd.1} parent=1 // pred_fallthru
      _
    // Predicated region
    $region74: #{fwd.1} parent=1 // pred_check
      _
    $region75: #{fwd.1} parent=1 // pred_check_branch
      %116 = sbr.rel (0) target = $region77
    $region76: #{fwd.1} parent=1 // pred_region
      _
    $region77: #{fwd.1} parent=1 // pred_fallthru
      _
    // Predicated region
    $region78: #{fwd.1} parent=1 // pred_check
      _
    $region79: #{fwd.1} parent=1 // pred_check_branch
      %118 = sbr.rel (0) target = $region81
    $region80: #{fwd.1} parent=1 // pred_region
      _
    $region81: #{fwd.1} parent=1 // pred_fallthru
      _
    // Predicated region
    $region82: #{fwd.1} parent=1 // pred_check
      _
    $region83: #{fwd.1} parent=1 // pred_check_branch
      %120 = sbr.rel (0) target = $region85
    $region84: #{fwd.1} parent=1 // pred_region
      _
    $region85: #{fwd.1} parent=1 // pred_fallthru
      _
    // Predicated region
    $region86: #{fwd.1} parent=1 // pred_check
      _
    $region87: #{fwd.1} parent=1 // pred_check_branch
      %122 = sbr.rel (0) target = $region89
    $region88: #{fwd.1} parent=1 // pred_region
      _
    $region89: #{fwd.1} parent=1 // pred_fallthru
      _
    // Predicated region
    $region90: #{fwd.1} parent=1 // pred_check
      _
    $region91: #{fwd.1} parent=1 // pred_check_branch
      %124 = sbr.rel (0) target = $region93
    $region92: #{fwd.1} parent=1 // pred_region
      _
    $region93: #{fwd.1} parent=1 // pred_fallthru
      _
    // Predicated region
    $region94: #{fwd.1} parent=1 // pred_check
      _
    $region95: #{fwd.1} parent=1 // pred_check_branch
      %126 = sbr.rel (0) target = $region97
    $region96: #{fwd.1} parent=1 // pred_region
      _
    $region97: #{fwd.1} parent=1 // pred_fallthru
      _
    // Predicated region
    $region98: #{fwd.1} parent=1 // pred_check
      _
    $region99: #{fwd.1} parent=1 // pred_check_branch
      %128 = sbr.rel (0) target = $region101
    $region100: #{fwd.1} parent=1 // pred_region
      _
    $region101: #{fwd.1} parent=1 // pred_fallthru
      _
    // Predicated region
    $region102: #{fwd.1} parent=1 // pred_check
      _
    $region103: #{fwd.1} parent=1 // pred_check_branch
      %130 = sbr.rel (0) target = $region105
    $region104: #{fwd.1} parent=1 // pred_region
      _
    $region105: #{fwd.1} parent=1 // pred_fallthru
      _
    // Predicated region
    $region106: #{fwd.1} parent=1 // pred_check
      _
    $region107: #{fwd.1} parent=1 // pred_check_branch
      %132 = sbr.rel (0) target = $region109
    $region108: #{fwd.1} parent=1 // pred_region
      _
    $region109: #{fwd.1} parent=1 // pred_fallthru
      _
    // Predicated region
    $region110: #{fwd.1} parent=1 // pred_check
      _
    $region111: #{fwd.1} parent=1 // pred_check_branch
      %134 = sbr.rel (0) target = $region113
    $region112: #{fwd.1} parent=1 // pred_region
      _
    $region113: #{fwd.1} parent=1 // pred_fallthru
      _
    // Predicated region
    $region114: #{fwd.1} parent=1 // pred_check
      _
    $region115: #{fwd.1} parent=1 // pred_check_branch
      %136 = sbr.rel (0) target = $region117
    $region116: #{fwd.1} parent=1 // pred_region
      _
    $region117: #{fwd.1} parent=1 // pred_fallthru
      _
    // Predicated region
    $region118: #{fwd.1} parent=1 // pred_check
      _
    $region119: #{fwd.1} parent=1 // pred_check_branch
      %138 = sbr.rel (0) target = $region121
    $region120: #{fwd.1} parent=1 // pred_region
      _
    $region121: #{fwd.1} parent=1 // pred_fallthru
      _
    // Predicated region
    $region122: #{fwd.1} parent=1 // pred_check
      _
    $region123: #{fwd.1} parent=1 // pred_check_branch
      %140 = sbr.rel (0) target = $region125
    $region124: #{fwd.1} parent=1 // pred_region
      _
    $region125: #{fwd.1} parent=1 // pred_fallthru
      _
    // Predicated region
    $region126: #{fwd.1} parent=1 // pred_check
      _
    $region127: #{fwd.1} parent=1 // pred_check_branch
      %142 = sbr.rel (0) target = $region129
    $region128: #{fwd.1} parent=1 // pred_region
      _
    $region129: #{fwd.1} parent=1 // pred_fallthru
      _
    // Predicated region
    $region130: #{fwd.1} parent=1 // pred_check
      _
    $region131: #{fwd.1} parent=1 // pred_check_branch
      %144 = sbr.rel (0) target = $region133
    $region132: #{fwd.1} parent=1 // pred_region
      _
    $region133: #{fwd.1} parent=1 // pred_fallthru
      _
    // Predicated region
    $region134: #{fwd.1} parent=1 // pred_check
      _
    $region135: #{fwd.1} parent=1 // pred_check_branch
      %146 = sbr.rel (0) target = $region137
    $region136: #{fwd.1} parent=1 // pred_region
      _
    $region137: #{fwd.1} parent=1 // pred_fallthru
      _
    // Predicated region
    $region138: #{fwd.1} parent=1 // pred_check
      _
    $region139: #{fwd.1} parent=1 // pred_check_branch
      %148 = sbr.rel (0) target = $region141
    $region140: #{fwd.1} parent=1 // pred_region
      _
    $region141: #{fwd.1} parent=1 // pred_fallthru
      _
    // Predicated region
    $region142: #{fwd.1} parent=1 // pred_check
      _
    $region143: #{fwd.1} parent=1 // pred_check_branch
      %150 = sbr.rel (0) target = $region145
    $region144: #{fwd.1} parent=1 // pred_region
      _
    $region145: #{fwd.1} parent=1 // pred_fallthru
      _
    %v151 = vld [vmem:[%s1] sm:$0xff]
    %v152 = vld [vmem:[%s1 + $0x8] sm:$0xff]
    %v153 = vld [vmem:[%s3] sm:$0xff]
    %v154 = vld [vmem:[%s3 + $0x8] sm:$0xff]
    %v155 = vld [vmem:[%s5] sm:$0xff]
    %v156 = vld [vmem:[%s5 + $0x8] sm:$0xff]
    %v157 = vld [vmem:[%s5 + $0x10] sm:$0xff]
    %v158 = vld [vmem:[%s5 + $0x18] sm:$0xff]
    %v159 = vld [vmem:[%s5 + $0x20] sm:$0xff]
    %v160 = vld [vmem:[%s5 + $0x28] sm:$0xff]
    %v161 = vld [vmem:[%s5 + $0x30] sm:$0xff]
    %v162 = vld [vmem:[%s5 + $0x38] sm:$0xff]
    %v163 = vld [vmem:[%s7] sm:$0xff]
    %v164 = vld [vmem:[%s7 + $0x8] sm:$0xff]
    %v165 = vld [vmem:[%s7 + $0x10] sm:$0xff]
    %v166 = vld [vmem:[%s7 + $0x18] sm:$0xff]
    %v167 = vld [vmem:[%s7 + $0x20] sm:$0xff]
    %v168 = vld [vmem:[%s7 + $0x28] sm:$0xff]
    %v169 = vld [vmem:[%s7 + $0x30] sm:$0xff]
    %v170 = vld [vmem:[%s7 + $0x38] sm:$0xff]
    %v171 = vld [vmem:[%s9] sm:$0xff]
    %v172 = vld [vmem:[%s9 + $0x8] sm:$0xff]
    %v173 = vld [vmem:[%s9 + $0x10] sm:$0xff]
    %v174 = vld [vmem:[%s9 + $0x18] sm:$0xff]
    %v175 = vld [vmem:[%s9 + $0x20] sm:$0xff]
    %v176 = vld [vmem:[%s9 + $0x28] sm:$0xff]
    %v177 = vld [vmem:[%s9 + $0x30] sm:$0xff]
    %v178 = vld [vmem:[%s9 + $0x38] sm:$0xff]
    %v179 = vld [vmem:[%s11] sm:$0xff]
    %v180 = vld [vmem:[%s11 + $0x8] sm:$0xff]
    %v181 = vld [vmem:[%s11 + $0x10] sm:$0xff]
    %v182 = vld [vmem:[%s11 + $0x18] sm:$0xff]
    %v183 = vld [vmem:[%s11 + $0x20] sm:$0xff]
    %v184 = vld [vmem:[%s11 + $0x28] sm:$0xff]
    %v185 = vld [vmem:[%s11 + $0x30] sm:$0xff]
    %v186 = vld [vmem:[%s11 + $0x38] sm:$0xff]
    %v187 = vld [vmem:[%s13] sm:$0x1]
    %v188 = vld [vmem:[%s15] sm:$0x1]
    %vm189 = vcmask 261120
    %v190 = vsel %vm189, %v151, 0.0
    %191 = vadd.xlane.f32.xlu0 %v190
    %v192 = vpop.xlane.xlu0 %191
    %v193 = vsel %vm189, %v152, 0.0
    %194 = vadd.xlane.f32.xlu0 %v193
    %v195 = vpop.xlane.xlu0 %194
    %v196 = vrcp.pop 32.0
    %v197 = vmul.f32 %v192, %v196
    %v198 = vmul.f32 %v195, %v196
    %v199 = vsub.f32 %v151, %v197
    %v200 = vsub.f32 %v152, %v198
    %v201 = vmul.f32 %v199, %v199
    %v202 = vmul.f32 %v200, %v200
    %v203 = vsel %vm189, %v201, 0.0
    %204 = vadd.xlane.f32.xlu0 %v203
    %v205 = vpop.xlane.xlu0 %204
    %v206 = vsel %vm189, %v202, 0.0
    %207 = vadd.xlane.f32.xlu0 %v206
    %v208 = vpop.xlane.xlu0 %207
    %v209 = vmul.f32 %v205, %v196
    %v210 = vmul.f32 %v208, %v196
    %v211 = vadd.f32 %v209, 1e-05
    %v212 = vadd.f32 %v210, 1e-05
    %v213 = vrsqrt.pop %v211
    %v214 = vrsqrt.pop %v212
    %v215 = vmul.f32 %v199, %v213
    %v216 = vmul.f32 %v200, %v214
    %v218 = vlaneseq
    %v219 = vshrl.u32 %v218, 7
    %v220 = vsub.s32 0, %v219
    %v221 = vrot.slane %v187, %v220
    %v223 = vmul.f32 %v215, %v221
    %v224 = vmul.f32 %v216, %v221
    %v226 = vlaneseq
    %v227 = vshrl.u32 %v226, 7
    %v228 = vsub.s32 0, %v227
    %v229 = vrot.slane %v188, %v228
    %v231 = vadd.f32 %v223, %v229
    %v232 = vadd.f32 %v224, %v229
    %v233 = vld [vmem:[%s17] sm:$0xff]
    %v234 = vld [vmem:[%s17 + $0x8] sm:$0xff]
    %v235 = vld [vmem:[%s17 + $0x10] sm:$0xff]
    %v236 = vld [vmem:[%s17 + $0x18] sm:$0xff]
    %v237 = vld [vmem:[%s19] sm:$0x1]
    %v238 = vld [vmem:[%s21] sm:$0xff]
    %v239 = vld [vmem:[%s21 + $0x8] sm:$0xff]
    %v240 = vld [vmem:[%s21 + $0x10] sm:$0xff]
    %v241 = vld [vmem:[%s21 + $0x18] sm:$0xff]
    %v242 = vld [vmem:[%s23] sm:$0x1]
    %v243 = vld [vmem:[%s25] sm:$0xff]
    %v244 = vld [vmem:[%s25 + $0x8] sm:$0xff]
    %v245 = vld [vmem:[%s25 + $0x10] sm:$0xff]
    %v246 = vld [vmem:[%s25 + $0x18] sm:$0xff]
    %v247 = vld [vmem:[%s27] sm:$0x1]
    %v248 = vld [vmem:[%s29] sm:$0xff]
    %v249 = vld [vmem:[%s29 + $0x8] sm:$0xff]
    %v250 = vld [vmem:[%s29 + $0x10] sm:$0xff]
    %v251 = vld [vmem:[%s29 + $0x18] sm:$0xff]
    %v252 = vld [vmem:[%s31] sm:$0x1]
    %v254 = vlaneseq
    %v255 = vshrl.u32 %v254, 7
    %v256 = vsub.s32 0, %v255
    %v257 = vrot.slane %v237, %v256
    %v260 = vsel %vm189, %v231, 0
    %v263 = vsel %vm189, %v232, 0
    %265 = vmatprep.subr.mxu0 0.0
    %266 = vmatpush1.msra.mxu0 0.0
    %267 = vmatprep.subr.mxu0 0.0
    %268 = vmatpush1.msra.mxu0 0.0
    %269 = vmatprep.subr.mxu0 0.0
    %270 = vmatpush1.msra.mxu0 0.0
    %271 = vmatprep.subr.mxu0 0.0
    %272 = vmatpush1.msra.mxu0 0.0
    %273 = vmatprep.subr.mxu0 0.0
    %274 = vmatpush1.msra.mxu0 0.0
    %275 = vmatprep.subr.mxu0 0.0
    %276 = vmatpush1.msra.mxu0 0.0
    %277 = vmatprep.subr.mxu0 0.0
    %278 = vmatpush1.msra.mxu0 0.0
    %279 = vmatprep.subr.mxu0 0.0
    %280 = vmatpush1.msra.mxu0 0.0
    %281 = vmatprep.subr.mxu0 0.0
    %282 = vmatpush1.msra.mxu0 0.0
    %283 = vmatprep.subr.mxu0 0.0
    %284 = vmatpush1.msra.mxu0 0.0
    %285 = vmatprep.subr.mxu0 0.0
    %286 = vmatpush1.msra.mxu0 0.0
    %287 = vmatprep.subr.mxu0 0.0
    %288 = vmatpush1.msra.mxu0 0.0
    %289 = vmatprep.subr.mxu0 0.0
    %290 = vmatpush1.msra.mxu0 %v236
    %291 = vmatprep.subr.mxu0 0.0
    %292 = vmatpush1.msra.mxu0 %v235
    %293 = vmatprep.subr.mxu0 0.0
    %294 = vmatpush1.msra.mxu0 %v234
    %295 = vmatprep.subr.mxu0 0.0
    %296 = vmatpush1.msra.mxu0 %v233
    %297 = vmatprep.subr.mxu0 0.0
    %298 = vmatpush2.msra.mxu0 0.0
    %299 = vmatprep.subr.mxu0 0.0
    %300 = vmatpush2.msra.mxu0 0.0
    %301 = vmatprep.subr.mxu0 0.0
    %302 = vmatpush2.msra.mxu0 0.0
    %303 = vmatprep.subr.mxu0 0.0
    %304 = vmatpush2.msra.mxu0 0.0
    %305 = vmatprep.subr.mxu0 0.0
    %306 = vmatpush2.msra.mxu0 0.0
    %307 = vmatprep.subr.mxu0 0.0
    %308 = vmatpush2.msra.mxu0 0.0
    %309 = vmatprep.subr.mxu0 0.0
    %310 = vmatpush2.msra.mxu0 0.0
    %311 = vmatprep.subr.mxu0 0.0
    %312 = vmatpush2.msra.mxu0 0.0
    %313 = vmatprep.subr.mxu0 0.0
    %314 = vmatpush2.msra.mxu0 0.0
    %315 = vmatprep.subr.mxu0 0.0
    %316 = vmatpush2.msra.mxu0 0.0
    %317 = vmatprep.subr.mxu0 0.0
    %318 = vmatpush2.msra.mxu0 0.0
    %319 = vmatprep.subr.mxu0 0.0
    %320 = vmatpush2.msra.mxu0 0.0
    %321 = vmatprep.subr.mxu0 0.0
    %322 = vmatpush2.msra.mxu0 0.0
    %323 = vmatprep.subr.mxu0 0.0
    %324 = vmatpush2.msra.mxu0 0.0
    %325 = vmatprep.subr.mxu0 0.0
    %326 = vmatpush2.msra.mxu0 0.0
    %327 = vmatprep.subr.mxu0 0.0
    %328 = vmatpush2.msra.mxu0 0.0
    %329 = vmatprep.mubr.f32.mxu0 0.0
    %330 = vmatmul.mubr.f32.gmra.mxu0 %v260
    %v331 = vpop.f32.mrf.mxu0
    %v332 = vadd.f32 %v257, %v331
    %v333 = vpop.f32.mrf.mxu0
    %334 = vmatprep.mubr.f32.mxu0 0.0
    %335 = vmatmul.mubr.f32.gmra.mxu0 %v263
    %v336 = vpop.f32.mrf.mxu0
    %v337 = vadd.f32 %v257, %v336
    %v338 = vpop.f32.mrf.mxu0
    %339 = vdwg.mxu0
    %v341 = vlaneseq
    %v342 = vshrl.u32 %v341, 7
    %v343 = vsub.s32 0, %v342
    %v344 = vrot.slane %v242, %v343
    %346 = vmatprep.subr.mxu0 0.0
    %347 = vmatpush1.msra.mxu0 0.0
    %348 = vmatprep.subr.mxu0 0.0
    %349 = vmatpush1.msra.mxu0 0.0
    %350 = vmatprep.subr.mxu0 0.0
    %351 = vmatpush1.msra.mxu0 0.0
    %352 = vmatprep.subr.mxu0 0.0
    %353 = vmatpush1.msra.mxu0 0.0
    %354 = vmatprep.subr.mxu0 0.0
    %355 = vmatpush1.msra.mxu0 0.0
    %356 = vmatprep.subr.mxu0 0.0
    %357 = vmatpush1.msra.mxu0 0.0
    %358 = vmatprep.subr.mxu0 0.0
    %359 = vmatpush1.msra.mxu0 0.0
    %360 = vmatprep.subr.mxu0 0.0
    %361 = vmatpush1.msra.mxu0 0.0
    %362 = vmatprep.subr.mxu0 0.0
    %363 = vmatpush1.msra.mxu0 0.0
    %364 = vmatprep.subr.mxu0 0.0
    %365 = vmatpush1.msra.mxu0 0.0
    %366 = vmatprep.subr.mxu0 0.0
    %367 = vmatpush1.msra.mxu0 0.0
    %368 = vmatprep.subr.mxu0 0.0
    %369 = vmatpush1.msra.mxu0 0.0
    %370 = vmatprep.subr.mxu0 0.0
    %371 = vmatpush1.msra.mxu0 %v241
    %372 = vmatprep.subr.mxu0 0.0
    %373 = vmatpush1.msra.mxu0 %v240
    %374 = vmatprep.subr.mxu0 0.0
    %375 = vmatpush1.msra.mxu0 %v239
    %376 = vmatprep.subr.mxu0 0.0
    %377 = vmatpush1.msra.mxu0 %v238
    %378 = vmatprep.subr.mxu0 0.0
    %379 = vmatpush2.msra.mxu0 0.0
    %380 = vmatprep.subr.mxu0 0.0
    %381 = vmatpush2.msra.mxu0 0.0
    %382 = vmatprep.subr.mxu0 0.0
    %383 = vmatpush2.msra.mxu0 0.0
    %384 = vmatprep.subr.mxu0 0.0
    %385 = vmatpush2.msra.mxu0 0.0
    %386 = vmatprep.subr.mxu0 0.0
    %387 = vmatpush2.msra.mxu0 0.0
    %388 = vmatprep.subr.mxu0 0.0
    %389 = vmatpush2.msra.mxu0 0.0
    %390 = vmatprep.subr.mxu0 0.0
    %391 = vmatpush2.msra.mxu0 0.0
    %392 = vmatprep.subr.mxu0 0.0
    %393 = vmatpush2.msra.mxu0 0.0
    %394 = vmatprep.subr.mxu0 0.0
    %395 = vmatpush2.msra.mxu0 0.0
    %396 = vmatprep.subr.mxu0 0.0
    %397 = vmatpush2.msra.mxu0 0.0
    %398 = vmatprep.subr.mxu0 0.0
    %399 = vmatpush2.msra.mxu0 0.0
    %400 = vmatprep.subr.mxu0 0.0
    %401 = vmatpush2.msra.mxu0 0.0
    %402 = vmatprep.subr.mxu0 0.0
    %403 = vmatpush2.msra.mxu0 0.0
    %404 = vmatprep.subr.mxu0 0.0
    %405 = vmatpush2.msra.mxu0 0.0
    %406 = vmatprep.subr.mxu0 0.0
    %407 = vmatpush2.msra.mxu0 0.0
    %408 = vmatprep.subr.mxu0 0.0
    %409 = vmatpush2.msra.mxu0 0.0
    %410 = vmatprep.mubr.f32.mxu0 0.0
    %411 = vmatmul.mubr.f32.gmra.mxu0 %v260
    %v412 = vpop.f32.mrf.mxu0
    %v413 = vadd.f32 %v344, %v412
    %v414 = vpop.f32.mrf.mxu0
    %415 = vmatprep.mubr.f32.mxu0 0.0
    %416 = vmatmul.mubr.f32.gmra.mxu0 %v263
    %v417 = vpop.f32.mrf.mxu0
    %v418 = vadd.f32 %v344, %v417
    %v419 = vpop.f32.mrf.mxu0
    %420 = vdwg.mxu0
    %v422 = vlaneseq
    %v423 = vshrl.u32 %v422, 7
    %v424 = vsub.s32 0, %v423
    %v425 = vrot.slane %v247, %v424
    %427 = vmatprep.subr.mxu0 0.0
    %428 = vmatpush1.msra.mxu0 0.0
    %429 = vmatprep.subr.mxu0 0.0
    %430 = vmatpush1.msra.mxu0 0.0
    %431 = vmatprep.subr.mxu0 0.0
    %432 = vmatpush1.msra.mxu0 0.0
    %433 = vmatprep.subr.mxu0 0.0
    %434 = vmatpush1.msra.mxu0 0.0
    %435 = vmatprep.subr.mxu0 0.0
    %436 = vmatpush1.msra.mxu0 0.0
    %437 = vmatprep.subr.mxu0 0.0
    %438 = vmatpush1.msra.mxu0 0.0
    %439 = vmatprep.subr.mxu0 0.0
    %440 = vmatpush1.msra.mxu0 0.0
    %441 = vmatprep.subr.mxu0 0.0
    %442 = vmatpush1.msra.mxu0 0.0
    %443 = vmatprep.subr.mxu0 0.0
    %444 = vmatpush1.msra.mxu0 0.0
    %445 = vmatprep.subr.mxu0 0.0
    %446 = vmatpush1.msra.mxu0 0.0
    %447 = vmatprep.subr.mxu0 0.0
    %448 = vmatpush1.msra.mxu0 0.0
    %449 = vmatprep.subr.mxu0 0.0
    %450 = vmatpush1.msra.mxu0 0.0
    %451 = vmatprep.subr.mxu0 0.0
    %452 = vmatpush1.msra.mxu0 %v246
    %453 = vmatprep.subr.mxu0 0.0
    %454 = vmatpush1.msra.mxu0 %v245
    %455 = vmatprep.subr.mxu0 0.0
    %456 = vmatpush1.msra.mxu0 %v244
    %457 = vmatprep.subr.mxu0 0.0
    %458 = vmatpush1.msra.mxu0 %v243
    %459 = vmatprep.subr.mxu0 0.0
    %460 = vmatpush2.msra.mxu0 0.0
    %461 = vmatprep.subr.mxu0 0.0
    %462 = vmatpush2.msra.mxu0 0.0
    %463 = vmatprep.subr.mxu0 0.0
    %464 = vmatpush2.msra.mxu0 0.0
    %465 = vmatprep.subr.mxu0 0.0
    %466 = vmatpush2.msra.mxu0 0.0
    %467 = vmatprep.subr.mxu0 0.0
    %468 = vmatpush2.msra.mxu0 0.0
    %469 = vmatprep.subr.mxu0 0.0
    %470 = vmatpush2.msra.mxu0 0.0
    %471 = vmatprep.subr.mxu0 0.0
    %472 = vmatpush2.msra.mxu0 0.0
    %473 = vmatprep.subr.mxu0 0.0
    %474 = vmatpush2.msra.mxu0 0.0
    %475 = vmatprep.subr.mxu0 0.0
    %476 = vmatpush2.msra.mxu0 0.0
    %477 = vmatprep.subr.mxu0 0.0
    %478 = vmatpush2.msra.mxu0 0.0
    %479 = vmatprep.subr.mxu0 0.0
    %480 = vmatpush2.msra.mxu0 0.0
    %481 = vmatprep.subr.mxu0 0.0
    %482 = vmatpush2.msra.mxu0 0.0
    %483 = vmatprep.subr.mxu0 0.0
    %484 = vmatpush2.msra.mxu0 0.0
    %485 = vmatprep.subr.mxu0 0.0
    %486 = vmatpush2.msra.mxu0 0.0
    %487 = vmatprep.subr.mxu0 0.0
    %488 = vmatpush2.msra.mxu0 0.0
    %489 = vmatprep.subr.mxu0 0.0
    %490 = vmatpush2.msra.mxu0 0.0
    %491 = vmatprep.mubr.f32.mxu0 0.0
    %492 = vmatmul.mubr.f32.gmra.mxu0 %v260
    %v493 = vpop.f32.mrf.mxu0
    %v494 = vadd.f32 %v425, %v493
    %v495 = vpop.f32.mrf.mxu0
    %496 = vmatprep.mubr.f32.mxu0 0.0
    %497 = vmatmul.mubr.f32.gmra.mxu0 %v263
    %v498 = vpop.f32.mrf.mxu0
    %v499 = vadd.f32 %v425, %v498
    %v500 = vpop.f32.mrf.mxu0
    %501 = vdwg.mxu0
    %v502 = vmul.f32 %v332, %v171
    %v503 = vmul.f32 %v337, %v172
    %v504 = vmul.f32 %v332, %v173
    %v505 = vmul.f32 %v337, %v174
    %v506 = vmul.f32 %v332, %v175
    %v507 = vmul.f32 %v337, %v176
    %v508 = vmul.f32 %v332, %v177
    %v509 = vmul.f32 %v337, %v178
    %v511 = vsel %vm189, %v502, 0
    %v514 = vsel %vm189, %v503, 0
    %v517 = vsel %vm189, %v504, 0
    %v520 = vsel %vm189, %v505, 0
    %v523 = vsel %vm189, %v506, 0
    %v526 = vsel %vm189, %v507, 0
    %v529 = vsel %vm189, %v508, 0
    %v532 = vsel %vm189, %v509, 0
    %v535 = vsel %vm189, %v413, 0
    %v538 = vsel %vm189, %v418, 0
    %540 = vmatprep.subr.mxu0 0.0
    %541 = vmatpush1.xpose.msra.mxu0 0.0
    %542 = vmatprep.subr.mxu0 0.0
    %543 = vmatpush1.xpose.msra.mxu0 0.0
    %544 = vmatprep.subr.mxu0 0.0
    %545 = vmatpush1.xpose.msra.mxu0 0.0
    %546 = vmatprep.subr.mxu0 0.0
    %547 = vmatpush1.xpose.msra.mxu0 0.0
    %548 = vmatprep.subr.mxu0 0.0
    %549 = vmatpush1.xpose.msra.mxu0 0.0
    %550 = vmatprep.subr.mxu0 0.0
    %551 = vmatpush1.xpose.msra.mxu0 0.0
    %552 = vmatprep.subr.mxu0 0.0
    %553 = vmatpush1.xpose.msra.mxu0 0.0
    %554 = vmatprep.subr.mxu0 0.0
    %555 = vmatpush1.xpose.msra.mxu0 0.0
    %556 = vmatprep.subr.mxu0 0.0
    %557 = vmatpush1.xpose.msra.mxu0 0.0
    %558 = vmatprep.subr.mxu0 0.0
    %559 = vmatpush1.xpose.msra.mxu0 0.0
    %560 = vmatprep.subr.mxu0 0.0
    %561 = vmatpush1.xpose.msra.mxu0 0.0
    %562 = vmatprep.subr.mxu0 0.0
    %563 = vmatpush1.xpose.msra.mxu0 0.0
    %564 = vmatprep.subr.mxu0 0.0
    %565 = vmatpush1.xpose.msra.mxu0 0.0
    %566 = vmatprep.subr.mxu0 0.0
    %567 = vmatpush1.xpose.msra.mxu0 0.0
    %568 = vmatprep.subr.mxu0 0.0
    %569 = vmatpush1.xpose.msra.mxu0 %v538
    %570 = vmatprep.subr.mxu0 0.0
    %571 = vmatpush1.xpose.msra.mxu0 %v535
    %572 = vmatprep.subr.mxu0 0.0
    %573 = vmatpush2.xpose.msra.mxu0 0.0
    %574 = vmatprep.subr.mxu0 0.0
    %575 = vmatpush2.xpose.msra.mxu0 0.0
    %576 = vmatprep.subr.mxu0 0.0
    %577 = vmatpush2.xpose.msra.mxu0 0.0
    %578 = vmatprep.subr.mxu0 0.0
    %579 = vmatpush2.xpose.msra.mxu0 0.0
    %580 = vmatprep.subr.mxu0 0.0
    %581 = vmatpush2.xpose.msra.mxu0 0.0
    %582 = vmatprep.subr.mxu0 0.0
    %583 = vmatpush2.xpose.msra.mxu0 0.0
    %584 = vmatprep.subr.mxu0 0.0
    %585 = vmatpush2.xpose.msra.mxu0 0.0
    %586 = vmatprep.subr.mxu0 0.0
    %587 = vmatpush2.xpose.msra.mxu0 0.0
    %588 = vmatprep.subr.mxu0 0.0
    %589 = vmatpush2.xpose.msra.mxu0 0.0
    %590 = vmatprep.subr.mxu0 0.0
    %591 = vmatpush2.xpose.msra.mxu0 0.0
    %592 = vmatprep.subr.mxu0 0.0
    %593 = vmatpush2.xpose.msra.mxu0 0.0
    %594 = vmatprep.subr.mxu0 0.0
    %595 = vmatpush2.xpose.msra.mxu0 0.0
    %596 = vmatprep.subr.mxu0 0.0
    %597 = vmatpush2.xpose.msra.mxu0 0.0
    %598 = vmatprep.subr.mxu0 0.0
    %599 = vmatpush2.xpose.msra.mxu0 0.0
    %600 = vmatprep.subr.mxu0 0.0
    %601 = vmatpush2.xpose.msra.mxu0 0.0
    %602 = vmatprep.subr.mxu0 0.0
    %603 = vmatpush2.xpose.msra.mxu0 0.0
    %604 = vmatprep.mubr.f32.mxu0 0.0
    %605 = vmatmul.mubr.f32.gmra.mxu0 %v511
    %v606 = vpop.f32.mrf.mxu0
    %v607 = vadd.f32 0.0, %v606
    %v608 = vpop.f32.mrf.mxu0
    %609 = vmatprep.mubr.f32.mxu0 0.0
    %610 = vmatmul.mubr.f32.gmra.mxu0 %v514
    %v611 = vpop.f32.mrf.mxu0
    %v612 = vadd.f32 0.0, %v611
    %v613 = vpop.f32.mrf.mxu0
    %614 = vmatprep.mubr.f32.mxu0 0.0
    %615 = vmatmul.mubr.f32.gmra.mxu0 %v517
    %v616 = vpop.f32.mrf.mxu0
    %v617 = vadd.f32 0.0, %v616
    %v618 = vpop.f32.mrf.mxu0
    %619 = vmatprep.mubr.f32.mxu0 0.0
    %620 = vmatmul.mubr.f32.gmra.mxu0 %v520
    %v621 = vpop.f32.mrf.mxu0
    %v622 = vadd.f32 0.0, %v621
    %v623 = vpop.f32.mrf.mxu0
    %624 = vmatprep.mubr.f32.mxu0 0.0
    %625 = vmatmul.mubr.f32.gmra.mxu0 %v523
    %v626 = vpop.f32.mrf.mxu0
    %v627 = vadd.f32 0.0, %v626
    %v628 = vpop.f32.mrf.mxu0
    %629 = vmatprep.mubr.f32.mxu0 0.0
    %630 = vmatmul.mubr.f32.gmra.mxu0 %v526
    %v631 = vpop.f32.mrf.mxu0
    %v632 = vadd.f32 0.0, %v631
    %v633 = vpop.f32.mrf.mxu0
    %634 = vmatprep.mubr.f32.mxu0 0.0
    %635 = vmatmul.mubr.f32.gmra.mxu0 %v529
    %v636 = vpop.f32.mrf.mxu0
    %v637 = vadd.f32 0.0, %v636
    %v638 = vpop.f32.mrf.mxu0
    %639 = vmatprep.mubr.f32.mxu0 0.0
    %640 = vmatmul.mubr.f32.gmra.mxu0 %v532
    %v641 = vpop.f32.mrf.mxu0
    %v642 = vadd.f32 0.0, %v641
    %v643 = vpop.f32.mrf.mxu0
    %644 = vdwg.mxu0
    %v645 = vmul.f32 %v607, 0.35355338
    %v646 = vmul.f32 %v612, 0.35355338
    %v647 = vmul.f32 %v617, 0.35355338
    %v648 = vmul.f32 %v622, 0.35355338
    %v649 = vmul.f32 %v627, 0.35355338
    %v650 = vmul.f32 %v632, 0.35355338
    %v651 = vmul.f32 %v637, 0.35355338
    %v652 = vmul.f32 %v642, 0.35355338
    %v653 = vadd.f32 %v645, %v155
    %v654 = vadd.f32 %v646, %v156
    %v655 = vadd.f32 %v647, %v157
    %v656 = vadd.f32 %v648, %v158
    %v657 = vadd.f32 %v649, %v159
    %v658 = vadd.f32 %v650, %v160
    %v659 = vadd.f32 %v651, %v161
    %v660 = vadd.f32 %v652, %v162
    %vm661 = vcmask 130048
    %v662 = vsel %vm661, %v653, -inf
    %663 = vmax.xlane.f32.xlu0 %v662
    %v664 = vpop.xlane.xlu0 %663
    %v665 = vsel %vm661, %v654, -inf
    %666 = vmax.xlane.f32.xlu0 %v665
    %v667 = vpop.xlane.xlu0 %666
    %v668 = vsel %vm661, %v655, -inf
    %669 = vmax.xlane.f32.xlu0 %v668
    %v670 = vpop.xlane.xlu0 %669
    %v671 = vsel %vm661, %v656, -inf
    %672 = vmax.xlane.f32.xlu0 %v671
    %v673 = vpop.xlane.xlu0 %672
    %v674 = vsel %vm661, %v657, -inf
    %675 = vmax.xlane.f32.xlu0 %v674
    %v676 = vpop.xlane.xlu0 %675
    %v677 = vsel %vm661, %v658, -inf
    %678 = vmax.xlane.f32.xlu0 %v677
    %v679 = vpop.xlane.xlu0 %678
    %v680 = vsel %vm661, %v659, -inf
    %681 = vmax.xlane.f32.xlu0 %v680
    %v682 = vpop.xlane.xlu0 %681
    %v683 = vsel %vm661, %v660, -inf
    %684 = vmax.xlane.f32.xlu0 %v683
    %v685 = vpop.xlane.xlu0 %684
    %v686 = vsub.f32 %v653, %v664
    %v687 = vsub.f32 %v654, %v667
    %v688 = vsub.f32 %v655, %v670
    %v689 = vsub.f32 %v656, %v673
    %v690 = vsub.f32 %v657, %v676
    %v691 = vsub.f32 %v658, %v679
    %v692 = vsub.f32 %v659, %v682
    %v693 = vsub.f32 %v660, %v685
    %v694 = vmul.f32 %v686, 1.442695
    %v695 = vpow.pop %v694
    %v696 = vmul.f32 %v687, 1.442695
    %v697 = vpow.pop %v696
    %v698 = vmul.f32 %v688, 1.442695
    %v699 = vpow.pop %v698
    %v700 = vmul.f32 %v689, 1.442695
    %v701 = vpow.pop %v700
    %v702 = vmul.f32 %v690, 1.442695
    %v703 = vpow.pop %v702
    %v704 = vmul.f32 %v691, 1.442695
    %v705 = vpow.pop %v704
    %v706 = vmul.f32 %v692, 1.442695
    %v707 = vpow.pop %v706
    %v708 = vmul.f32 %v693, 1.442695
    %v709 = vpow.pop %v708
    %v710 = vsel %vm661, %v695, 0.0
    %711 = vadd.xlane.f32.xlu0 %v710
    %v712 = vpop.xlane.xlu0 %711
    %v713 = vsel %vm661, %v697, 0.0
    %714 = vadd.xlane.f32.xlu0 %v713
    %v715 = vpop.xlane.xlu0 %714
    %v716 = vsel %vm661, %v699, 0.0
    %717 = vadd.xlane.f32.xlu0 %v716
    %v718 = vpop.xlane.xlu0 %717
    %v719 = vsel %vm661, %v701, 0.0
    %720 = vadd.xlane.f32.xlu0 %v719
    %v721 = vpop.xlane.xlu0 %720
    %v722 = vsel %vm661, %v703, 0.0
    %723 = vadd.xlane.f32.xlu0 %v722
    %v724 = vpop.xlane.xlu0 %723
    %v725 = vsel %vm661, %v705, 0.0
    %726 = vadd.xlane.f32.xlu0 %v725
    %v727 = vpop.xlane.xlu0 %726
    %v728 = vsel %vm661, %v707, 0.0
    %729 = vadd.xlane.f32.xlu0 %v728
    %v730 = vpop.xlane.xlu0 %729
    %v731 = vsel %vm661, %v709, 0.0
    %732 = vadd.xlane.f32.xlu0 %v731
    %v733 = vpop.xlane.xlu0 %732
    %v734 = vrcp.pop %v712
    %v735 = vrcp.pop %v715
    %v736 = vrcp.pop %v718
    %v737 = vrcp.pop %v721
    %v738 = vrcp.pop %v724
    %v739 = vrcp.pop %v727
    %v740 = vrcp.pop %v730
    %v741 = vrcp.pop %v733
    %v742 = vmul.f32 %v695, %v734
    %v743 = vmul.f32 %v697, %v735
    %v744 = vmul.f32 %v699, %v736
    %v745 = vmul.f32 %v701, %v737
    %v746 = vmul.f32 %v703, %v738
    %v747 = vmul.f32 %v705, %v739
    %v748 = vmul.f32 %v707, %v740
    %v749 = vmul.f32 %v709, %v741
    %v751 = vsel %vm661, %v742, 0
    %v754 = vsel %vm661, %v743, 0
    %v757 = vsel %vm661, %v744, 0
    %v760 = vsel %vm661, %v745, 0
    %v763 = vsel %vm661, %v746, 0
    %v766 = vsel %vm661, %v747, 0
    %v769 = vsel %vm661, %v748, 0
    %v772 = vsel %vm661, %v749, 0
    %774 = vmatprep.subr.mxu0 0.0
    %775 = vmatpush1.msra.mxu0 0.0
    %776 = vmatprep.subr.mxu0 0.0
    %777 = vmatpush1.msra.mxu0 0.0
    %778 = vmatprep.subr.mxu0 0.0
    %779 = vmatpush1.msra.mxu0 0.0
    %780 = vmatprep.subr.mxu0 0.0
    %781 = vmatpush1.msra.mxu0 0.0
    %782 = vmatprep.subr.mxu0 0.0
    %783 = vmatpush1.msra.mxu0 0.0
    %784 = vmatprep.subr.mxu0 0.0
    %785 = vmatpush1.msra.mxu0 0.0
    %786 = vmatprep.subr.mxu0 0.0
    %787 = vmatpush1.msra.mxu0 0.0
    %788 = vmatprep.subr.mxu0 0.0
    %789 = vmatpush1.msra.mxu0 0.0
    %790 = vmatprep.subr.mxu0 0.0
    %791 = vmatpush1.msra.mxu0 0.0
    %792 = vmatprep.subr.mxu0 0.0
    %793 = vmatpush1.msra.mxu0 0.0
    %794 = vmatprep.subr.mxu0 0.0
    %795 = vmatpush1.msra.mxu0 0.0
    %796 = vmatprep.subr.mxu0 0.0
    %797 = vmatpush1.msra.mxu0 0.0
    %798 = vmatprep.subr.mxu0 0.0
    %799 = vmatpush1.msra.mxu0 0.0
    %800 = vmatprep.subr.mxu0 0.0
    %801 = vmatpush1.msra.mxu0 0.0
    %802 = vmatprep.subr.mxu0 0.0
    %803 = vmatpush1.msra.mxu0 %v499
    %804 = vmatprep.subr.mxu0 0.0
    %805 = vmatpush1.msra.mxu0 %v494
    %806 = vmatprep.subr.mxu0 0.0
    %807 = vmatpush2.msra.mxu0 0.0
    %808 = vmatprep.subr.mxu0 0.0
    %809 = vmatpush2.msra.mxu0 0.0
    %810 = vmatprep.subr.mxu0 0.0
    %811 = vmatpush2.msra.mxu0 0.0
    %812 = vmatprep.subr.mxu0 0.0
    %813 = vmatpush2.msra.mxu0 0.0
    %814 = vmatprep.subr.mxu0 0.0
    %815 = vmatpush2.msra.mxu0 0.0
    %816 = vmatprep.subr.mxu0 0.0
    %817 = vmatpush2.msra.mxu0 0.0
    %818 = vmatprep.subr.mxu0 0.0
    %819 = vmatpush2.msra.mxu0 0.0
    %820 = vmatprep.subr.mxu0 0.0
    %821 = vmatpush2.msra.mxu0 0.0
    %822 = vmatprep.subr.mxu0 0.0
    %823 = vmatpush2.msra.mxu0 0.0
    %824 = vmatprep.subr.mxu0 0.0
    %825 = vmatpush2.msra.mxu0 0.0
    %826 = vmatprep.subr.mxu0 0.0
    %827 = vmatpush2.msra.mxu0 0.0
    %828 = vmatprep.subr.mxu0 0.0
    %829 = vmatpush2.msra.mxu0 0.0
    %830 = vmatprep.subr.mxu0 0.0
    %831 = vmatpush2.msra.mxu0 0.0
    %832 = vmatprep.subr.mxu0 0.0
    %833 = vmatpush2.msra.mxu0 0.0
    %834 = vmatprep.subr.mxu0 0.0
    %835 = vmatpush2.msra.mxu0 0.0
    %836 = vmatprep.subr.mxu0 0.0
    %837 = vmatpush2.msra.mxu0 0.0
    %838 = vmatprep.mubr.f32.mxu0 0.0
    %839 = vmatmul.mubr.f32.gmra.mxu0 %v751
    %v840 = vpop.f32.mrf.mxu0
    %v841 = vadd.f32 0.0, %v840
    %v842 = vpop.f32.mrf.mxu0
    %843 = vmatprep.mubr.f32.mxu0 0.0
    %844 = vmatmul.mubr.f32.gmra.mxu0 %v754
    %v845 = vpop.f32.mrf.mxu0
    %v846 = vadd.f32 0.0, %v845
    %v847 = vpop.f32.mrf.mxu0
    %848 = vmatprep.mubr.f32.mxu0 0.0
    %849 = vmatmul.mubr.f32.gmra.mxu0 %v757
    %v850 = vpop.f32.mrf.mxu0
    %v851 = vadd.f32 0.0, %v850
    %v852 = vpop.f32.mrf.mxu0
    %853 = vmatprep.mubr.f32.mxu0 0.0
    %854 = vmatmul.mubr.f32.gmra.mxu0 %v760
    %v855 = vpop.f32.mrf.mxu0
    %v856 = vadd.f32 0.0, %v855
    %v857 = vpop.f32.mrf.mxu0
    %858 = vmatprep.mubr.f32.mxu0 0.0
    %859 = vmatmul.mubr.f32.gmra.mxu0 %v763
    %v860 = vpop.f32.mrf.mxu0
    %v861 = vadd.f32 0.0, %v860
    %v862 = vpop.f32.mrf.mxu0
    %863 = vmatprep.mubr.f32.mxu0 0.0
    %864 = vmatmul.mubr.f32.gmra.mxu0 %v766
    %v865 = vpop.f32.mrf.mxu0
    %v866 = vadd.f32 0.0, %v865
    %v867 = vpop.f32.mrf.mxu0
    %868 = vmatprep.mubr.f32.mxu0 0.0
    %869 = vmatmul.mubr.f32.gmra.mxu0 %v769
    %v870 = vpop.f32.mrf.mxu0
    %v871 = vadd.f32 0.0, %v870
    %v872 = vpop.f32.mrf.mxu0
    %873 = vmatprep.mubr.f32.mxu0 0.0
    %874 = vmatmul.mubr.f32.gmra.mxu0 %v772
    %v875 = vpop.f32.mrf.mxu0
    %v876 = vadd.f32 0.0, %v875
    %v877 = vpop.f32.mrf.mxu0
    %878 = vdwg.mxu0
    %v879 = vmul.f32 %v841, %v179
    %v880 = vmul.f32 %v846, %v180
    %v881 = vmul.f32 %v851, %v181
    %v882 = vmul.f32 %v856, %v182
    %v883 = vmul.f32 %v861, %v183
    %v884 = vmul.f32 %v866, %v184
    %v885 = vmul.f32 %v871, %v185
    %v886 = vmul.f32 %v876, %v186
    %v887 = vadd.f32 %v879, %v881
    %v888 = vadd.f32 %v880, %v882
    %v889 = vadd.f32 %v887, %v883
    %v890 = vadd.f32 %v888, %v884
    %v891 = vadd.f32 %v889, %v885
    %v892 = vadd.f32 %v890, %v886
    %v894 = vlaneseq
    %v895 = vshrl.u32 %v894, 7
    %v896 = vsub.s32 0, %v895
    %v897 = vrot.slane %v252, %v896
    %v900 = vsel %vm189, %v891, 0
    %v903 = vsel %vm189, %v892, 0
    %905 = vmatprep.subr.mxu0 0.0
    %906 = vmatpush1.msra.mxu0 0.0
    %907 = vmatprep.subr.mxu0 0.0
    %908 = vmatpush1.msra.mxu0 0.0
    %909 = vmatprep.subr.mxu0 0.0
    %910 = vmatpush1.msra.mxu0 0.0
    %911 = vmatprep.subr.mxu0 0.0
    %912 = vmatpush1.msra.mxu0 0.0
    %913 = vmatprep.subr.mxu0 0.0
    %914 = vmatpush1.msra.mxu0 0.0
    %915 = vmatprep.subr.mxu0 0.0
    %916 = vmatpush1.msra.mxu0 0.0
    %917 = vmatprep.subr.mxu0 0.0
    %918 = vmatpush1.msra.mxu0 0.0
    %919 = vmatprep.subr.mxu0 0.0
    %920 = vmatpush1.msra.mxu0 0.0
    %921 = vmatprep.subr.mxu0 0.0
    %922 = vmatpush1.msra.mxu0 0.0
    %923 = vmatprep.subr.mxu0 0.0
    %924 = vmatpush1.msra.mxu0 0.0
    %925 = vmatprep.subr.mxu0 0.0
    %926 = vmatpush1.msra.mxu0 0.0
    %927 = vmatprep.subr.mxu0 0.0
    %928 = vmatpush1.msra.mxu0 0.0
    %929 = vmatprep.subr.mxu0 0.0
    %930 = vmatpush1.msra.mxu0 %v251
    %931 = vmatprep.subr.mxu0 0.0
    %932 = vmatpush1.msra.mxu0 %v250
    %933 = vmatprep.subr.mxu0 0.0
    %934 = vmatpush1.msra.mxu0 %v249
    %935 = vmatprep.subr.mxu0 0.0
    %936 = vmatpush1.msra.mxu0 %v248
    %937 = vmatprep.subr.mxu0 0.0
    %938 = vmatpush2.msra.mxu0 0.0
    %939 = vmatprep.subr.mxu0 0.0
    %940 = vmatpush2.msra.mxu0 0.0
    %941 = vmatprep.subr.mxu0 0.0
    %942 = vmatpush2.msra.mxu0 0.0
    %943 = vmatprep.subr.mxu0 0.0
    %944 = vmatpush2.msra.mxu0 0.0
    %945 = vmatprep.subr.mxu0 0.0
    %946 = vmatpush2.msra.mxu0 0.0
    %947 = vmatprep.subr.mxu0 0.0
    %948 = vmatpush2.msra.mxu0 0.0
    %949 = vmatprep.subr.mxu0 0.0
    %950 = vmatpush2.msra.mxu0 0.0
    %951 = vmatprep.subr.mxu0 0.0
    %952 = vmatpush2.msra.mxu0 0.0
    %953 = vmatprep.subr.mxu0 0.0
    %954 = vmatpush2.msra.mxu0 0.0
    %955 = vmatprep.subr.mxu0 0.0
    %956 = vmatpush2.msra.mxu0 0.0
    %957 = vmatprep.subr.mxu0 0.0
    %958 = vmatpush2.msra.mxu0 0.0
    %959 = vmatprep.subr.mxu0 0.0
    %960 = vmatpush2.msra.mxu0 0.0
    %961 = vmatprep.subr.mxu0 0.0
    %962 = vmatpush2.msra.mxu0 0.0
    %963 = vmatprep.subr.mxu0 0.0
    %964 = vmatpush2.msra.mxu0 0.0
    %965 = vmatprep.subr.mxu0 0.0
    %966 = vmatpush2.msra.mxu0 0.0
    %967 = vmatprep.subr.mxu0 0.0
    %968 = vmatpush2.msra.mxu0 0.0
    %969 = vmatprep.mubr.f32.mxu0 0.0
    %970 = vmatmul.mubr.f32.gmra.mxu0 %v900
    %v971 = vpop.f32.mrf.mxu0
    %v972 = vadd.f32 %v897, %v971
    %v973 = vpop.f32.mrf.mxu0
    %974 = vmatprep.mubr.f32.mxu0 0.0
    %975 = vmatmul.mubr.f32.gmra.mxu0 %v903
    %v976 = vpop.f32.mrf.mxu0
    %v977 = vadd.f32 %v897, %v976
    %v978 = vpop.f32.mrf.mxu0
    %979 = vdwg.mxu0
    %v980 = vadd.f32 %v151, %v972
    %v981 = vadd.f32 %v152, %v977
    %v982 = vld [vmem:[%s33] sm:$0x1]
    %v983 = vld [vmem:[%s35] sm:$0x1]
    %v984 = vsel %vm189, %v980, 0.0
    %985 = vadd.xlane.f32.xlu0 %v984
    %v986 = vpop.xlane.xlu0 %985
    %v987 = vsel %vm189, %v981, 0.0
    %988 = vadd.xlane.f32.xlu0 %v987
    %v989 = vpop.xlane.xlu0 %988
    %v990 = vmul.f32 %v986, %v196
    %v991 = vmul.f32 %v989, %v196
    %v992 = vsub.f32 %v980, %v990
    %v993 = vsub.f32 %v981, %v991
    %v994 = vmul.f32 %v992, %v992
    %v995 = vmul.f32 %v993, %v993
    %v996 = vsel %vm189, %v994, 0.0
    %997 = vadd.xlane.f32.xlu0 %v996
    %v998 = vpop.xlane.xlu0 %997
    %v999 = vsel %vm189, %v995, 0.0
    %1000 = vadd.xlane.f32.xlu0 %v999
    %v1001 = vpop.xlane.xlu0 %1000
    %v1002 = vmul.f32 %v998, %v196
    %v1003 = vmul.f32 %v1001, %v196
    %v1004 = vadd.f32 %v1002, 1e-05
    %v1005 = vadd.f32 %v1003, 1e-05
    %v1006 = vrsqrt.pop %v1004
    %v1007 = vrsqrt.pop %v1005
    %v1008 = vmul.f32 %v992, %v1006
    %v1009 = vmul.f32 %v993, %v1007
    %v1011 = vlaneseq
    %v1012 = vshrl.u32 %v1011, 7
    %v1013 = vsub.s32 0, %v1012
    %v1014 = vrot.slane %v982, %v1013
    %v1016 = vmul.f32 %v1008, %v1014
    %v1017 = vmul.f32 %v1009, %v1014
    %v1019 = vlaneseq
    %v1020 = vshrl.u32 %v1019, 7
    %v1021 = vsub.s32 0, %v1020
    %v1022 = vrot.slane %v983, %v1021
    %v1024 = vadd.f32 %v1016, %v1022
    %v1025 = vadd.f32 %v1017, %v1022
    %v1026 = vld [vmem:[%s37] sm:$0xff]
    %v1027 = vld [vmem:[%s37 + $0x8] sm:$0xff]
    %v1028 = vld [vmem:[%s37 + $0x10] sm:$0xff]
    %v1029 = vld [vmem:[%s37 + $0x18] sm:$0xff]
    %v1030 = vld [vmem:[%s39] sm:$0x1]
    %v1031 = vld [vmem:[%s41] sm:$0xff]
    %v1032 = vld [vmem:[%s41 + $0x8] sm:$0xff]
    %v1033 = vld [vmem:[%s41 + $0x10] sm:$0xff]
    %v1034 = vld [vmem:[%s41 + $0x18] sm:$0xff]
    %v1035 = vld [vmem:[%s43] sm:$0x1]
    %v1036 = vld [vmem:[%s45] sm:$0xff]
    %v1037 = vld [vmem:[%s45 + $0x8] sm:$0xff]
    %v1038 = vld [vmem:[%s45 + $0x10] sm:$0xff]
    %v1039 = vld [vmem:[%s45 + $0x18] sm:$0xff]
    %v1040 = vld [vmem:[%s47] sm:$0x1]
    %v1041 = vld [vmem:[%s49] sm:$0xff]
    %v1042 = vld [vmem:[%s49 + $0x8] sm:$0xff]
    %v1043 = vld [vmem:[%s49 + $0x10] sm:$0xff]
    %v1044 = vld [vmem:[%s49 + $0x18] sm:$0xff]
    %v1045 = vld [vmem:[%s51] sm:$0x1]
    %v1047 = vlaneseq
    %v1048 = vshrl.u32 %v1047, 7
    %v1049 = vsub.s32 0, %v1048
    %v1050 = vrot.slane %v1030, %v1049
    %v1053 = vsel %vm189, %v1024, 0
    %v1056 = vsel %vm189, %v1025, 0
    %1058 = vmatprep.subr.mxu0 0.0
    %1059 = vmatpush1.msra.mxu0 0.0
    %1060 = vmatprep.subr.mxu0 0.0
    %1061 = vmatpush1.msra.mxu0 0.0
    %1062 = vmatprep.subr.mxu0 0.0
    %1063 = vmatpush1.msra.mxu0 0.0
    %1064 = vmatprep.subr.mxu0 0.0
    %1065 = vmatpush1.msra.mxu0 0.0
    %1066 = vmatprep.subr.mxu0 0.0
    %1067 = vmatpush1.msra.mxu0 0.0
    %1068 = vmatprep.subr.mxu0 0.0
    %1069 = vmatpush1.msra.mxu0 0.0
    %1070 = vmatprep.subr.mxu0 0.0
    %1071 = vmatpush1.msra.mxu0 0.0
    %1072 = vmatprep.subr.mxu0 0.0
    %1073 = vmatpush1.msra.mxu0 0.0
    %1074 = vmatprep.subr.mxu0 0.0
    %1075 = vmatpush1.msra.mxu0 0.0
    %1076 = vmatprep.subr.mxu0 0.0
    %1077 = vmatpush1.msra.mxu0 0.0
    %1078 = vmatprep.subr.mxu0 0.0
    %1079 = vmatpush1.msra.mxu0 0.0
    %1080 = vmatprep.subr.mxu0 0.0
    %1081 = vmatpush1.msra.mxu0 0.0
    %1082 = vmatprep.subr.mxu0 0.0
    %1083 = vmatpush1.msra.mxu0 %v1029
    %1084 = vmatprep.subr.mxu0 0.0
    %1085 = vmatpush1.msra.mxu0 %v1028
    %1086 = vmatprep.subr.mxu0 0.0
    %1087 = vmatpush1.msra.mxu0 %v1027
    %1088 = vmatprep.subr.mxu0 0.0
    %1089 = vmatpush1.msra.mxu0 %v1026
    %1090 = vmatprep.subr.mxu0 0.0
    %1091 = vmatpush2.msra.mxu0 0.0
    %1092 = vmatprep.subr.mxu0 0.0
    %1093 = vmatpush2.msra.mxu0 0.0
    %1094 = vmatprep.subr.mxu0 0.0
    %1095 = vmatpush2.msra.mxu0 0.0
    %1096 = vmatprep.subr.mxu0 0.0
    %1097 = vmatpush2.msra.mxu0 0.0
    %1098 = vmatprep.subr.mxu0 0.0
    %1099 = vmatpush2.msra.mxu0 0.0
    %1100 = vmatprep.subr.mxu0 0.0
    %1101 = vmatpush2.msra.mxu0 0.0
    %1102 = vmatprep.subr.mxu0 0.0
    %1103 = vmatpush2.msra.mxu0 0.0
    %1104 = vmatprep.subr.mxu0 0.0
    %1105 = vmatpush2.msra.mxu0 0.0
    %1106 = vmatprep.subr.mxu0 0.0
    %1107 = vmatpush2.msra.mxu0 0.0
    %1108 = vmatprep.subr.mxu0 0.0
    %1109 = vmatpush2.msra.mxu0 0.0
    %1110 = vmatprep.subr.mxu0 0.0
    %1111 = vmatpush2.msra.mxu0 0.0
    %1112 = vmatprep.subr.mxu0 0.0
    %1113 = vmatpush2.msra.mxu0 0.0
    %1114 = vmatprep.subr.mxu0 0.0
    %1115 = vmatpush2.msra.mxu0 0.0
    %1116 = vmatprep.subr.mxu0 0.0
    %1117 = vmatpush2.msra.mxu0 0.0
    %1118 = vmatprep.subr.mxu0 0.0
    %1119 = vmatpush2.msra.mxu0 0.0
    %1120 = vmatprep.subr.mxu0 0.0
    %1121 = vmatpush2.msra.mxu0 0.0
    %1122 = vmatprep.mubr.f32.mxu0 0.0
    %1123 = vmatmul.mubr.f32.gmra.mxu0 %v1053
    %v1124 = vpop.f32.mrf.mxu0
    %v1125 = vadd.f32 %v1050, %v1124
    %v1126 = vpop.f32.mrf.mxu0
    %1127 = vmatprep.mubr.f32.mxu0 0.0
    %1128 = vmatmul.mubr.f32.gmra.mxu0 %v1056
    %v1129 = vpop.f32.mrf.mxu0
    %v1130 = vadd.f32 %v1050, %v1129
    %v1131 = vpop.f32.mrf.mxu0
    %1132 = vdwg.mxu0
    %v1134 = vlaneseq
    %v1135 = vshrl.u32 %v1134, 7
    %v1136 = vsub.s32 0, %v1135
    %v1137 = vrot.slane %v1035, %v1136
    %v1140 = vsel %vm189, %v153, 0
    %v1143 = vsel %vm189, %v154, 0
    %1145 = vmatprep.subr.mxu0 0.0
    %1146 = vmatpush1.msra.mxu0 0.0
    %1147 = vmatprep.subr.mxu0 0.0
    %1148 = vmatpush1.msra.mxu0 0.0
    %1149 = vmatprep.subr.mxu0 0.0
    %1150 = vmatpush1.msra.mxu0 0.0
    %1151 = vmatprep.subr.mxu0 0.0
    %1152 = vmatpush1.msra.mxu0 0.0
    %1153 = vmatprep.subr.mxu0 0.0
    %1154 = vmatpush1.msra.mxu0 0.0
    %1155 = vmatprep.subr.mxu0 0.0
    %1156 = vmatpush1.msra.mxu0 0.0
    %1157 = vmatprep.subr.mxu0 0.0
    %1158 = vmatpush1.msra.mxu0 0.0
    %1159 = vmatprep.subr.mxu0 0.0
    %1160 = vmatpush1.msra.mxu0 0.0
    %1161 = vmatprep.subr.mxu0 0.0
    %1162 = vmatpush1.msra.mxu0 0.0
    %1163 = vmatprep.subr.mxu0 0.0
    %1164 = vmatpush1.msra.mxu0 0.0
    %1165 = vmatprep.subr.mxu0 0.0
    %1166 = vmatpush1.msra.mxu0 0.0
    %1167 = vmatprep.subr.mxu0 0.0
    %1168 = vmatpush1.msra.mxu0 0.0
    %1169 = vmatprep.subr.mxu0 0.0
    %1170 = vmatpush1.msra.mxu0 %v1034
    %1171 = vmatprep.subr.mxu0 0.0
    %1172 = vmatpush1.msra.mxu0 %v1033
    %1173 = vmatprep.subr.mxu0 0.0
    %1174 = vmatpush1.msra.mxu0 %v1032
    %1175 = vmatprep.subr.mxu0 0.0
    %1176 = vmatpush1.msra.mxu0 %v1031
    %1177 = vmatprep.subr.mxu0 0.0
    %1178 = vmatpush2.msra.mxu0 0.0
    %1179 = vmatprep.subr.mxu0 0.0
    %1180 = vmatpush2.msra.mxu0 0.0
    %1181 = vmatprep.subr.mxu0 0.0
    %1182 = vmatpush2.msra.mxu0 0.0
    %1183 = vmatprep.subr.mxu0 0.0
    %1184 = vmatpush2.msra.mxu0 0.0
    %1185 = vmatprep.subr.mxu0 0.0
    %1186 = vmatpush2.msra.mxu0 0.0
    %1187 = vmatprep.subr.mxu0 0.0
    %1188 = vmatpush2.msra.mxu0 0.0
    %1189 = vmatprep.subr.mxu0 0.0
    %1190 = vmatpush2.msra.mxu0 0.0
    %1191 = vmatprep.subr.mxu0 0.0
    %1192 = vmatpush2.msra.mxu0 0.0
    %1193 = vmatprep.subr.mxu0 0.0
    %1194 = vmatpush2.msra.mxu0 0.0
    %1195 = vmatprep.subr.mxu0 0.0
    %1196 = vmatpush2.msra.mxu0 0.0
    %1197 = vmatprep.subr.mxu0 0.0
    %1198 = vmatpush2.msra.mxu0 0.0
    %1199 = vmatprep.subr.mxu0 0.0
    %1200 = vmatpush2.msra.mxu0 0.0
    %1201 = vmatprep.subr.mxu0 0.0
    %1202 = vmatpush2.msra.mxu0 0.0
    %1203 = vmatprep.subr.mxu0 0.0
    %1204 = vmatpush2.msra.mxu0 0.0
    %1205 = vmatprep.subr.mxu0 0.0
    %1206 = vmatpush2.msra.mxu0 0.0
    %1207 = vmatprep.subr.mxu0 0.0
    %1208 = vmatpush2.msra.mxu0 0.0
    %1209 = vmatprep.mubr.f32.mxu0 0.0
    %1210 = vmatmul.mubr.f32.gmra.mxu0 %v1140
    %v1211 = vpop.f32.mrf.mxu0
    %v1212 = vadd.f32 %v1137, %v1211
    %v1213 = vpop.f32.mrf.mxu0
    %1214 = vmatprep.mubr.f32.mxu0 0.0
    %1215 = vmatmul.mubr.f32.gmra.mxu0 %v1143
    %v1216 = vpop.f32.mrf.mxu0
    %v1217 = vadd.f32 %v1137, %v1216
    %v1218 = vpop.f32.mrf.mxu0
    %1219 = vdwg.mxu0
    %v1221 = vlaneseq
    %v1222 = vshrl.u32 %v1221, 7
    %v1223 = vsub.s32 0, %v1222
    %v1224 = vrot.slane %v1040, %v1223
    %1226 = vmatprep.subr.mxu0 0.0
    %1227 = vmatpush1.msra.mxu0 0.0
    %1228 = vmatprep.subr.mxu0 0.0
    %1229 = vmatpush1.msra.mxu0 0.0
    %1230 = vmatprep.subr.mxu0 0.0
    %1231 = vmatpush1.msra.mxu0 0.0
    %1232 = vmatprep.subr.mxu0 0.0
    %1233 = vmatpush1.msra.mxu0 0.0
    %1234 = vmatprep.subr.mxu0 0.0
    %1235 = vmatpush1.msra.mxu0 0.0
    %1236 = vmatprep.subr.mxu0 0.0
    %1237 = vmatpush1.msra.mxu0 0.0
    %1238 = vmatprep.subr.mxu0 0.0
    %1239 = vmatpush1.msra.mxu0 0.0
    %1240 = vmatprep.subr.mxu0 0.0
    %1241 = vmatpush1.msra.mxu0 0.0
    %1242 = vmatprep.subr.mxu0 0.0
    %1243 = vmatpush1.msra.mxu0 0.0
    %1244 = vmatprep.subr.mxu0 0.0
    %1245 = vmatpush1.msra.mxu0 0.0
    %1246 = vmatprep.subr.mxu0 0.0
    %1247 = vmatpush1.msra.mxu0 0.0
    %1248 = vmatprep.subr.mxu0 0.0
    %1249 = vmatpush1.msra.mxu0 0.0
    %1250 = vmatprep.subr.mxu0 0.0
    %1251 = vmatpush1.msra.mxu0 %v1039
    %1252 = vmatprep.subr.mxu0 0.0
    %1253 = vmatpush1.msra.mxu0 %v1038
    %1254 = vmatprep.subr.mxu0 0.0
    %1255 = vmatpush1.msra.mxu0 %v1037
    %1256 = vmatprep.subr.mxu0 0.0
    %1257 = vmatpush1.msra.mxu0 %v1036
    %1258 = vmatprep.subr.mxu0 0.0
    %1259 = vmatpush2.msra.mxu0 0.0
    %1260 = vmatprep.subr.mxu0 0.0
    %1261 = vmatpush2.msra.mxu0 0.0
    %1262 = vmatprep.subr.mxu0 0.0
    %1263 = vmatpush2.msra.mxu0 0.0
    %1264 = vmatprep.subr.mxu0 0.0
    %1265 = vmatpush2.msra.mxu0 0.0
    %1266 = vmatprep.subr.mxu0 0.0
    %1267 = vmatpush2.msra.mxu0 0.0
    %1268 = vmatprep.subr.mxu0 0.0
    %1269 = vmatpush2.msra.mxu0 0.0
    %1270 = vmatprep.subr.mxu0 0.0
    %1271 = vmatpush2.msra.mxu0 0.0
    %1272 = vmatprep.subr.mxu0 0.0
    %1273 = vmatpush2.msra.mxu0 0.0
    %1274 = vmatprep.subr.mxu0 0.0
    %1275 = vmatpush2.msra.mxu0 0.0
    %1276 = vmatprep.subr.mxu0 0.0
    %1277 = vmatpush2.msra.mxu0 0.0
    %1278 = vmatprep.subr.mxu0 0.0
    %1279 = vmatpush2.msra.mxu0 0.0
    %1280 = vmatprep.subr.mxu0 0.0
    %1281 = vmatpush2.msra.mxu0 0.0
    %1282 = vmatprep.subr.mxu0 0.0
    %1283 = vmatpush2.msra.mxu0 0.0
    %1284 = vmatprep.subr.mxu0 0.0
    %1285 = vmatpush2.msra.mxu0 0.0
    %1286 = vmatprep.subr.mxu0 0.0
    %1287 = vmatpush2.msra.mxu0 0.0
    %1288 = vmatprep.subr.mxu0 0.0
    %1289 = vmatpush2.msra.mxu0 0.0
    %1290 = vmatprep.mubr.f32.mxu0 0.0
    %1291 = vmatmul.mubr.f32.gmra.mxu0 %v1140
    %v1292 = vpop.f32.mrf.mxu0
    %v1293 = vadd.f32 %v1224, %v1292
    %v1294 = vpop.f32.mrf.mxu0
    %1295 = vmatprep.mubr.f32.mxu0 0.0
    %1296 = vmatmul.mubr.f32.gmra.mxu0 %v1143
    %v1297 = vpop.f32.mrf.mxu0
    %v1298 = vadd.f32 %v1224, %v1297
    %v1299 = vpop.f32.mrf.mxu0
    %1300 = vdwg.mxu0
    %v1301 = vmul.f32 %v1125, %v171
    %v1302 = vmul.f32 %v1130, %v172
    %v1303 = vmul.f32 %v1125, %v173
    %v1304 = vmul.f32 %v1130, %v174
    %v1305 = vmul.f32 %v1125, %v175
    %v1306 = vmul.f32 %v1130, %v176
    %v1307 = vmul.f32 %v1125, %v177
    %v1308 = vmul.f32 %v1130, %v178
    %v1310 = vsel %vm189, %v1301, 0
    %v1313 = vsel %vm189, %v1302, 0
    %v1316 = vsel %vm189, %v1303, 0
    %v1319 = vsel %vm189, %v1304, 0
    %v1322 = vsel %vm189, %v1305, 0
    %v1325 = vsel %vm189, %v1306, 0
    %v1328 = vsel %vm189, %v1307, 0
    %v1331 = vsel %vm189, %v1308, 0
    %v1334 = vsel %vm189, %v1212, 0
    %v1337 = vsel %vm189, %v1217, 0
    %1339 = vmatprep.subr.mxu0 0.0
    %1340 = vmatpush1.xpose.msra.mxu0 0.0
    %1341 = vmatprep.subr.mxu0 0.0
    %1342 = vmatpush1.xpose.msra.mxu0 0.0
    %1343 = vmatprep.subr.mxu0 0.0
    %1344 = vmatpush1.xpose.msra.mxu0 0.0
    %1345 = vmatprep.subr.mxu0 0.0
    %1346 = vmatpush1.xpose.msra.mxu0 0.0
    %1347 = vmatprep.subr.mxu0 0.0
    %1348 = vmatpush1.xpose.msra.mxu0 0.0
    %1349 = vmatprep.subr.mxu0 0.0
    %1350 = vmatpush1.xpose.msra.mxu0 0.0
    %1351 = vmatprep.subr.mxu0 0.0
    %1352 = vmatpush1.xpose.msra.mxu0 0.0
    %1353 = vmatprep.subr.mxu0 0.0
    %1354 = vmatpush1.xpose.msra.mxu0 0.0
    %1355 = vmatprep.subr.mxu0 0.0
    %1356 = vmatpush1.xpose.msra.mxu0 0.0
    %1357 = vmatprep.subr.mxu0 0.0
    %1358 = vmatpush1.xpose.msra.mxu0 0.0
    %1359 = vmatprep.subr.mxu0 0.0
    %1360 = vmatpush1.xpose.msra.mxu0 0.0
    %1361 = vmatprep.subr.mxu0 0.0
    %1362 = vmatpush1.xpose.msra.mxu0 0.0
    %1363 = vmatprep.subr.mxu0 0.0
    %1364 = vmatpush1.xpose.msra.mxu0 0.0
    %1365 = vmatprep.subr.mxu0 0.0
    %1366 = vmatpush1.xpose.msra.mxu0 0.0
    %1367 = vmatprep.subr.mxu0 0.0
    %1368 = vmatpush1.xpose.msra.mxu0 %v1337
    %1369 = vmatprep.subr.mxu0 0.0
    %1370 = vmatpush1.xpose.msra.mxu0 %v1334
    %1371 = vmatprep.subr.mxu0 0.0
    %1372 = vmatpush2.xpose.msra.mxu0 0.0
    %1373 = vmatprep.subr.mxu0 0.0
    %1374 = vmatpush2.xpose.msra.mxu0 0.0
    %1375 = vmatprep.subr.mxu0 0.0
    %1376 = vmatpush2.xpose.msra.mxu0 0.0
    %1377 = vmatprep.subr.mxu0 0.0
    %1378 = vmatpush2.xpose.msra.mxu0 0.0
    %1379 = vmatprep.subr.mxu0 0.0
    %1380 = vmatpush2.xpose.msra.mxu0 0.0
    %1381 = vmatprep.subr.mxu0 0.0
    %1382 = vmatpush2.xpose.msra.mxu0 0.0
    %1383 = vmatprep.subr.mxu0 0.0
    %1384 = vmatpush2.xpose.msra.mxu0 0.0
    %1385 = vmatprep.subr.mxu0 0.0
    %1386 = vmatpush2.xpose.msra.mxu0 0.0
    %1387 = vmatprep.subr.mxu0 0.0
    %1388 = vmatpush2.xpose.msra.mxu0 0.0
    %1389 = vmatprep.subr.mxu0 0.0
    %1390 = vmatpush2.xpose.msra.mxu0 0.0
    %1391 = vmatprep.subr.mxu0 0.0
    %1392 = vmatpush2.xpose.msra.mxu0 0.0
    %1393 = vmatprep.subr.mxu0 0.0
    %1394 = vmatpush2.xpose.msra.mxu0 0.0
    %1395 = vmatprep.subr.mxu0 0.0
    %1396 = vmatpush2.xpose.msra.mxu0 0.0
    %1397 = vmatprep.subr.mxu0 0.0
    %1398 = vmatpush2.xpose.msra.mxu0 0.0
    %1399 = vmatprep.subr.mxu0 0.0
    %1400 = vmatpush2.xpose.msra.mxu0 0.0
    %1401 = vmatprep.subr.mxu0 0.0
    %1402 = vmatpush2.xpose.msra.mxu0 0.0
    %1403 = vmatprep.mubr.f32.mxu0 0.0
    %1404 = vmatmul.mubr.f32.gmra.mxu0 %v1310
    %v1405 = vpop.f32.mrf.mxu0
    %v1406 = vadd.f32 0.0, %v1405
    %v1407 = vpop.f32.mrf.mxu0
    %1408 = vmatprep.mubr.f32.mxu0 0.0
    %1409 = vmatmul.mubr.f32.gmra.mxu0 %v1313
    %v1410 = vpop.f32.mrf.mxu0
    %v1411 = vadd.f32 0.0, %v1410
    %v1412 = vpop.f32.mrf.mxu0
    %1413 = vmatprep.mubr.f32.mxu0 0.0
    %1414 = vmatmul.mubr.f32.gmra.mxu0 %v1316
    %v1415 = vpop.f32.mrf.mxu0
    %v1416 = vadd.f32 0.0, %v1415
    %v1417 = vpop.f32.mrf.mxu0
    %1418 = vmatprep.mubr.f32.mxu0 0.0
    %1419 = vmatmul.mubr.f32.gmra.mxu0 %v1319
    %v1420 = vpop.f32.mrf.mxu0
    %v1421 = vadd.f32 0.0, %v1420
    %v1422 = vpop.f32.mrf.mxu0
    %1423 = vmatprep.mubr.f32.mxu0 0.0
    %1424 = vmatmul.mubr.f32.gmra.mxu0 %v1322
    %v1425 = vpop.f32.mrf.mxu0
    %v1426 = vadd.f32 0.0, %v1425
    %v1427 = vpop.f32.mrf.mxu0
    %1428 = vmatprep.mubr.f32.mxu0 0.0
    %1429 = vmatmul.mubr.f32.gmra.mxu0 %v1325
    %v1430 = vpop.f32.mrf.mxu0
    %v1431 = vadd.f32 0.0, %v1430
    %v1432 = vpop.f32.mrf.mxu0
    %1433 = vmatprep.mubr.f32.mxu0 0.0
    %1434 = vmatmul.mubr.f32.gmra.mxu0 %v1328
    %v1435 = vpop.f32.mrf.mxu0
    %v1436 = vadd.f32 0.0, %v1435
    %v1437 = vpop.f32.mrf.mxu0
    %1438 = vmatprep.mubr.f32.mxu0 0.0
    %1439 = vmatmul.mubr.f32.gmra.mxu0 %v1331
    %v1440 = vpop.f32.mrf.mxu0
    %v1441 = vadd.f32 0.0, %v1440
    %v1442 = vpop.f32.mrf.mxu0
    %1443 = vdwg.mxu0
    %v1444 = vmul.f32 %v1406, 0.35355338
    %v1445 = vmul.f32 %v1411, 0.35355338
    %v1446 = vmul.f32 %v1416, 0.35355338
    %v1447 = vmul.f32 %v1421, 0.35355338
    %v1448 = vmul.f32 %v1426, 0.35355338
    %v1449 = vmul.f32 %v1431, 0.35355338
    %v1450 = vmul.f32 %v1436, 0.35355338
    %v1451 = vmul.f32 %v1441, 0.35355338
    %v1452 = vadd.f32 %v1444, %v163
    %v1453 = vadd.f32 %v1445, %v164
    %v1454 = vadd.f32 %v1446, %v165
    %v1455 = vadd.f32 %v1447, %v166
    %v1456 = vadd.f32 %v1448, %v167
    %v1457 = vadd.f32 %v1449, %v168
    %v1458 = vadd.f32 %v1450, %v169
    %v1459 = vadd.f32 %v1451, %v170
    %v1460 = vsel %vm661, %v1452, -inf
    %1461 = vmax.xlane.f32.xlu0 %v1460
    %v1462 = vpop.xlane.xlu0 %1461
    %v1463 = vsel %vm661, %v1453, -inf
    %1464 = vmax.xlane.f32.xlu0 %v1463
    %v1465 = vpop.xlane.xlu0 %1464
    %v1466 = vsel %vm661, %v1454, -inf
    %1467 = vmax.xlane.f32.xlu0 %v1466
    %v1468 = vpop.xlane.xlu0 %1467
    %v1469 = vsel %vm661, %v1455, -inf
    %1470 = vmax.xlane.f32.xlu0 %v1469
    %v1471 = vpop.xlane.xlu0 %1470
    %v1472 = vsel %vm661, %v1456, -inf
    %1473 = vmax.xlane.f32.xlu0 %v1472
    %v1474 = vpop.xlane.xlu0 %1473
    %v1475 = vsel %vm661, %v1457, -inf
    %1476 = vmax.xlane.f32.xlu0 %v1475
    %v1477 = vpop.xlane.xlu0 %1476
    %v1478 = vsel %vm661, %v1458, -inf
    %1479 = vmax.xlane.f32.xlu0 %v1478
    %v1480 = vpop.xlane.xlu0 %1479
    %v1481 = vsel %vm661, %v1459, -inf
    %1482 = vmax.xlane.f32.xlu0 %v1481
    %v1483 = vpop.xlane.xlu0 %1482
    %v1484 = vsub.f32 %v1452, %v1462
    %v1485 = vsub.f32 %v1453, %v1465
    %v1486 = vsub.f32 %v1454, %v1468
    %v1487 = vsub.f32 %v1455, %v1471
    %v1488 = vsub.f32 %v1456, %v1474
    %v1489 = vsub.f32 %v1457, %v1477
    %v1490 = vsub.f32 %v1458, %v1480
    %v1491 = vsub.f32 %v1459, %v1483
    %v1492 = vmul.f32 %v1484, 1.442695
    %v1493 = vpow.pop %v1492
    %v1494 = vmul.f32 %v1485, 1.442695
    %v1495 = vpow.pop %v1494
    %v1496 = vmul.f32 %v1486, 1.442695
    %v1497 = vpow.pop %v1496
    %v1498 = vmul.f32 %v1487, 1.442695
    %v1499 = vpow.pop %v1498
    %v1500 = vmul.f32 %v1488, 1.442695
    %v1501 = vpow.pop %v1500
    %v1502 = vmul.f32 %v1489, 1.442695
    %v1503 = vpow.pop %v1502
    %v1504 = vmul.f32 %v1490, 1.442695
    %v1505 = vpow.pop %v1504
    %v1506 = vmul.f32 %v1491, 1.442695
    %v1507 = vpow.pop %v1506
    %v1508 = vsel %vm661, %v1493, 0.0
    %1509 = vadd.xlane.f32.xlu0 %v1508
    %v1510 = vpop.xlane.xlu0 %1509
    %v1511 = vsel %vm661, %v1495, 0.0
    %1512 = vadd.xlane.f32.xlu0 %v1511
    %v1513 = vpop.xlane.xlu0 %1512
    %v1514 = vsel %vm661, %v1497, 0.0
    %1515 = vadd.xlane.f32.xlu0 %v1514
    %v1516 = vpop.xlane.xlu0 %1515
    %v1517 = vsel %vm661, %v1499, 0.0
    %1518 = vadd.xlane.f32.xlu0 %v1517
    %v1519 = vpop.xlane.xlu0 %1518
    %v1520 = vsel %vm661, %v1501, 0.0
    %1521 = vadd.xlane.f32.xlu0 %v1520
    %v1522 = vpop.xlane.xlu0 %1521
    %v1523 = vsel %vm661, %v1503, 0.0
    %1524 = vadd.xlane.f32.xlu0 %v1523
    %v1525 = vpop.xlane.xlu0 %1524
    %v1526 = vsel %vm661, %v1505, 0.0
    %1527 = vadd.xlane.f32.xlu0 %v1526
    %v1528 = vpop.xlane.xlu0 %1527
    %v1529 = vsel %vm661, %v1507, 0.0
    %1530 = vadd.xlane.f32.xlu0 %v1529
    %v1531 = vpop.xlane.xlu0 %1530
    %v1532 = vrcp.pop %v1510
    %v1533 = vrcp.pop %v1513
    %v1534 = vrcp.pop %v1516
    %v1535 = vrcp.pop %v1519
    %v1536 = vrcp.pop %v1522
    %v1537 = vrcp.pop %v1525
    %v1538 = vrcp.pop %v1528
    %v1539 = vrcp.pop %v1531
    %v1540 = vmul.f32 %v1493, %v1532
    %v1541 = vmul.f32 %v1495, %v1533
    %v1542 = vmul.f32 %v1497, %v1534
    %v1543 = vmul.f32 %v1499, %v1535
    %v1544 = vmul.f32 %v1501, %v1536
    %v1545 = vmul.f32 %v1503, %v1537
    %v1546 = vmul.f32 %v1505, %v1538
    %v1547 = vmul.f32 %v1507, %v1539
    %v1549 = vsel %vm661, %v1540, 0
    %v1552 = vsel %vm661, %v1541, 0
    %v1555 = vsel %vm661, %v1542, 0
    %v1558 = vsel %vm661, %v1543, 0
    %v1561 = vsel %vm661, %v1544, 0
    %v1564 = vsel %vm661, %v1545, 0
    %v1567 = vsel %vm661, %v1546, 0
    %v1570 = vsel %vm661, %v1547, 0
    %1572 = vmatprep.subr.mxu0 0.0
    %1573 = vmatpush1.msra.mxu0 0.0
    %1574 = vmatprep.subr.mxu0 0.0
    %1575 = vmatpush1.msra.mxu0 0.0
    %1576 = vmatprep.subr.mxu0 0.0
    %1577 = vmatpush1.msra.mxu0 0.0
    %1578 = vmatprep.subr.mxu0 0.0
    %1579 = vmatpush1.msra.mxu0 0.0
    %1580 = vmatprep.subr.mxu0 0.0
    %1581 = vmatpush1.msra.mxu0 0.0
    %1582 = vmatprep.subr.mxu0 0.0
    %1583 = vmatpush1.msra.mxu0 0.0
    %1584 = vmatprep.subr.mxu0 0.0
    %1585 = vmatpush1.msra.mxu0 0.0
    %1586 = vmatprep.subr.mxu0 0.0
    %1587 = vmatpush1.msra.mxu0 0.0
    %1588 = vmatprep.subr.mxu0 0.0
    %1589 = vmatpush1.msra.mxu0 0.0
    %1590 = vmatprep.subr.mxu0 0.0
    %1591 = vmatpush1.msra.mxu0 0.0
    %1592 = vmatprep.subr.mxu0 0.0
    %1593 = vmatpush1.msra.mxu0 0.0
    %1594 = vmatprep.subr.mxu0 0.0
    %1595 = vmatpush1.msra.mxu0 0.0
    %1596 = vmatprep.subr.mxu0 0.0
    %1597 = vmatpush1.msra.mxu0 0.0
    %1598 = vmatprep.subr.mxu0 0.0
    %1599 = vmatpush1.msra.mxu0 0.0
    %1600 = vmatprep.subr.mxu0 0.0
    %1601 = vmatpush1.msra.mxu0 %v1298
    %1602 = vmatprep.subr.mxu0 0.0
    %1603 = vmatpush1.msra.mxu0 %v1293
    %1604 = vmatprep.subr.mxu0 0.0
    %1605 = vmatpush2.msra.mxu0 0.0
    %1606 = vmatprep.subr.mxu0 0.0
    %1607 = vmatpush2.msra.mxu0 0.0
    %1608 = vmatprep.subr.mxu0 0.0
    %1609 = vmatpush2.msra.mxu0 0.0
    %1610 = vmatprep.subr.mxu0 0.0
    %1611 = vmatpush2.msra.mxu0 0.0
    %1612 = vmatprep.subr.mxu0 0.0
    %1613 = vmatpush2.msra.mxu0 0.0
    %1614 = vmatprep.subr.mxu0 0.0
    %1615 = vmatpush2.msra.mxu0 0.0
    %1616 = vmatprep.subr.mxu0 0.0
    %1617 = vmatpush2.msra.mxu0 0.0
    %1618 = vmatprep.subr.mxu0 0.0
    %1619 = vmatpush2.msra.mxu0 0.0
    %1620 = vmatprep.subr.mxu0 0.0
    %1621 = vmatpush2.msra.mxu0 0.0
    %1622 = vmatprep.subr.mxu0 0.0
    %1623 = vmatpush2.msra.mxu0 0.0
    %1624 = vmatprep.subr.mxu0 0.0
    %1625 = vmatpush2.msra.mxu0 0.0
    %1626 = vmatprep.subr.mxu0 0.0
    %1627 = vmatpush2.msra.mxu0 0.0
    %1628 = vmatprep.subr.mxu0 0.0
    %1629 = vmatpush2.msra.mxu0 0.0
    %1630 = vmatprep.subr.mxu0 0.0
    %1631 = vmatpush2.msra.mxu0 0.0
    %1632 = vmatprep.subr.mxu0 0.0
    %1633 = vmatpush2.msra.mxu0 0.0
    %1634 = vmatprep.subr.mxu0 0.0
    %1635 = vmatpush2.msra.mxu0 0.0
    %1636 = vmatprep.mubr.f32.mxu0 0.0
    %1637 = vmatmul.mubr.f32.gmra.mxu0 %v1549
    %v1638 = vpop.f32.mrf.mxu0
    %v1639 = vadd.f32 0.0, %v1638
    %v1640 = vpop.f32.mrf.mxu0
    %1641 = vmatprep.mubr.f32.mxu0 0.0
    %1642 = vmatmul.mubr.f32.gmra.mxu0 %v1552
    %v1643 = vpop.f32.mrf.mxu0
    %v1644 = vadd.f32 0.0, %v1643
    %v1645 = vpop.f32.mrf.mxu0
    %1646 = vmatprep.mubr.f32.mxu0 0.0
    %1647 = vmatmul.mubr.f32.gmra.mxu0 %v1555
    %v1648 = vpop.f32.mrf.mxu0
    %v1649 = vadd.f32 0.0, %v1648
    %v1650 = vpop.f32.mrf.mxu0
    %1651 = vmatprep.mubr.f32.mxu0 0.0
    %1652 = vmatmul.mubr.f32.gmra.mxu0 %v1558
    %v1653 = vpop.f32.mrf.mxu0
    %v1654 = vadd.f32 0.0, %v1653
    %v1655 = vpop.f32.mrf.mxu0
    %1656 = vmatprep.mubr.f32.mxu0 0.0
    %1657 = vmatmul.mubr.f32.gmra.mxu0 %v1561
    %v1658 = vpop.f32.mrf.mxu0
    %v1659 = vadd.f32 0.0, %v1658
    %v1660 = vpop.f32.mrf.mxu0
    %1661 = vmatprep.mubr.f32.mxu0 0.0
    %1662 = vmatmul.mubr.f32.gmra.mxu0 %v1564
    %v1663 = vpop.f32.mrf.mxu0
    %v1664 = vadd.f32 0.0, %v1663
    %v1665 = vpop.f32.mrf.mxu0
    %1666 = vmatprep.mubr.f32.mxu0 0.0
    %1667 = vmatmul.mubr.f32.gmra.mxu0 %v1567
    %v1668 = vpop.f32.mrf.mxu0
    %v1669 = vadd.f32 0.0, %v1668
    %v1670 = vpop.f32.mrf.mxu0
    %1671 = vmatprep.mubr.f32.mxu0 0.0
    %1672 = vmatmul.mubr.f32.gmra.mxu0 %v1570
    %v1673 = vpop.f32.mrf.mxu0
    %v1674 = vadd.f32 0.0, %v1673
    %v1675 = vpop.f32.mrf.mxu0
    %1676 = vdwg.mxu0
    %v1677 = vmul.f32 %v1639, %v179
    %v1678 = vmul.f32 %v1644, %v180
    %v1679 = vmul.f32 %v1649, %v181
    %v1680 = vmul.f32 %v1654, %v182
    %v1681 = vmul.f32 %v1659, %v183
    %v1682 = vmul.f32 %v1664, %v184
    %v1683 = vmul.f32 %v1669, %v185
    %v1684 = vmul.f32 %v1674, %v186
    %v1685 = vadd.f32 %v1677, %v1679
    %v1686 = vadd.f32 %v1678, %v1680
    %v1687 = vadd.f32 %v1685, %v1681
    %v1688 = vadd.f32 %v1686, %v1682
    %v1689 = vadd.f32 %v1687, %v1683
    %v1690 = vadd.f32 %v1688, %v1684
    %v1692 = vlaneseq
    %v1693 = vshrl.u32 %v1692, 7
    %v1694 = vsub.s32 0, %v1693
    %v1695 = vrot.slane %v1045, %v1694
    %v1698 = vsel %vm189, %v1689, 0
    %v1701 = vsel %vm189, %v1690, 0
    %1703 = vmatprep.subr.mxu0 0.0
    %1704 = vmatpush1.msra.mxu0 0.0
    %1705 = vmatprep.subr.mxu0 0.0
    %1706 = vmatpush1.msra.mxu0 0.0
    %1707 = vmatprep.subr.mxu0 0.0
    %1708 = vmatpush1.msra.mxu0 0.0
    %1709 = vmatprep.subr.mxu0 0.0
    %1710 = vmatpush1.msra.mxu0 0.0
    %1711 = vmatprep.subr.mxu0 0.0
    %1712 = vmatpush1.msra.mxu0 0.0
    %1713 = vmatprep.subr.mxu0 0.0
    %1714 = vmatpush1.msra.mxu0 0.0
    %1715 = vmatprep.subr.mxu0 0.0
    %1716 = vmatpush1.msra.mxu0 0.0
    %1717 = vmatprep.subr.mxu0 0.0
    %1718 = vmatpush1.msra.mxu0 0.0
    %1719 = vmatprep.subr.mxu0 0.0
    %1720 = vmatpush1.msra.mxu0 0.0
    %1721 = vmatprep.subr.mxu0 0.0
    %1722 = vmatpush1.msra.mxu0 0.0
    %1723 = vmatprep.subr.mxu0 0.0
    %1724 = vmatpush1.msra.mxu0 0.0
    %1725 = vmatprep.subr.mxu0 0.0
    %1726 = vmatpush1.msra.mxu0 0.0
    %1727 = vmatprep.subr.mxu0 0.0
    %1728 = vmatpush1.msra.mxu0 %v1044
    %1729 = vmatprep.subr.mxu0 0.0
    %1730 = vmatpush1.msra.mxu0 %v1043
    %1731 = vmatprep.subr.mxu0 0.0
    %1732 = vmatpush1.msra.mxu0 %v1042
    %1733 = vmatprep.subr.mxu0 0.0
    %1734 = vmatpush1.msra.mxu0 %v1041
    %1735 = vmatprep.subr.mxu0 0.0
    %1736 = vmatpush2.msra.mxu0 0.0
    %1737 = vmatprep.subr.mxu0 0.0
    %1738 = vmatpush2.msra.mxu0 0.0
    %1739 = vmatprep.subr.mxu0 0.0
    %1740 = vmatpush2.msra.mxu0 0.0
    %1741 = vmatprep.subr.mxu0 0.0
    %1742 = vmatpush2.msra.mxu0 0.0
    %1743 = vmatprep.subr.mxu0 0.0
    %1744 = vmatpush2.msra.mxu0 0.0
    %1745 = vmatprep.subr.mxu0 0.0
    %1746 = vmatpush2.msra.mxu0 0.0
    %1747 = vmatprep.subr.mxu0 0.0
    %1748 = vmatpush2.msra.mxu0 0.0
    %1749 = vmatprep.subr.mxu0 0.0
    %1750 = vmatpush2.msra.mxu0 0.0
    %1751 = vmatprep.subr.mxu0 0.0
    %1752 = vmatpush2.msra.mxu0 0.0
    %1753 = vmatprep.subr.mxu0 0.0
    %1754 = vmatpush2.msra.mxu0 0.0
    %1755 = vmatprep.subr.mxu0 0.0
    %1756 = vmatpush2.msra.mxu0 0.0
    %1757 = vmatprep.subr.mxu0 0.0
    %1758 = vmatpush2.msra.mxu0 0.0
    %1759 = vmatprep.subr.mxu0 0.0
    %1760 = vmatpush2.msra.mxu0 0.0
    %1761 = vmatprep.subr.mxu0 0.0
    %1762 = vmatpush2.msra.mxu0 0.0
    %1763 = vmatprep.subr.mxu0 0.0
    %1764 = vmatpush2.msra.mxu0 0.0
    %1765 = vmatprep.subr.mxu0 0.0
    %1766 = vmatpush2.msra.mxu0 0.0
    %1767 = vmatprep.mubr.f32.mxu0 0.0
    %1768 = vmatmul.mubr.f32.gmra.mxu0 %v1698
    %v1769 = vpop.f32.mrf.mxu0
    %v1770 = vadd.f32 %v1695, %v1769
    %v1771 = vpop.f32.mrf.mxu0
    %1772 = vmatprep.mubr.f32.mxu0 0.0
    %1773 = vmatmul.mubr.f32.gmra.mxu0 %v1701
    %v1774 = vpop.f32.mrf.mxu0
    %v1775 = vadd.f32 %v1695, %v1774
    %v1776 = vpop.f32.mrf.mxu0
    %1777 = vdwg.mxu0
    %v1778 = vadd.f32 %v980, %v1770
    %v1779 = vadd.f32 %v981, %v1775
    %v1780 = vld [vmem:[%s53] sm:$0x1]
    %v1781 = vld [vmem:[%s55] sm:$0x1]
    %v1782 = vsel %vm189, %v1778, 0.0
    %1783 = vadd.xlane.f32.xlu0 %v1782
    %v1784 = vpop.xlane.xlu0 %1783
    %v1785 = vsel %vm189, %v1779, 0.0
    %1786 = vadd.xlane.f32.xlu0 %v1785
    %v1787 = vpop.xlane.xlu0 %1786
    %v1788 = vmul.f32 %v1784, %v196
    %v1789 = vmul.f32 %v1787, %v196
    %v1790 = vsub.f32 %v1778, %v1788
    %v1791 = vsub.f32 %v1779, %v1789
    %v1792 = vmul.f32 %v1790, %v1790
    %v1793 = vmul.f32 %v1791, %v1791
    %v1794 = vsel %vm189, %v1792, 0.0
    %1795 = vadd.xlane.f32.xlu0 %v1794
    %v1796 = vpop.xlane.xlu0 %1795
    %v1797 = vsel %vm189, %v1793, 0.0
    %1798 = vadd.xlane.f32.xlu0 %v1797
    %v1799 = vpop.xlane.xlu0 %1798
    %v1800 = vmul.f32 %v1796, %v196
    %v1801 = vmul.f32 %v1799, %v196
    %v1802 = vadd.f32 %v1800, 1e-05
    %v1803 = vadd.f32 %v1801, 1e-05
    %v1804 = vrsqrt.pop %v1802
    %v1805 = vrsqrt.pop %v1803
    %v1806 = vmul.f32 %v1790, %v1804
    %v1807 = vmul.f32 %v1791, %v1805
    %v1809 = vlaneseq
    %v1810 = vshrl.u32 %v1809, 7
    %v1811 = vsub.s32 0, %v1810
    %v1812 = vrot.slane %v1780, %v1811
    %v1814 = vmul.f32 %v1806, %v1812
    %v1815 = vmul.f32 %v1807, %v1812
    %v1817 = vlaneseq
    %v1818 = vshrl.u32 %v1817, 7
    %v1819 = vsub.s32 0, %v1818
    %v1820 = vrot.slane %v1781, %v1819
    %v1822 = vadd.f32 %v1814, %v1820
    %v1823 = vadd.f32 %v1815, %v1820
    %v1824 = vld [vmem:[%s57] sm:$0xff]
    %v1825 = vld [vmem:[%s57 + $0x8] sm:$0xff]
    %v1826 = vld [vmem:[%s57 + $0x10] sm:$0xff]
    %v1827 = vld [vmem:[%s57 + $0x18] sm:$0xff]
    %v1828 = vld [vmem:[%s59] sm:$0x1]
    %v1830 = vlaneseq
    %v1831 = vshrl.u32 %v1830, 7
    %v1832 = vsub.s32 0, %v1831
    %v1833 = vrot.slane %v1828, %v1832
    %v1836 = vsel %vm189, %v1822, 0
    %v1839 = vsel %vm189, %v1823, 0
    %1841 = vmatprep.subr.mxu0 0.0
    %1842 = vmatpush1.msra.mxu0 0.0
    %1843 = vmatprep.subr.mxu0 0.0
    %1844 = vmatpush1.msra.mxu0 0.0
    %1845 = vmatprep.subr.mxu0 0.0
    %1846 = vmatpush1.msra.mxu0 0.0
    %1847 = vmatprep.subr.mxu0 0.0
    %1848 = vmatpush1.msra.mxu0 0.0
    %1849 = vmatprep.subr.mxu0 0.0
    %1850 = vmatpush1.msra.mxu0 0.0
    %1851 = vmatprep.subr.mxu0 0.0
    %1852 = vmatpush1.msra.mxu0 0.0
    %1853 = vmatprep.subr.mxu0 0.0
    %1854 = vmatpush1.msra.mxu0 0.0
    %1855 = vmatprep.subr.mxu0 0.0
    %1856 = vmatpush1.msra.mxu0 0.0
    %1857 = vmatprep.subr.mxu0 0.0
    %1858 = vmatpush1.msra.mxu0 0.0
    %1859 = vmatprep.subr.mxu0 0.0
    %1860 = vmatpush1.msra.mxu0 0.0
    %1861 = vmatprep.subr.mxu0 0.0
    %1862 = vmatpush1.msra.mxu0 0.0
    %1863 = vmatprep.subr.mxu0 0.0
    %1864 = vmatpush1.msra.mxu0 0.0
    %1865 = vmatprep.subr.mxu0 0.0
    %1866 = vmatpush1.msra.mxu0 %v1827
    %1867 = vmatprep.subr.mxu0 0.0
    %1868 = vmatpush1.msra.mxu0 %v1826
    %1869 = vmatprep.subr.mxu0 0.0
    %1870 = vmatpush1.msra.mxu0 %v1825
    %1871 = vmatprep.subr.mxu0 0.0
    %1872 = vmatpush1.msra.mxu0 %v1824
    %1873 = vmatprep.subr.mxu0 0.0
    %1874 = vmatpush2.msra.mxu0 0.0
    %1875 = vmatprep.subr.mxu0 0.0
    %1876 = vmatpush2.msra.mxu0 0.0
    %1877 = vmatprep.subr.mxu0 0.0
    %1878 = vmatpush2.msra.mxu0 0.0
    %1879 = vmatprep.subr.mxu0 0.0
    %1880 = vmatpush2.msra.mxu0 0.0
    %1881 = vmatprep.subr.mxu0 0.0
    %1882 = vmatpush2.msra.mxu0 0.0
    %1883 = vmatprep.subr.mxu0 0.0
    %1884 = vmatpush2.msra.mxu0 0.0
    %1885 = vmatprep.subr.mxu0 0.0
    %1886 = vmatpush2.msra.mxu0 0.0
    %1887 = vmatprep.subr.mxu0 0.0
    %1888 = vmatpush2.msra.mxu0 0.0
    %1889 = vmatprep.subr.mxu0 0.0
    %1890 = vmatpush2.msra.mxu0 0.0
    %1891 = vmatprep.subr.mxu0 0.0
    %1892 = vmatpush2.msra.mxu0 0.0
    %1893 = vmatprep.subr.mxu0 0.0
    %1894 = vmatpush2.msra.mxu0 0.0
    %1895 = vmatprep.subr.mxu0 0.0
    %1896 = vmatpush2.msra.mxu0 0.0
    %1897 = vmatprep.subr.mxu0 0.0
    %1898 = vmatpush2.msra.mxu0 0.0
    %1899 = vmatprep.subr.mxu0 0.0
    %1900 = vmatpush2.msra.mxu0 0.0
    %1901 = vmatprep.subr.mxu0 0.0
    %1902 = vmatpush2.msra.mxu0 0.0
    %1903 = vmatprep.subr.mxu0 0.0
    %1904 = vmatpush2.msra.mxu0 0.0
    %1905 = vmatprep.mubr.f32.mxu0 0.0
    %1906 = vmatmul.mubr.f32.gmra.mxu0 %v1836
    %v1907 = vpop.f32.mrf.mxu0
    %v1908 = vadd.f32 %v1833, %v1907
    %v1909 = vpop.f32.mrf.mxu0
    %1910 = vmatprep.mubr.f32.mxu0 0.0
    %1911 = vmatmul.mubr.f32.gmra.mxu0 %v1839
    %v1912 = vpop.f32.mrf.mxu0
    %v1913 = vadd.f32 %v1833, %v1912
    %v1914 = vpop.f32.mrf.mxu0
    %1915 = vdwg.mxu0
    %v1916 = vmax.f32 %v1908, 0.0
    %v1917 = vmax.f32 %v1913, 0.0
    %v1918 = vld [vmem:[%s61] sm:$0xff]
    %v1919 = vld [vmem:[%s61 + $0x8] sm:$0xff]
    %v1920 = vld [vmem:[%s61 + $0x10] sm:$0xff]
    %v1921 = vld [vmem:[%s61 + $0x18] sm:$0xff]
    %v1922 = vld [vmem:[%s61 + $0x20] sm:$0xff]
    %v1923 = vld [vmem:[%s61 + $0x28] sm:$0xff]
    %v1924 = vld [vmem:[%s61 + $0x30] sm:$0xff]
    %v1925 = vld [vmem:[%s61 + $0x38] sm:$0xff]
    %vm1926 = vcmask 523264
    %v1928 = vsel %vm1926, %v1916, 0
    %v1931 = vsel %vm1926, %v1917, 0
    %1933 = vmatprep.subr.mxu0 0.0
    %1934 = vmatpush1.msra.mxu0 0.0
    %1935 = vmatprep.subr.mxu0 0.0
    %1936 = vmatpush1.msra.mxu0 0.0
    %1937 = vmatprep.subr.mxu0 0.0
    %1938 = vmatpush1.msra.mxu0 0.0
    %1939 = vmatprep.subr.mxu0 0.0
    %1940 = vmatpush1.msra.mxu0 0.0
    %1941 = vmatprep.subr.mxu0 0.0
    %1942 = vmatpush1.msra.mxu0 0.0
    %1943 = vmatprep.subr.mxu0 0.0
    %1944 = vmatpush1.msra.mxu0 0.0
    %1945 = vmatprep.subr.mxu0 0.0
    %1946 = vmatpush1.msra.mxu0 0.0
    %1947 = vmatprep.subr.mxu0 0.0
    %1948 = vmatpush1.msra.mxu0 0.0
    %1949 = vmatprep.subr.mxu0 0.0
    %1950 = vmatpush1.msra.mxu0 %v1925
    %1951 = vmatprep.subr.mxu0 0.0
    %1952 = vmatpush1.msra.mxu0 %v1924
    %1953 = vmatprep.subr.mxu0 0.0
    %1954 = vmatpush1.msra.mxu0 %v1923
    %1955 = vmatprep.subr.mxu0 0.0
    %1956 = vmatpush1.msra.mxu0 %v1922
    %1957 = vmatprep.subr.mxu0 0.0
    %1958 = vmatpush1.msra.mxu0 %v1921
    %1959 = vmatprep.subr.mxu0 0.0
    %1960 = vmatpush1.msra.mxu0 %v1920
    %1961 = vmatprep.subr.mxu0 0.0
    %1962 = vmatpush1.msra.mxu0 %v1919
    %1963 = vmatprep.subr.mxu0 0.0
    %1964 = vmatpush1.msra.mxu0 %v1918
    %1965 = vmatprep.subr.mxu0 0.0
    %1966 = vmatpush2.msra.mxu0 0.0
    %1967 = vmatprep.subr.mxu0 0.0
    %1968 = vmatpush2.msra.mxu0 0.0
    %1969 = vmatprep.subr.mxu0 0.0
    %1970 = vmatpush2.msra.mxu0 0.0
    %1971 = vmatprep.subr.mxu0 0.0
    %1972 = vmatpush2.msra.mxu0 0.0
    %1973 = vmatprep.subr.mxu0 0.0
    %1974 = vmatpush2.msra.mxu0 0.0
    %1975 = vmatprep.subr.mxu0 0.0
    %1976 = vmatpush2.msra.mxu0 0.0
    %1977 = vmatprep.subr.mxu0 0.0
    %1978 = vmatpush2.msra.mxu0 0.0
    %1979 = vmatprep.subr.mxu0 0.0
    %1980 = vmatpush2.msra.mxu0 0.0
    %1981 = vmatprep.subr.mxu0 0.0
    %1982 = vmatpush2.msra.mxu0 0.0
    %1983 = vmatprep.subr.mxu0 0.0
    %1984 = vmatpush2.msra.mxu0 0.0
    %1985 = vmatprep.subr.mxu0 0.0
    %1986 = vmatpush2.msra.mxu0 0.0
    %1987 = vmatprep.subr.mxu0 0.0
    %1988 = vmatpush2.msra.mxu0 0.0
    %1989 = vmatprep.subr.mxu0 0.0
    %1990 = vmatpush2.msra.mxu0 0.0
    %1991 = vmatprep.subr.mxu0 0.0
    %1992 = vmatpush2.msra.mxu0 0.0
    %1993 = vmatprep.subr.mxu0 0.0
    %1994 = vmatpush2.msra.mxu0 0.0
    %1995 = vmatprep.subr.mxu0 0.0
    %1996 = vmatpush2.msra.mxu0 0.0
    %1997 = vmatprep.mubr.f32.mxu0 0.0
    %1998 = vmatmul.mubr.f32.gmra.mxu0 %v1928
    %v1999 = vpop.f32.mrf.mxu0
    %v2000 = vadd.f32 0.0, %v1999
    %v2001 = vpop.f32.mrf.mxu0
    %2002 = vmatprep.mubr.f32.mxu0 0.0
    %2003 = vmatmul.mubr.f32.gmra.mxu0 %v1931
    %v2004 = vpop.f32.mrf.mxu0
    %v2005 = vadd.f32 0.0, %v2004
    %v2006 = vpop.f32.mrf.mxu0
    %2007 = vdwg.mxu0
    %v2008 = vadd.f32 %v1778, %v2000
    %v2009 = vadd.f32 %v1779, %v2005
    %v2010 = vld [vmem:[%s63] sm:$0x1]
    %v2012 = vlaneseq
    %v2013 = vshrl.u32 %v2012, 7
    %v2014 = vsub.s32 0, %v2013
    %v2015 = vrot.slane %v2010, %v2014
    %v2017 = vadd.f32 %v2008, %v2015
    %v2018 = vadd.f32 %v2009, %v2015
    %s2019 = scalar_lea.vmem %s13, 1
    %v2020 = vld [vmem:[%s2019] sm:$0x1]
    %s2021 = scalar_lea.vmem %s15, 1
    %v2022 = vld [vmem:[%s2021] sm:$0x1]
    %v2023 = vsel %vm189, %v2017, 0.0
    %2024 = vadd.xlane.f32.xlu0 %v2023
    %v2025 = vpop.xlane.xlu0 %2024
    %v2026 = vsel %vm189, %v2018, 0.0
    %2027 = vadd.xlane.f32.xlu0 %v2026
    %v2028 = vpop.xlane.xlu0 %2027
    %v2029 = vmul.f32 %v2025, %v196
    %v2030 = vmul.f32 %v2028, %v196
    %v2031 = vsub.f32 %v2017, %v2029
    %v2032 = vsub.f32 %v2018, %v2030
    %v2033 = vmul.f32 %v2031, %v2031
    %v2034 = vmul.f32 %v2032, %v2032
    %v2035 = vsel %vm189, %v2033, 0.0
    %2036 = vadd.xlane.f32.xlu0 %v2035
    %v2037 = vpop.xlane.xlu0 %2036
    %v2038 = vsel %vm189, %v2034, 0.0
    %2039 = vadd.xlane.f32.xlu0 %v2038
    %v2040 = vpop.xlane.xlu0 %2039
    %v2041 = vmul.f32 %v2037, %v196
    %v2042 = vmul.f32 %v2040, %v196
    %v2043 = vadd.f32 %v2041, 1e-05
    %v2044 = vadd.f32 %v2042, 1e-05
    %v2045 = vrsqrt.pop %v2043
    %v2046 = vrsqrt.pop %v2044
    %v2047 = vmul.f32 %v2031, %v2045
    %v2048 = vmul.f32 %v2032, %v2046
    %v2050 = vlaneseq
    %v2051 = vshrl.u32 %v2050, 7
    %v2052 = vsub.s32 0, %v2051
    %v2053 = vrot.slane %v2020, %v2052
    %v2055 = vmul.f32 %v2047, %v2053
    %v2056 = vmul.f32 %v2048, %v2053
    %v2058 = vlaneseq
    %v2059 = vshrl.u32 %v2058, 7
    %v2060 = vsub.s32 0, %v2059
    %v2061 = vrot.slane %v2022, %v2060
    %v2063 = vadd.f32 %v2055, %v2061
    %v2064 = vadd.f32 %v2056, %v2061
    %s2065 = scalar_lea.vmem %s17, 32
    %v2066 = vld [vmem:[%s2065] sm:$0xff]
    %v2067 = vld [vmem:[%s2065 + $0x8] sm:$0xff]
    %v2068 = vld [vmem:[%s2065 + $0x10] sm:$0xff]
    %v2069 = vld [vmem:[%s2065 + $0x18] sm:$0xff]
    %s2070 = scalar_lea.vmem %s19, 1
    %v2071 = vld [vmem:[%s2070] sm:$0x1]
    %s2072 = scalar_lea.vmem %s21, 32
    %v2073 = vld [vmem:[%s2072] sm:$0xff]
    %v2074 = vld [vmem:[%s2072 + $0x8] sm:$0xff]
    %v2075 = vld [vmem:[%s2072 + $0x10] sm:$0xff]
    %v2076 = vld [vmem:[%s2072 + $0x18] sm:$0xff]
    %s2077 = scalar_lea.vmem %s23, 1
    %v2078 = vld [vmem:[%s2077] sm:$0x1]
    %s2079 = scalar_lea.vmem %s25, 32
    %v2080 = vld [vmem:[%s2079] sm:$0xff]
    %v2081 = vld [vmem:[%s2079 + $0x8] sm:$0xff]
    %v2082 = vld [vmem:[%s2079 + $0x10] sm:$0xff]
    %v2083 = vld [vmem:[%s2079 + $0x18] sm:$0xff]
    %s2084 = scalar_lea.vmem %s27, 1
    %v2085 = vld [vmem:[%s2084] sm:$0x1]
    %s2086 = scalar_lea.vmem %s29, 32
    %v2087 = vld [vmem:[%s2086] sm:$0xff]
    %v2088 = vld [vmem:[%s2086 + $0x8] sm:$0xff]
    %v2089 = vld [vmem:[%s2086 + $0x10] sm:$0xff]
    %v2090 = vld [vmem:[%s2086 + $0x18] sm:$0xff]
    %s2091 = scalar_lea.vmem %s31, 1
    %v2092 = vld [vmem:[%s2091] sm:$0x1]
    %v2094 = vlaneseq
    %v2095 = vshrl.u32 %v2094, 7
    %v2096 = vsub.s32 0, %v2095
    %v2097 = vrot.slane %v2071, %v2096
    %v2100 = vsel %vm189, %v2063, 0
    %v2103 = vsel %vm189, %v2064, 0
    %2105 = vmatprep.subr.mxu0 0.0
    %2106 = vmatpush1.msra.mxu0 0.0
    %2107 = vmatprep.subr.mxu0 0.0
    %2108 = vmatpush1.msra.mxu0 0.0
    %2109 = vmatprep.subr.mxu0 0.0
    %2110 = vmatpush1.msra.mxu0 0.0
    %2111 = vmatprep.subr.mxu0 0.0
    %2112 = vmatpush1.msra.mxu0 0.0
    %2113 = vmatprep.subr.mxu0 0.0
    %2114 = vmatpush1.msra.mxu0 0.0
    %2115 = vmatprep.subr.mxu0 0.0
    %2116 = vmatpush1.msra.mxu0 0.0
    %2117 = vmatprep.subr.mxu0 0.0
    %2118 = vmatpush1.msra.mxu0 0.0
    %2119 = vmatprep.subr.mxu0 0.0
    %2120 = vmatpush1.msra.mxu0 0.0
    %2121 = vmatprep.subr.mxu0 0.0
    %2122 = vmatpush1.msra.mxu0 0.0
    %2123 = vmatprep.subr.mxu0 0.0
    %2124 = vmatpush1.msra.mxu0 0.0
    %2125 = vmatprep.subr.mxu0 0.0
    %2126 = vmatpush1.msra.mxu0 0.0
    %2127 = vmatprep.subr.mxu0 0.0
    %2128 = vmatpush1.msra.mxu0 0.0
    %2129 = vmatprep.subr.mxu0 0.0
    %2130 = vmatpush1.msra.mxu0 %v2069
    %2131 = vmatprep.subr.mxu0 0.0
    %2132 = vmatpush1.msra.mxu0 %v2068
    %2133 = vmatprep.subr.mxu0 0.0
    %2134 = vmatpush1.msra.mxu0 %v2067
    %2135 = vmatprep.subr.mxu0 0.0
    %2136 = vmatpush1.msra.mxu0 %v2066
    %2137 = vmatprep.subr.mxu0 0.0
    %2138 = vmatpush2.msra.mxu0 0.0
    %2139 = vmatprep.subr.mxu0 0.0
    %2140 = vmatpush2.msra.mxu0 0.0
    %2141 = vmatprep.subr.mxu0 0.0
    %2142 = vmatpush2.msra.mxu0 0.0
    %2143 = vmatprep.subr.mxu0 0.0
    %2144 = vmatpush2.msra.mxu0 0.0
    %2145 = vmatprep.subr.mxu0 0.0
    %2146 = vmatpush2.msra.mxu0 0.0
    %2147 = vmatprep.subr.mxu0 0.0
    %2148 = vmatpush2.msra.mxu0 0.0
    %2149 = vmatprep.subr.mxu0 0.0
    %2150 = vmatpush2.msra.mxu0 0.0
    %2151 = vmatprep.subr.mxu0 0.0
    %2152 = vmatpush2.msra.mxu0 0.0
    %2153 = vmatprep.subr.mxu0 0.0
    %2154 = vmatpush2.msra.mxu0 0.0
    %2155 = vmatprep.subr.mxu0 0.0
    %2156 = vmatpush2.msra.mxu0 0.0
    %2157 = vmatprep.subr.mxu0 0.0
    %2158 = vmatpush2.msra.mxu0 0.0
    %2159 = vmatprep.subr.mxu0 0.0
    %2160 = vmatpush2.msra.mxu0 0.0
    %2161 = vmatprep.subr.mxu0 0.0
    %2162 = vmatpush2.msra.mxu0 0.0
    %2163 = vmatprep.subr.mxu0 0.0
    %2164 = vmatpush2.msra.mxu0 0.0
    %2165 = vmatprep.subr.mxu0 0.0
    %2166 = vmatpush2.msra.mxu0 0.0
    %2167 = vmatprep.subr.mxu0 0.0
    %2168 = vmatpush2.msra.mxu0 0.0
    %2169 = vmatprep.mubr.f32.mxu0 0.0
    %2170 = vmatmul.mubr.f32.gmra.mxu0 %v2100
    %v2171 = vpop.f32.mrf.mxu0
    %v2172 = vadd.f32 %v2097, %v2171
    %v2173 = vpop.f32.mrf.mxu0
    %2174 = vmatprep.mubr.f32.mxu0 0.0
    %2175 = vmatmul.mubr.f32.gmra.mxu0 %v2103
    %v2176 = vpop.f32.mrf.mxu0
    %v2177 = vadd.f32 %v2097, %v2176
    %v2178 = vpop.f32.mrf.mxu0
    %2179 = vdwg.mxu0
    %v2181 = vlaneseq
    %v2182 = vshrl.u32 %v2181, 7
    %v2183 = vsub.s32 0, %v2182
    %v2184 = vrot.slane %v2078, %v2183
    %2186 = vmatprep.subr.mxu0 0.0
    %2187 = vmatpush1.msra.mxu0 0.0
    %2188 = vmatprep.subr.mxu0 0.0
    %2189 = vmatpush1.msra.mxu0 0.0
    %2190 = vmatprep.subr.mxu0 0.0
    %2191 = vmatpush1.msra.mxu0 0.0
    %2192 = vmatprep.subr.mxu0 0.0
    %2193 = vmatpush1.msra.mxu0 0.0
    %2194 = vmatprep.subr.mxu0 0.0
    %2195 = vmatpush1.msra.mxu0 0.0
    %2196 = vmatprep.subr.mxu0 0.0
    %2197 = vmatpush1.msra.mxu0 0.0
    %2198 = vmatprep.subr.mxu0 0.0
    %2199 = vmatpush1.msra.mxu0 0.0
    %2200 = vmatprep.subr.mxu0 0.0
    %2201 = vmatpush1.msra.mxu0 0.0
    %2202 = vmatprep.subr.mxu0 0.0
    %2203 = vmatpush1.msra.mxu0 0.0
    %2204 = vmatprep.subr.mxu0 0.0
    %2205 = vmatpush1.msra.mxu0 0.0
    %2206 = vmatprep.subr.mxu0 0.0
    %2207 = vmatpush1.msra.mxu0 0.0
    %2208 = vmatprep.subr.mxu0 0.0
    %2209 = vmatpush1.msra.mxu0 0.0
    %2210 = vmatprep.subr.mxu0 0.0
    %2211 = vmatpush1.msra.mxu0 %v2076
    %2212 = vmatprep.subr.mxu0 0.0
    %2213 = vmatpush1.msra.mxu0 %v2075
    %2214 = vmatprep.subr.mxu0 0.0
    %2215 = vmatpush1.msra.mxu0 %v2074
    %2216 = vmatprep.subr.mxu0 0.0
    %2217 = vmatpush1.msra.mxu0 %v2073
    %2218 = vmatprep.subr.mxu0 0.0
    %2219 = vmatpush2.msra.mxu0 0.0
    %2220 = vmatprep.subr.mxu0 0.0
    %2221 = vmatpush2.msra.mxu0 0.0
    %2222 = vmatprep.subr.mxu0 0.0
    %2223 = vmatpush2.msra.mxu0 0.0
    %2224 = vmatprep.subr.mxu0 0.0
    %2225 = vmatpush2.msra.mxu0 0.0
    %2226 = vmatprep.subr.mxu0 0.0
    %2227 = vmatpush2.msra.mxu0 0.0
    %2228 = vmatprep.subr.mxu0 0.0
    %2229 = vmatpush2.msra.mxu0 0.0
    %2230 = vmatprep.subr.mxu0 0.0
    %2231 = vmatpush2.msra.mxu0 0.0
    %2232 = vmatprep.subr.mxu0 0.0
    %2233 = vmatpush2.msra.mxu0 0.0
    %2234 = vmatprep.subr.mxu0 0.0
    %2235 = vmatpush2.msra.mxu0 0.0
    %2236 = vmatprep.subr.mxu0 0.0
    %2237 = vmatpush2.msra.mxu0 0.0
    %2238 = vmatprep.subr.mxu0 0.0
    %2239 = vmatpush2.msra.mxu0 0.0
    %2240 = vmatprep.subr.mxu0 0.0
    %2241 = vmatpush2.msra.mxu0 0.0
    %2242 = vmatprep.subr.mxu0 0.0
    %2243 = vmatpush2.msra.mxu0 0.0
    %2244 = vmatprep.subr.mxu0 0.0
    %2245 = vmatpush2.msra.mxu0 0.0
    %2246 = vmatprep.subr.mxu0 0.0
    %2247 = vmatpush2.msra.mxu0 0.0
    %2248 = vmatprep.subr.mxu0 0.0
    %2249 = vmatpush2.msra.mxu0 0.0
    %2250 = vmatprep.mubr.f32.mxu0 0.0
    %2251 = vmatmul.mubr.f32.gmra.mxu0 %v2100
    %v2252 = vpop.f32.mrf.mxu0
    %v2253 = vadd.f32 %v2184, %v2252
    %v2254 = vpop.f32.mrf.mxu0
    %2255 = vmatprep.mubr.f32.mxu0 0.0
    %2256 = vmatmul.mubr.f32.gmra.mxu0 %v2103
    %v2257 = vpop.f32.mrf.mxu0
    %v2258 = vadd.f32 %v2184, %v2257
    %v2259 = vpop.f32.mrf.mxu0
    %2260 = vdwg.mxu0
    %v2262 = vlaneseq
    %v2263 = vshrl.u32 %v2262, 7
    %v2264 = vsub.s32 0, %v2263
    %v2265 = vrot.slane %v2085, %v2264
    %2267 = vmatprep.subr.mxu0 0.0
    %2268 = vmatpush1.msra.mxu0 0.0
    %2269 = vmatprep.subr.mxu0 0.0
    %2270 = vmatpush1.msra.mxu0 0.0
    %2271 = vmatprep.subr.mxu0 0.0
    %2272 = vmatpush1.msra.mxu0 0.0
    %2273 = vmatprep.subr.mxu0 0.0
    %2274 = vmatpush1.msra.mxu0 0.0
    %2275 = vmatprep.subr.mxu0 0.0
    %2276 = vmatpush1.msra.mxu0 0.0
    %2277 = vmatprep.subr.mxu0 0.0
    %2278 = vmatpush1.msra.mxu0 0.0
    %2279 = vmatprep.subr.mxu0 0.0
    %2280 = vmatpush1.msra.mxu0 0.0
    %2281 = vmatprep.subr.mxu0 0.0
    %2282 = vmatpush1.msra.mxu0 0.0
    %2283 = vmatprep.subr.mxu0 0.0
    %2284 = vmatpush1.msra.mxu0 0.0
    %2285 = vmatprep.subr.mxu0 0.0
    %2286 = vmatpush1.msra.mxu0 0.0
    %2287 = vmatprep.subr.mxu0 0.0
    %2288 = vmatpush1.msra.mxu0 0.0
    %2289 = vmatprep.subr.mxu0 0.0
    %2290 = vmatpush1.msra.mxu0 0.0
    %2291 = vmatprep.subr.mxu0 0.0
    %2292 = vmatpush1.msra.mxu0 %v2083
    %2293 = vmatprep.subr.mxu0 0.0
    %2294 = vmatpush1.msra.mxu0 %v2082
    %2295 = vmatprep.subr.mxu0 0.0
    %2296 = vmatpush1.msra.mxu0 %v2081
    %2297 = vmatprep.subr.mxu0 0.0
    %2298 = vmatpush1.msra.mxu0 %v2080
    %2299 = vmatprep.subr.mxu0 0.0
    %2300 = vmatpush2.msra.mxu0 0.0
    %2301 = vmatprep.subr.mxu0 0.0
    %2302 = vmatpush2.msra.mxu0 0.0
    %2303 = vmatprep.subr.mxu0 0.0
    %2304 = vmatpush2.msra.mxu0 0.0
    %2305 = vmatprep.subr.mxu0 0.0
    %2306 = vmatpush2.msra.mxu0 0.0
    %2307 = vmatprep.subr.mxu0 0.0
    %2308 = vmatpush2.msra.mxu0 0.0
    %2309 = vmatprep.subr.mxu0 0.0
    %2310 = vmatpush2.msra.mxu0 0.0
    %2311 = vmatprep.subr.mxu0 0.0
    %2312 = vmatpush2.msra.mxu0 0.0
    %2313 = vmatprep.subr.mxu0 0.0
    %2314 = vmatpush2.msra.mxu0 0.0
    %2315 = vmatprep.subr.mxu0 0.0
    %2316 = vmatpush2.msra.mxu0 0.0
    %2317 = vmatprep.subr.mxu0 0.0
    %2318 = vmatpush2.msra.mxu0 0.0
    %2319 = vmatprep.subr.mxu0 0.0
    %2320 = vmatpush2.msra.mxu0 0.0
    %2321 = vmatprep.subr.mxu0 0.0
    %2322 = vmatpush2.msra.mxu0 0.0
    %2323 = vmatprep.subr.mxu0 0.0
    %2324 = vmatpush2.msra.mxu0 0.0
    %2325 = vmatprep.subr.mxu0 0.0
    %2326 = vmatpush2.msra.mxu0 0.0
    %2327 = vmatprep.subr.mxu0 0.0
    %2328 = vmatpush2.msra.mxu0 0.0
    %2329 = vmatprep.subr.mxu0 0.0
    %2330 = vmatpush2.msra.mxu0 0.0
    %2331 = vmatprep.mubr.f32.mxu0 0.0
    %2332 = vmatmul.mubr.f32.gmra.mxu0 %v2100
    %v2333 = vpop.f32.mrf.mxu0
    %v2334 = vadd.f32 %v2265, %v2333
    %v2335 = vpop.f32.mrf.mxu0
    %2336 = vmatprep.mubr.f32.mxu0 0.0
    %2337 = vmatmul.mubr.f32.gmra.mxu0 %v2103
    %v2338 = vpop.f32.mrf.mxu0
    %v2339 = vadd.f32 %v2265, %v2338
    %v2340 = vpop.f32.mrf.mxu0
    %2341 = vdwg.mxu0
    %v2342 = vmul.f32 %v2172, %v171
    %v2343 = vmul.f32 %v2177, %v172
    %v2344 = vmul.f32 %v2172, %v173
    %v2345 = vmul.f32 %v2177, %v174
    %v2346 = vmul.f32 %v2172, %v175
    %v2347 = vmul.f32 %v2177, %v176
    %v2348 = vmul.f32 %v2172, %v177
    %v2349 = vmul.f32 %v2177, %v178
    %v2351 = vsel %vm189, %v2342, 0
    %v2354 = vsel %vm189, %v2343, 0
    %v2357 = vsel %vm189, %v2344, 0
    %v2360 = vsel %vm189, %v2345, 0
    %v2363 = vsel %vm189, %v2346, 0
    %v2366 = vsel %vm189, %v2347, 0
    %v2369 = vsel %vm189, %v2348, 0
    %v2372 = vsel %vm189, %v2349, 0
    %v2375 = vsel %vm189, %v2253, 0
    %v2378 = vsel %vm189, %v2258, 0
    %2380 = vmatprep.subr.mxu0 0.0
    %2381 = vmatpush1.xpose.msra.mxu0 0.0
    %2382 = vmatprep.subr.mxu0 0.0
    %2383 = vmatpush1.xpose.msra.mxu0 0.0
    %2384 = vmatprep.subr.mxu0 0.0
    %2385 = vmatpush1.xpose.msra.mxu0 0.0
    %2386 = vmatprep.subr.mxu0 0.0
    %2387 = vmatpush1.xpose.msra.mxu0 0.0
    %2388 = vmatprep.subr.mxu0 0.0
    %2389 = vmatpush1.xpose.msra.mxu0 0.0
    %2390 = vmatprep.subr.mxu0 0.0
    %2391 = vmatpush1.xpose.msra.mxu0 0.0
    %2392 = vmatprep.subr.mxu0 0.0
    %2393 = vmatpush1.xpose.msra.mxu0 0.0
    %2394 = vmatprep.subr.mxu0 0.0
    %2395 = vmatpush1.xpose.msra.mxu0 0.0
    %2396 = vmatprep.subr.mxu0 0.0
    %2397 = vmatpush1.xpose.msra.mxu0 0.0
    %2398 = vmatprep.subr.mxu0 0.0
    %2399 = vmatpush1.xpose.msra.mxu0 0.0
    %2400 = vmatprep.subr.mxu0 0.0
    %2401 = vmatpush1.xpose.msra.mxu0 0.0
    %2402 = vmatprep.subr.mxu0 0.0
    %2403 = vmatpush1.xpose.msra.mxu0 0.0
    %2404 = vmatprep.subr.mxu0 0.0
    %2405 = vmatpush1.xpose.msra.mxu0 0.0
    %2406 = vmatprep.subr.mxu0 0.0
    %2407 = vmatpush1.xpose.msra.mxu0 0.0
    %2408 = vmatprep.subr.mxu0 0.0
    %2409 = vmatpush1.xpose.msra.mxu0 %v2378
    %2410 = vmatprep.subr.mxu0 0.0
    %2411 = vmatpush1.xpose.msra.mxu0 %v2375
    %2412 = vmatprep.subr.mxu0 0.0
    %2413 = vmatpush2.xpose.msra.mxu0 0.0
    %2414 = vmatprep.subr.mxu0 0.0
    %2415 = vmatpush2.xpose.msra.mxu0 0.0
    %2416 = vmatprep.subr.mxu0 0.0
    %2417 = vmatpush2.xpose.msra.mxu0 0.0
    %2418 = vmatprep.subr.mxu0 0.0
    %2419 = vmatpush2.xpose.msra.mxu0 0.0
    %2420 = vmatprep.subr.mxu0 0.0
    %2421 = vmatpush2.xpose.msra.mxu0 0.0
    %2422 = vmatprep.subr.mxu0 0.0
    %2423 = vmatpush2.xpose.msra.mxu0 0.0
    %2424 = vmatprep.subr.mxu0 0.0
    %2425 = vmatpush2.xpose.msra.mxu0 0.0
    %2426 = vmatprep.subr.mxu0 0.0
    %2427 = vmatpush2.xpose.msra.mxu0 0.0
    %2428 = vmatprep.subr.mxu0 0.0
    %2429 = vmatpush2.xpose.msra.mxu0 0.0
    %2430 = vmatprep.subr.mxu0 0.0
    %2431 = vmatpush2.xpose.msra.mxu0 0.0
    %2432 = vmatprep.subr.mxu0 0.0
    %2433 = vmatpush2.xpose.msra.mxu0 0.0
    %2434 = vmatprep.subr.mxu0 0.0
    %2435 = vmatpush2.xpose.msra.mxu0 0.0
    %2436 = vmatprep.subr.mxu0 0.0
    %2437 = vmatpush2.xpose.msra.mxu0 0.0
    %2438 = vmatprep.subr.mxu0 0.0
    %2439 = vmatpush2.xpose.msra.mxu0 0.0
    %2440 = vmatprep.subr.mxu0 0.0
    %2441 = vmatpush2.xpose.msra.mxu0 0.0
    %2442 = vmatprep.subr.mxu0 0.0
    %2443 = vmatpush2.xpose.msra.mxu0 0.0
    %2444 = vmatprep.mubr.f32.mxu0 0.0
    %2445 = vmatmul.mubr.f32.gmra.mxu0 %v2351
    %v2446 = vpop.f32.mrf.mxu0
    %v2447 = vadd.f32 0.0, %v2446
    %v2448 = vpop.f32.mrf.mxu0
    %2449 = vmatprep.mubr.f32.mxu0 0.0
    %2450 = vmatmul.mubr.f32.gmra.mxu0 %v2354
    %v2451 = vpop.f32.mrf.mxu0
    %v2452 = vadd.f32 0.0, %v2451
    %v2453 = vpop.f32.mrf.mxu0
    %2454 = vmatprep.mubr.f32.mxu0 0.0
    %2455 = vmatmul.mubr.f32.gmra.mxu0 %v2357
    %v2456 = vpop.f32.mrf.mxu0
    %v2457 = vadd.f32 0.0, %v2456
    %v2458 = vpop.f32.mrf.mxu0
    %2459 = vmatprep.mubr.f32.mxu0 0.0
    %2460 = vmatmul.mubr.f32.gmra.mxu0 %v2360
    %v2461 = vpop.f32.mrf.mxu0
    %v2462 = vadd.f32 0.0, %v2461
    %v2463 = vpop.f32.mrf.mxu0
    %2464 = vmatprep.mubr.f32.mxu0 0.0
    %2465 = vmatmul.mubr.f32.gmra.mxu0 %v2363
    %v2466 = vpop.f32.mrf.mxu0
    %v2467 = vadd.f32 0.0, %v2466
    %v2468 = vpop.f32.mrf.mxu0
    %2469 = vmatprep.mubr.f32.mxu0 0.0
    %2470 = vmatmul.mubr.f32.gmra.mxu0 %v2366
    %v2471 = vpop.f32.mrf.mxu0
    %v2472 = vadd.f32 0.0, %v2471
    %v2473 = vpop.f32.mrf.mxu0
    %2474 = vmatprep.mubr.f32.mxu0 0.0
    %2475 = vmatmul.mubr.f32.gmra.mxu0 %v2369
    %v2476 = vpop.f32.mrf.mxu0
    %v2477 = vadd.f32 0.0, %v2476
    %v2478 = vpop.f32.mrf.mxu0
    %2479 = vmatprep.mubr.f32.mxu0 0.0
    %2480 = vmatmul.mubr.f32.gmra.mxu0 %v2372
    %v2481 = vpop.f32.mrf.mxu0
    %v2482 = vadd.f32 0.0, %v2481
    %v2483 = vpop.f32.mrf.mxu0
    %2484 = vdwg.mxu0
    %v2485 = vmul.f32 %v2447, 0.35355338
    %v2486 = vmul.f32 %v2452, 0.35355338
    %v2487 = vmul.f32 %v2457, 0.35355338
    %v2488 = vmul.f32 %v2462, 0.35355338
    %v2489 = vmul.f32 %v2467, 0.35355338
    %v2490 = vmul.f32 %v2472, 0.35355338
    %v2491 = vmul.f32 %v2477, 0.35355338
    %v2492 = vmul.f32 %v2482, 0.35355338
    %v2493 = vadd.f32 %v2485, %v155
    %v2494 = vadd.f32 %v2486, %v156
    %v2495 = vadd.f32 %v2487, %v157
    %v2496 = vadd.f32 %v2488, %v158
    %v2497 = vadd.f32 %v2489, %v159
    %v2498 = vadd.f32 %v2490, %v160
    %v2499 = vadd.f32 %v2491, %v161
    %v2500 = vadd.f32 %v2492, %v162
    %v2501 = vsel %vm661, %v2493, -inf
    %2502 = vmax.xlane.f32.xlu0 %v2501
    %v2503 = vpop.xlane.xlu0 %2502
    %v2504 = vsel %vm661, %v2494, -inf
    %2505 = vmax.xlane.f32.xlu0 %v2504
    %v2506 = vpop.xlane.xlu0 %2505
    %v2507 = vsel %vm661, %v2495, -inf
    %2508 = vmax.xlane.f32.xlu0 %v2507
    %v2509 = vpop.xlane.xlu0 %2508
    %v2510 = vsel %vm661, %v2496, -inf
    %2511 = vmax.xlane.f32.xlu0 %v2510
    %v2512 = vpop.xlane.xlu0 %2511
    %v2513 = vsel %vm661, %v2497, -inf
    %2514 = vmax.xlane.f32.xlu0 %v2513
    %v2515 = vpop.xlane.xlu0 %2514
    %v2516 = vsel %vm661, %v2498, -inf
    %2517 = vmax.xlane.f32.xlu0 %v2516
    %v2518 = vpop.xlane.xlu0 %2517
    %v2519 = vsel %vm661, %v2499, -inf
    %2520 = vmax.xlane.f32.xlu0 %v2519
    %v2521 = vpop.xlane.xlu0 %2520
    %v2522 = vsel %vm661, %v2500, -inf
    %2523 = vmax.xlane.f32.xlu0 %v2522
    %v2524 = vpop.xlane.xlu0 %2523
    %v2525 = vsub.f32 %v2493, %v2503
    %v2526 = vsub.f32 %v2494, %v2506
    %v2527 = vsub.f32 %v2495, %v2509
    %v2528 = vsub.f32 %v2496, %v2512
    %v2529 = vsub.f32 %v2497, %v2515
    %v2530 = vsub.f32 %v2498, %v2518
    %v2531 = vsub.f32 %v2499, %v2521
    %v2532 = vsub.f32 %v2500, %v2524
    %v2533 = vmul.f32 %v2525, 1.442695
    %v2534 = vpow.pop %v2533
    %v2535 = vmul.f32 %v2526, 1.442695
    %v2536 = vpow.pop %v2535
    %v2537 = vmul.f32 %v2527, 1.442695
    %v2538 = vpow.pop %v2537
    %v2539 = vmul.f32 %v2528, 1.442695
    %v2540 = vpow.pop %v2539
    %v2541 = vmul.f32 %v2529, 1.442695
    %v2542 = vpow.pop %v2541
    %v2543 = vmul.f32 %v2530, 1.442695
    %v2544 = vpow.pop %v2543
    %v2545 = vmul.f32 %v2531, 1.442695
    %v2546 = vpow.pop %v2545
    %v2547 = vmul.f32 %v2532, 1.442695
    %v2548 = vpow.pop %v2547
    %v2549 = vsel %vm661, %v2534, 0.0
    %2550 = vadd.xlane.f32.xlu0 %v2549
    %v2551 = vpop.xlane.xlu0 %2550
    %v2552 = vsel %vm661, %v2536, 0.0
    %2553 = vadd.xlane.f32.xlu0 %v2552
    %v2554 = vpop.xlane.xlu0 %2553
    %v2555 = vsel %vm661, %v2538, 0.0
    %2556 = vadd.xlane.f32.xlu0 %v2555
    %v2557 = vpop.xlane.xlu0 %2556
    %v2558 = vsel %vm661, %v2540, 0.0
    %2559 = vadd.xlane.f32.xlu0 %v2558
    %v2560 = vpop.xlane.xlu0 %2559
    %v2561 = vsel %vm661, %v2542, 0.0
    %2562 = vadd.xlane.f32.xlu0 %v2561
    %v2563 = vpop.xlane.xlu0 %2562
    %v2564 = vsel %vm661, %v2544, 0.0
    %2565 = vadd.xlane.f32.xlu0 %v2564
    %v2566 = vpop.xlane.xlu0 %2565
    %v2567 = vsel %vm661, %v2546, 0.0
    %2568 = vadd.xlane.f32.xlu0 %v2567
    %v2569 = vpop.xlane.xlu0 %2568
    %v2570 = vsel %vm661, %v2548, 0.0
    %2571 = vadd.xlane.f32.xlu0 %v2570
    %v2572 = vpop.xlane.xlu0 %2571
    %v2573 = vrcp.pop %v2551
    %v2574 = vrcp.pop %v2554
    %v2575 = vrcp.pop %v2557
    %v2576 = vrcp.pop %v2560
    %v2577 = vrcp.pop %v2563
    %v2578 = vrcp.pop %v2566
    %v2579 = vrcp.pop %v2569
    %v2580 = vrcp.pop %v2572
    %v2581 = vmul.f32 %v2534, %v2573
    %v2582 = vmul.f32 %v2536, %v2574
    %v2583 = vmul.f32 %v2538, %v2575
    %v2584 = vmul.f32 %v2540, %v2576
    %v2585 = vmul.f32 %v2542, %v2577
    %v2586 = vmul.f32 %v2544, %v2578
    %v2587 = vmul.f32 %v2546, %v2579
    %v2588 = vmul.f32 %v2548, %v2580
    %v2590 = vsel %vm661, %v2581, 0
    %v2593 = vsel %vm661, %v2582, 0
    %v2596 = vsel %vm661, %v2583, 0
    %v2599 = vsel %vm661, %v2584, 0
    %v2602 = vsel %vm661, %v2585, 0
    %v2605 = vsel %vm661, %v2586, 0
    %v2608 = vsel %vm661, %v2587, 0
    %v2611 = vsel %vm661, %v2588, 0
    %2613 = vmatprep.subr.mxu0 0.0
    %2614 = vmatpush1.msra.mxu0 0.0
    %2615 = vmatprep.subr.mxu0 0.0
    %2616 = vmatpush1.msra.mxu0 0.0
    %2617 = vmatprep.subr.mxu0 0.0
    %2618 = vmatpush1.msra.mxu0 0.0
    %2619 = vmatprep.subr.mxu0 0.0
    %2620 = vmatpush1.msra.mxu0 0.0
    %2621 = vmatprep.subr.mxu0 0.0
    %2622 = vmatpush1.msra.mxu0 0.0
    %2623 = vmatprep.subr.mxu0 0.0
    %2624 = vmatpush1.msra.mxu0 0.0
    %2625 = vmatprep.subr.mxu0 0.0
    %2626 = vmatpush1.msra.mxu0 0.0
    %2627 = vmatprep.subr.mxu0 0.0
    %2628 = vmatpush1.msra.mxu0 0.0
    %2629 = vmatprep.subr.mxu0 0.0
    %2630 = vmatpush1.msra.mxu0 0.0
    %2631 = vmatprep.subr.mxu0 0.0
    %2632 = vmatpush1.msra.mxu0 0.0
    %2633 = vmatprep.subr.mxu0 0.0
    %2634 = vmatpush1.msra.mxu0 0.0
    %2635 = vmatprep.subr.mxu0 0.0
    %2636 = vmatpush1.msra.mxu0 0.0
    %2637 = vmatprep.subr.mxu0 0.0
    %2638 = vmatpush1.msra.mxu0 0.0
    %2639 = vmatprep.subr.mxu0 0.0
    %2640 = vmatpush1.msra.mxu0 0.0
    %2641 = vmatprep.subr.mxu0 0.0
    %2642 = vmatpush1.msra.mxu0 %v2339
    %2643 = vmatprep.subr.mxu0 0.0
    %2644 = vmatpush1.msra.mxu0 %v2334
    %2645 = vmatprep.subr.mxu0 0.0
    %2646 = vmatpush2.msra.mxu0 0.0
    %2647 = vmatprep.subr.mxu0 0.0
    %2648 = vmatpush2.msra.mxu0 0.0
    %2649 = vmatprep.subr.mxu0 0.0
    %2650 = vmatpush2.msra.mxu0 0.0
    %2651 = vmatprep.subr.mxu0 0.0
    %2652 = vmatpush2.msra.mxu0 0.0
    %2653 = vmatprep.subr.mxu0 0.0
    %2654 = vmatpush2.msra.mxu0 0.0
    %2655 = vmatprep.subr.mxu0 0.0
    %2656 = vmatpush2.msra.mxu0 0.0
    %2657 = vmatprep.subr.mxu0 0.0
    %2658 = vmatpush2.msra.mxu0 0.0
    %2659 = vmatprep.subr.mxu0 0.0
    %2660 = vmatpush2.msra.mxu0 0.0
    %2661 = vmatprep.subr.mxu0 0.0
    %2662 = vmatpush2.msra.mxu0 0.0
    %2663 = vmatprep.subr.mxu0 0.0
    %2664 = vmatpush2.msra.mxu0 0.0
    %2665 = vmatprep.subr.mxu0 0.0
    %2666 = vmatpush2.msra.mxu0 0.0
    %2667 = vmatprep.subr.mxu0 0.0
    %2668 = vmatpush2.msra.mxu0 0.0
    %2669 = vmatprep.subr.mxu0 0.0
    %2670 = vmatpush2.msra.mxu0 0.0
    %2671 = vmatprep.subr.mxu0 0.0
    %2672 = vmatpush2.msra.mxu0 0.0
    %2673 = vmatprep.subr.mxu0 0.0
    %2674 = vmatpush2.msra.mxu0 0.0
    %2675 = vmatprep.subr.mxu0 0.0
    %2676 = vmatpush2.msra.mxu0 0.0
    %2677 = vmatprep.mubr.f32.mxu0 0.0
    %2678 = vmatmul.mubr.f32.gmra.mxu0 %v2590
    %v2679 = vpop.f32.mrf.mxu0
    %v2680 = vadd.f32 0.0, %v2679
    %v2681 = vpop.f32.mrf.mxu0
    %2682 = vmatprep.mubr.f32.mxu0 0.0
    %2683 = vmatmul.mubr.f32.gmra.mxu0 %v2593
    %v2684 = vpop.f32.mrf.mxu0
    %v2685 = vadd.f32 0.0, %v2684
    %v2686 = vpop.f32.mrf.mxu0
    %2687 = vmatprep.mubr.f32.mxu0 0.0
    %2688 = vmatmul.mubr.f32.gmra.mxu0 %v2596
    %v2689 = vpop.f32.mrf.mxu0
    %v2690 = vadd.f32 0.0, %v2689
    %v2691 = vpop.f32.mrf.mxu0
    %2692 = vmatprep.mubr.f32.mxu0 0.0
    %2693 = vmatmul.mubr.f32.gmra.mxu0 %v2599
    %v2694 = vpop.f32.mrf.mxu0
    %v2695 = vadd.f32 0.0, %v2694
    %v2696 = vpop.f32.mrf.mxu0
    %2697 = vmatprep.mubr.f32.mxu0 0.0
    %2698 = vmatmul.mubr.f32.gmra.mxu0 %v2602
    %v2699 = vpop.f32.mrf.mxu0
    %v2700 = vadd.f32 0.0, %v2699
    %v2701 = vpop.f32.mrf.mxu0
    %2702 = vmatprep.mubr.f32.mxu0 0.0
    %2703 = vmatmul.mubr.f32.gmra.mxu0 %v2605
    %v2704 = vpop.f32.mrf.mxu0
    %v2705 = vadd.f32 0.0, %v2704
    %v2706 = vpop.f32.mrf.mxu0
    %2707 = vmatprep.mubr.f32.mxu0 0.0
    %2708 = vmatmul.mubr.f32.gmra.mxu0 %v2608
    %v2709 = vpop.f32.mrf.mxu0
    %v2710 = vadd.f32 0.0, %v2709
    %v2711 = vpop.f32.mrf.mxu0
    %2712 = vmatprep.mubr.f32.mxu0 0.0
    %2713 = vmatmul.mubr.f32.gmra.mxu0 %v2611
    %v2714 = vpop.f32.mrf.mxu0
    %v2715 = vadd.f32 0.0, %v2714
    %v2716 = vpop.f32.mrf.mxu0
    %2717 = vdwg.mxu0
    %v2718 = vmul.f32 %v2680, %v179
    %v2719 = vmul.f32 %v2685, %v180
    %v2720 = vmul.f32 %v2690, %v181
    %v2721 = vmul.f32 %v2695, %v182
    %v2722 = vmul.f32 %v2700, %v183
    %v2723 = vmul.f32 %v2705, %v184
    %v2724 = vmul.f32 %v2710, %v185
    %v2725 = vmul.f32 %v2715, %v186
    %v2726 = vadd.f32 %v2718, %v2720
    %v2727 = vadd.f32 %v2719, %v2721
    %v2728 = vadd.f32 %v2726, %v2722
    %v2729 = vadd.f32 %v2727, %v2723
    %v2730 = vadd.f32 %v2728, %v2724
    %v2731 = vadd.f32 %v2729, %v2725
    %v2733 = vlaneseq
    %v2734 = vshrl.u32 %v2733, 7
    %v2735 = vsub.s32 0, %v2734
    %v2736 = vrot.slane %v2092, %v2735
    %v2739 = vsel %vm189, %v2730, 0
    %v2742 = vsel %vm189, %v2731, 0
    %2744 = vmatprep.subr.mxu0 0.0
    %2745 = vmatpush1.msra.mxu0 0.0
    %2746 = vmatprep.subr.mxu0 0.0
    %2747 = vmatpush1.msra.mxu0 0.0
    %2748 = vmatprep.subr.mxu0 0.0
    %2749 = vmatpush1.msra.mxu0 0.0
    %2750 = vmatprep.subr.mxu0 0.0
    %2751 = vmatpush1.msra.mxu0 0.0
    %2752 = vmatprep.subr.mxu0 0.0
    %2753 = vmatpush1.msra.mxu0 0.0
    %2754 = vmatprep.subr.mxu0 0.0
    %2755 = vmatpush1.msra.mxu0 0.0
    %2756 = vmatprep.subr.mxu0 0.0
    %2757 = vmatpush1.msra.mxu0 0.0
    %2758 = vmatprep.subr.mxu0 0.0
    %2759 = vmatpush1.msra.mxu0 0.0
    %2760 = vmatprep.subr.mxu0 0.0
    %2761 = vmatpush1.msra.mxu0 0.0
    %2762 = vmatprep.subr.mxu0 0.0
    %2763 = vmatpush1.msra.mxu0 0.0
    %2764 = vmatprep.subr.mxu0 0.0
    %2765 = vmatpush1.msra.mxu0 0.0
    %2766 = vmatprep.subr.mxu0 0.0
    %2767 = vmatpush1.msra.mxu0 0.0
    %2768 = vmatprep.subr.mxu0 0.0
    %2769 = vmatpush1.msra.mxu0 %v2090
    %2770 = vmatprep.subr.mxu0 0.0
    %2771 = vmatpush1.msra.mxu0 %v2089
    %2772 = vmatprep.subr.mxu0 0.0
    %2773 = vmatpush1.msra.mxu0 %v2088
    %2774 = vmatprep.subr.mxu0 0.0
    %2775 = vmatpush1.msra.mxu0 %v2087
    %2776 = vmatprep.subr.mxu0 0.0
    %2777 = vmatpush2.msra.mxu0 0.0
    %2778 = vmatprep.subr.mxu0 0.0
    %2779 = vmatpush2.msra.mxu0 0.0
    %2780 = vmatprep.subr.mxu0 0.0
    %2781 = vmatpush2.msra.mxu0 0.0
    %2782 = vmatprep.subr.mxu0 0.0
    %2783 = vmatpush2.msra.mxu0 0.0
    %2784 = vmatprep.subr.mxu0 0.0
    %2785 = vmatpush2.msra.mxu0 0.0
    %2786 = vmatprep.subr.mxu0 0.0
    %2787 = vmatpush2.msra.mxu0 0.0
    %2788 = vmatprep.subr.mxu0 0.0
    %2789 = vmatpush2.msra.mxu0 0.0
    %2790 = vmatprep.subr.mxu0 0.0
    %2791 = vmatpush2.msra.mxu0 0.0
    %2792 = vmatprep.subr.mxu0 0.0
    %2793 = vmatpush2.msra.mxu0 0.0
    %2794 = vmatprep.subr.mxu0 0.0
    %2795 = vmatpush2.msra.mxu0 0.0
    %2796 = vmatprep.subr.mxu0 0.0
    %2797 = vmatpush2.msra.mxu0 0.0
    %2798 = vmatprep.subr.mxu0 0.0
    %2799 = vmatpush2.msra.mxu0 0.0
    %2800 = vmatprep.subr.mxu0 0.0
    %2801 = vmatpush2.msra.mxu0 0.0
    %2802 = vmatprep.subr.mxu0 0.0
    %2803 = vmatpush2.msra.mxu0 0.0
    %2804 = vmatprep.subr.mxu0 0.0
    %2805 = vmatpush2.msra.mxu0 0.0
    %2806 = vmatprep.subr.mxu0 0.0
    %2807 = vmatpush2.msra.mxu0 0.0
    %2808 = vmatprep.mubr.f32.mxu0 0.0
    %2809 = vmatmul.mubr.f32.gmra.mxu0 %v2739
    %v2810 = vpop.f32.mrf.mxu0
    %v2811 = vadd.f32 %v2736, %v2810
    %v2812 = vpop.f32.mrf.mxu0
    %2813 = vmatprep.mubr.f32.mxu0 0.0
    %2814 = vmatmul.mubr.f32.gmra.mxu0 %v2742
    %v2815 = vpop.f32.mrf.mxu0
    %v2816 = vadd.f32 %v2736, %v2815
    %v2817 = vpop.f32.mrf.mxu0
    %2818 = vdwg.mxu0
    %v2819 = vadd.f32 %v2017, %v2811
    %v2820 = vadd.f32 %v2018, %v2816
    %s2821 = scalar_lea.vmem %s33, 1
    %v2822 = vld [vmem:[%s2821] sm:$0x1]
    %s2823 = scalar_lea.vmem %s35, 1
    %v2824 = vld [vmem:[%s2823] sm:$0x1]
    %v2825 = vsel %vm189, %v2819, 0.0
    %2826 = vadd.xlane.f32.xlu0 %v2825
    %v2827 = vpop.xlane.xlu0 %2826
    %v2828 = vsel %vm189, %v2820, 0.0
    %2829 = vadd.xlane.f32.xlu0 %v2828
    %v2830 = vpop.xlane.xlu0 %2829
    %v2831 = vmul.f32 %v2827, %v196
    %v2832 = vmul.f32 %v2830, %v196
    %v2833 = vsub.f32 %v2819, %v2831
    %v2834 = vsub.f32 %v2820, %v2832
    %v2835 = vmul.f32 %v2833, %v2833
    %v2836 = vmul.f32 %v2834, %v2834
    %v2837 = vsel %vm189, %v2835, 0.0
    %2838 = vadd.xlane.f32.xlu0 %v2837
    %v2839 = vpop.xlane.xlu0 %2838
    %v2840 = vsel %vm189, %v2836, 0.0
    %2841 = vadd.xlane.f32.xlu0 %v2840
    %v2842 = vpop.xlane.xlu0 %2841
    %v2843 = vmul.f32 %v2839, %v196
    %v2844 = vmul.f32 %v2842, %v196
    %v2845 = vadd.f32 %v2843, 1e-05
    %v2846 = vadd.f32 %v2844, 1e-05
    %v2847 = vrsqrt.pop %v2845
    %v2848 = vrsqrt.pop %v2846
    %v2849 = vmul.f32 %v2833, %v2847
    %v2850 = vmul.f32 %v2834, %v2848
    %v2852 = vlaneseq
    %v2853 = vshrl.u32 %v2852, 7
    %v2854 = vsub.s32 0, %v2853
    %v2855 = vrot.slane %v2822, %v2854
    %v2857 = vmul.f32 %v2849, %v2855
    %v2858 = vmul.f32 %v2850, %v2855
    %v2860 = vlaneseq
    %v2861 = vshrl.u32 %v2860, 7
    %v2862 = vsub.s32 0, %v2861
    %v2863 = vrot.slane %v2824, %v2862
    %v2865 = vadd.f32 %v2857, %v2863
    %v2866 = vadd.f32 %v2858, %v2863
    %s2867 = scalar_lea.vmem %s37, 32
    %v2868 = vld [vmem:[%s2867] sm:$0xff]
    %v2869 = vld [vmem:[%s2867 + $0x8] sm:$0xff]
    %v2870 = vld [vmem:[%s2867 + $0x10] sm:$0xff]
    %v2871 = vld [vmem:[%s2867 + $0x18] sm:$0xff]
    %s2872 = scalar_lea.vmem %s39, 1
    %v2873 = vld [vmem:[%s2872] sm:$0x1]
    %s2874 = scalar_lea.vmem %s41, 32
    %v2875 = vld [vmem:[%s2874] sm:$0xff]
    %v2876 = vld [vmem:[%s2874 + $0x8] sm:$0xff]
    %v2877 = vld [vmem:[%s2874 + $0x10] sm:$0xff]
    %v2878 = vld [vmem:[%s2874 + $0x18] sm:$0xff]
    %s2879 = scalar_lea.vmem %s43, 1
    %v2880 = vld [vmem:[%s2879] sm:$0x1]
    %s2881 = scalar_lea.vmem %s45, 32
    %v2882 = vld [vmem:[%s2881] sm:$0xff]
    %v2883 = vld [vmem:[%s2881 + $0x8] sm:$0xff]
    %v2884 = vld [vmem:[%s2881 + $0x10] sm:$0xff]
    %v2885 = vld [vmem:[%s2881 + $0x18] sm:$0xff]
    %s2886 = scalar_lea.vmem %s47, 1
    %v2887 = vld [vmem:[%s2886] sm:$0x1]
    %s2888 = scalar_lea.vmem %s49, 32
    %v2889 = vld [vmem:[%s2888] sm:$0xff]
    %v2890 = vld [vmem:[%s2888 + $0x8] sm:$0xff]
    %v2891 = vld [vmem:[%s2888 + $0x10] sm:$0xff]
    %v2892 = vld [vmem:[%s2888 + $0x18] sm:$0xff]
    %s2893 = scalar_lea.vmem %s51, 1
    %v2894 = vld [vmem:[%s2893] sm:$0x1]
    %v2896 = vlaneseq
    %v2897 = vshrl.u32 %v2896, 7
    %v2898 = vsub.s32 0, %v2897
    %v2899 = vrot.slane %v2873, %v2898
    %v2902 = vsel %vm189, %v2865, 0
    %v2905 = vsel %vm189, %v2866, 0
    %2907 = vmatprep.subr.mxu0 0.0
    %2908 = vmatpush1.msra.mxu0 0.0
    %2909 = vmatprep.subr.mxu0 0.0
    %2910 = vmatpush1.msra.mxu0 0.0
    %2911 = vmatprep.subr.mxu0 0.0
    %2912 = vmatpush1.msra.mxu0 0.0
    %2913 = vmatprep.subr.mxu0 0.0
    %2914 = vmatpush1.msra.mxu0 0.0
    %2915 = vmatprep.subr.mxu0 0.0
    %2916 = vmatpush1.msra.mxu0 0.0
    %2917 = vmatprep.subr.mxu0 0.0
    %2918 = vmatpush1.msra.mxu0 0.0
    %2919 = vmatprep.subr.mxu0 0.0
    %2920 = vmatpush1.msra.mxu0 0.0
    %2921 = vmatprep.subr.mxu0 0.0
    %2922 = vmatpush1.msra.mxu0 0.0
    %2923 = vmatprep.subr.mxu0 0.0
    %2924 = vmatpush1.msra.mxu0 0.0
    %2925 = vmatprep.subr.mxu0 0.0
    %2926 = vmatpush1.msra.mxu0 0.0
    %2927 = vmatprep.subr.mxu0 0.0
    %2928 = vmatpush1.msra.mxu0 0.0
    %2929 = vmatprep.subr.mxu0 0.0
    %2930 = vmatpush1.msra.mxu0 0.0
    %2931 = vmatprep.subr.mxu0 0.0
    %2932 = vmatpush1.msra.mxu0 %v2871
    %2933 = vmatprep.subr.mxu0 0.0
    %2934 = vmatpush1.msra.mxu0 %v2870
    %2935 = vmatprep.subr.mxu0 0.0
    %2936 = vmatpush1.msra.mxu0 %v2869
    %2937 = vmatprep.subr.mxu0 0.0
    %2938 = vmatpush1.msra.mxu0 %v2868
    %2939 = vmatprep.subr.mxu0 0.0
    %2940 = vmatpush2.msra.mxu0 0.0
    %2941 = vmatprep.subr.mxu0 0.0
    %2942 = vmatpush2.msra.mxu0 0.0
    %2943 = vmatprep.subr.mxu0 0.0
    %2944 = vmatpush2.msra.mxu0 0.0
    %2945 = vmatprep.subr.mxu0 0.0
    %2946 = vmatpush2.msra.mxu0 0.0
    %2947 = vmatprep.subr.mxu0 0.0
    %2948 = vmatpush2.msra.mxu0 0.0
    %2949 = vmatprep.subr.mxu0 0.0
    %2950 = vmatpush2.msra.mxu0 0.0
    %2951 = vmatprep.subr.mxu0 0.0
    %2952 = vmatpush2.msra.mxu0 0.0
    %2953 = vmatprep.subr.mxu0 0.0
    %2954 = vmatpush2.msra.mxu0 0.0
    %2955 = vmatprep.subr.mxu0 0.0
    %2956 = vmatpush2.msra.mxu0 0.0
    %2957 = vmatprep.subr.mxu0 0.0
    %2958 = vmatpush2.msra.mxu0 0.0
    %2959 = vmatprep.subr.mxu0 0.0
    %2960 = vmatpush2.msra.mxu0 0.0
    %2961 = vmatprep.subr.mxu0 0.0
    %2962 = vmatpush2.msra.mxu0 0.0
    %2963 = vmatprep.subr.mxu0 0.0
    %2964 = vmatpush2.msra.mxu0 0.0
    %2965 = vmatprep.subr.mxu0 0.0
    %2966 = vmatpush2.msra.mxu0 0.0
    %2967 = vmatprep.subr.mxu0 0.0
    %2968 = vmatpush2.msra.mxu0 0.0
    %2969 = vmatprep.subr.mxu0 0.0
    %2970 = vmatpush2.msra.mxu0 0.0
    %2971 = vmatprep.mubr.f32.mxu0 0.0
    %2972 = vmatmul.mubr.f32.gmra.mxu0 %v2902
    %v2973 = vpop.f32.mrf.mxu0
    %v2974 = vadd.f32 %v2899, %v2973
    %v2975 = vpop.f32.mrf.mxu0
    %2976 = vmatprep.mubr.f32.mxu0 0.0
    %2977 = vmatmul.mubr.f32.gmra.mxu0 %v2905
    %v2978 = vpop.f32.mrf.mxu0
    %v2979 = vadd.f32 %v2899, %v2978
    %v2980 = vpop.f32.mrf.mxu0
    %2981 = vdwg.mxu0
    %v2983 = vlaneseq
    %v2984 = vshrl.u32 %v2983, 7
    %v2985 = vsub.s32 0, %v2984
    %v2986 = vrot.slane %v2880, %v2985
    %2988 = vmatprep.subr.mxu0 0.0
    %2989 = vmatpush1.msra.mxu0 0.0
    %2990 = vmatprep.subr.mxu0 0.0
    %2991 = vmatpush1.msra.mxu0 0.0
    %2992 = vmatprep.subr.mxu0 0.0
    %2993 = vmatpush1.msra.mxu0 0.0
    %2994 = vmatprep.subr.mxu0 0.0
    %2995 = vmatpush1.msra.mxu0 0.0
    %2996 = vmatprep.subr.mxu0 0.0
    %2997 = vmatpush1.msra.mxu0 0.0
    %2998 = vmatprep.subr.mxu0 0.0
    %2999 = vmatpush1.msra.mxu0 0.0
    %3000 = vmatprep.subr.mxu0 0.0
    %3001 = vmatpush1.msra.mxu0 0.0
    %3002 = vmatprep.subr.mxu0 0.0
    %3003 = vmatpush1.msra.mxu0 0.0
    %3004 = vmatprep.subr.mxu0 0.0
    %3005 = vmatpush1.msra.mxu0 0.0
    %3006 = vmatprep.subr.mxu0 0.0
    %3007 = vmatpush1.msra.mxu0 0.0
    %3008 = vmatprep.subr.mxu0 0.0
    %3009 = vmatpush1.msra.mxu0 0.0
    %3010 = vmatprep.subr.mxu0 0.0
    %3011 = vmatpush1.msra.mxu0 0.0
    %3012 = vmatprep.subr.mxu0 0.0
    %3013 = vmatpush1.msra.mxu0 %v2878
    %3014 = vmatprep.subr.mxu0 0.0
    %3015 = vmatpush1.msra.mxu0 %v2877
    %3016 = vmatprep.subr.mxu0 0.0
    %3017 = vmatpush1.msra.mxu0 %v2876
    %3018 = vmatprep.subr.mxu0 0.0
    %3019 = vmatpush1.msra.mxu0 %v2875
    %3020 = vmatprep.subr.mxu0 0.0
    %3021 = vmatpush2.msra.mxu0 0.0
    %3022 = vmatprep.subr.mxu0 0.0
    %3023 = vmatpush2.msra.mxu0 0.0
    %3024 = vmatprep.subr.mxu0 0.0
    %3025 = vmatpush2.msra.mxu0 0.0
    %3026 = vmatprep.subr.mxu0 0.0
    %3027 = vmatpush2.msra.mxu0 0.0
    %3028 = vmatprep.subr.mxu0 0.0
    %3029 = vmatpush2.msra.mxu0 0.0
    %3030 = vmatprep.subr.mxu0 0.0
    %3031 = vmatpush2.msra.mxu0 0.0
    %3032 = vmatprep.subr.mxu0 0.0
    %3033 = vmatpush2.msra.mxu0 0.0
    %3034 = vmatprep.subr.mxu0 0.0
    %3035 = vmatpush2.msra.mxu0 0.0
    %3036 = vmatprep.subr.mxu0 0.0
    %3037 = vmatpush2.msra.mxu0 0.0
    %3038 = vmatprep.subr.mxu0 0.0
    %3039 = vmatpush2.msra.mxu0 0.0
    %3040 = vmatprep.subr.mxu0 0.0
    %3041 = vmatpush2.msra.mxu0 0.0
    %3042 = vmatprep.subr.mxu0 0.0
    %3043 = vmatpush2.msra.mxu0 0.0
    %3044 = vmatprep.subr.mxu0 0.0
    %3045 = vmatpush2.msra.mxu0 0.0
    %3046 = vmatprep.subr.mxu0 0.0
    %3047 = vmatpush2.msra.mxu0 0.0
    %3048 = vmatprep.subr.mxu0 0.0
    %3049 = vmatpush2.msra.mxu0 0.0
    %3050 = vmatprep.subr.mxu0 0.0
    %3051 = vmatpush2.msra.mxu0 0.0
    %3052 = vmatprep.mubr.f32.mxu0 0.0
    %3053 = vmatmul.mubr.f32.gmra.mxu0 %v1140
    %v3054 = vpop.f32.mrf.mxu0
    %v3055 = vadd.f32 %v2986, %v3054
    %v3056 = vpop.f32.mrf.mxu0
    %3057 = vmatprep.mubr.f32.mxu0 0.0
    %3058 = vmatmul.mubr.f32.gmra.mxu0 %v1143
    %v3059 = vpop.f32.mrf.mxu0
    %v3060 = vadd.f32 %v2986, %v3059
    %v3061 = vpop.f32.mrf.mxu0
    %3062 = vdwg.mxu0
    %v3064 = vlaneseq
    %v3065 = vshrl.u32 %v3064, 7
    %v3066 = vsub.s32 0, %v3065
    %v3067 = vrot.slane %v2887, %v3066
    %3069 = vmatprep.subr.mxu0 0.0
    %3070 = vmatpush1.msra.mxu0 0.0
    %3071 = vmatprep.subr.mxu0 0.0
    %3072 = vmatpush1.msra.mxu0 0.0
    %3073 = vmatprep.subr.mxu0 0.0
    %3074 = vmatpush1.msra.mxu0 0.0
    %3075 = vmatprep.subr.mxu0 0.0
    %3076 = vmatpush1.msra.mxu0 0.0
    %3077 = vmatprep.subr.mxu0 0.0
    %3078 = vmatpush1.msra.mxu0 0.0
    %3079 = vmatprep.subr.mxu0 0.0
    %3080 = vmatpush1.msra.mxu0 0.0
    %3081 = vmatprep.subr.mxu0 0.0
    %3082 = vmatpush1.msra.mxu0 0.0
    %3083 = vmatprep.subr.mxu0 0.0
    %3084 = vmatpush1.msra.mxu0 0.0
    %3085 = vmatprep.subr.mxu0 0.0
    %3086 = vmatpush1.msra.mxu0 0.0
    %3087 = vmatprep.subr.mxu0 0.0
    %3088 = vmatpush1.msra.mxu0 0.0
    %3089 = vmatprep.subr.mxu0 0.0
    %3090 = vmatpush1.msra.mxu0 0.0
    %3091 = vmatprep.subr.mxu0 0.0
    %3092 = vmatpush1.msra.mxu0 0.0
    %3093 = vmatprep.subr.mxu0 0.0
    %3094 = vmatpush1.msra.mxu0 %v2885
    %3095 = vmatprep.subr.mxu0 0.0
    %3096 = vmatpush1.msra.mxu0 %v2884
    %3097 = vmatprep.subr.mxu0 0.0
    %3098 = vmatpush1.msra.mxu0 %v2883
    %3099 = vmatprep.subr.mxu0 0.0
    %3100 = vmatpush1.msra.mxu0 %v2882
    %3101 = vmatprep.subr.mxu0 0.0
    %3102 = vmatpush2.msra.mxu0 0.0
    %3103 = vmatprep.subr.mxu0 0.0
    %3104 = vmatpush2.msra.mxu0 0.0
    %3105 = vmatprep.subr.mxu0 0.0
    %3106 = vmatpush2.msra.mxu0 0.0
    %3107 = vmatprep.subr.mxu0 0.0
    %3108 = vmatpush2.msra.mxu0 0.0
    %3109 = vmatprep.subr.mxu0 0.0
    %3110 = vmatpush2.msra.mxu0 0.0
    %3111 = vmatprep.subr.mxu0 0.0
    %3112 = vmatpush2.msra.mxu0 0.0
    %3113 = vmatprep.subr.mxu0 0.0
    %3114 = vmatpush2.msra.mxu0 0.0
    %3115 = vmatprep.subr.mxu0 0.0
    %3116 = vmatpush2.msra.mxu0 0.0
    %3117 = vmatprep.subr.mxu0 0.0
    %3118 = vmatpush2.msra.mxu0 0.0
    %3119 = vmatprep.subr.mxu0 0.0
    %3120 = vmatpush2.msra.mxu0 0.0
    %3121 = vmatprep.subr.mxu0 0.0
    %3122 = vmatpush2.msra.mxu0 0.0
    %3123 = vmatprep.subr.mxu0 0.0
    %3124 = vmatpush2.msra.mxu0 0.0
    %3125 = vmatprep.subr.mxu0 0.0
    %3126 = vmatpush2.msra.mxu0 0.0
    %3127 = vmatprep.subr.mxu0 0.0
    %3128 = vmatpush2.msra.mxu0 0.0
    %3129 = vmatprep.subr.mxu0 0.0
    %3130 = vmatpush2.msra.mxu0 0.0
    %3131 = vmatprep.subr.mxu0 0.0
    %3132 = vmatpush2.msra.mxu0 0.0
    %3133 = vmatprep.mubr.f32.mxu0 0.0
    %3134 = vmatmul.mubr.f32.gmra.mxu0 %v1140
    %v3135 = vpop.f32.mrf.mxu0
    %v3136 = vadd.f32 %v3067, %v3135
    %v3137 = vpop.f32.mrf.mxu0
    %3138 = vmatprep.mubr.f32.mxu0 0.0
    %3139 = vmatmul.mubr.f32.gmra.mxu0 %v1143
    %v3140 = vpop.f32.mrf.mxu0
    %v3141 = vadd.f32 %v3067, %v3140
    %v3142 = vpop.f32.mrf.mxu0
    %3143 = vdwg.mxu0
    %v3144 = vmul.f32 %v2974, %v171
    %v3145 = vmul.f32 %v2979, %v172
    %v3146 = vmul.f32 %v2974, %v173
    %v3147 = vmul.f32 %v2979, %v174
    %v3148 = vmul.f32 %v2974, %v175
    %v3149 = vmul.f32 %v2979, %v176
    %v3150 = vmul.f32 %v2974, %v177
    %v3151 = vmul.f32 %v2979, %v178
    %v3153 = vsel %vm189, %v3144, 0
    %v3156 = vsel %vm189, %v3145, 0
    %v3159 = vsel %vm189, %v3146, 0
    %v3162 = vsel %vm189, %v3147, 0
    %v3165 = vsel %vm189, %v3148, 0
    %v3168 = vsel %vm189, %v3149, 0
    %v3171 = vsel %vm189, %v3150, 0
    %v3174 = vsel %vm189, %v3151, 0
    %v3177 = vsel %vm189, %v3055, 0
    %v3180 = vsel %vm189, %v3060, 0
    %3182 = vmatprep.subr.mxu0 0.0
    %3183 = vmatpush1.xpose.msra.mxu0 0.0
    %3184 = vmatprep.subr.mxu0 0.0
    %3185 = vmatpush1.xpose.msra.mxu0 0.0
    %3186 = vmatprep.subr.mxu0 0.0
    %3187 = vmatpush1.xpose.msra.mxu0 0.0
    %3188 = vmatprep.subr.mxu0 0.0
    %3189 = vmatpush1.xpose.msra.mxu0 0.0
    %3190 = vmatprep.subr.mxu0 0.0
    %3191 = vmatpush1.xpose.msra.mxu0 0.0
    %3192 = vmatprep.subr.mxu0 0.0
    %3193 = vmatpush1.xpose.msra.mxu0 0.0
    %3194 = vmatprep.subr.mxu0 0.0
    %3195 = vmatpush1.xpose.msra.mxu0 0.0
    %3196 = vmatprep.subr.mxu0 0.0
    %3197 = vmatpush1.xpose.msra.mxu0 0.0
    %3198 = vmatprep.subr.mxu0 0.0
    %3199 = vmatpush1.xpose.msra.mxu0 0.0
    %3200 = vmatprep.subr.mxu0 0.0
    %3201 = vmatpush1.xpose.msra.mxu0 0.0
    %3202 = vmatprep.subr.mxu0 0.0
    %3203 = vmatpush1.xpose.msra.mxu0 0.0
    %3204 = vmatprep.subr.mxu0 0.0
    %3205 = vmatpush1.xpose.msra.mxu0 0.0
    %3206 = vmatprep.subr.mxu0 0.0
    %3207 = vmatpush1.xpose.msra.mxu0 0.0
    %3208 = vmatprep.subr.mxu0 0.0
    %3209 = vmatpush1.xpose.msra.mxu0 0.0
    %3210 = vmatprep.subr.mxu0 0.0
    %3211 = vmatpush1.xpose.msra.mxu0 %v3180
    %3212 = vmatprep.subr.mxu0 0.0
    %3213 = vmatpush1.xpose.msra.mxu0 %v3177
    %3214 = vmatprep.subr.mxu0 0.0
    %3215 = vmatpush2.xpose.msra.mxu0 0.0
    %3216 = vmatprep.subr.mxu0 0.0
    %3217 = vmatpush2.xpose.msra.mxu0 0.0
    %3218 = vmatprep.subr.mxu0 0.0
    %3219 = vmatpush2.xpose.msra.mxu0 0.0
    %3220 = vmatprep.subr.mxu0 0.0
    %3221 = vmatpush2.xpose.msra.mxu0 0.0
    %3222 = vmatprep.subr.mxu0 0.0
    %3223 = vmatpush2.xpose.msra.mxu0 0.0
    %3224 = vmatprep.subr.mxu0 0.0
    %3225 = vmatpush2.xpose.msra.mxu0 0.0
    %3226 = vmatprep.subr.mxu0 0.0
    %3227 = vmatpush2.xpose.msra.mxu0 0.0
    %3228 = vmatprep.subr.mxu0 0.0
    %3229 = vmatpush2.xpose.msra.mxu0 0.0
    %3230 = vmatprep.subr.mxu0 0.0
    %3231 = vmatpush2.xpose.msra.mxu0 0.0
    %3232 = vmatprep.subr.mxu0 0.0
    %3233 = vmatpush2.xpose.msra.mxu0 0.0
    %3234 = vmatprep.subr.mxu0 0.0
    %3235 = vmatpush2.xpose.msra.mxu0 0.0
    %3236 = vmatprep.subr.mxu0 0.0
    %3237 = vmatpush2.xpose.msra.mxu0 0.0
    %3238 = vmatprep.subr.mxu0 0.0
    %3239 = vmatpush2.xpose.msra.mxu0 0.0
    %3240 = vmatprep.subr.mxu0 0.0
    %3241 = vmatpush2.xpose.msra.mxu0 0.0
    %3242 = vmatprep.subr.mxu0 0.0
    %3243 = vmatpush2.xpose.msra.mxu0 0.0
    %3244 = vmatprep.subr.mxu0 0.0
    %3245 = vmatpush2.xpose.msra.mxu0 0.0
    %3246 = vmatprep.mubr.f32.mxu0 0.0
    %3247 = vmatmul.mubr.f32.gmra.mxu0 %v3153
    %v3248 = vpop.f32.mrf.mxu0
    %v3249 = vadd.f32 0.0, %v3248
    %v3250 = vpop.f32.mrf.mxu0
    %3251 = vmatprep.mubr.f32.mxu0 0.0
    %3252 = vmatmul.mubr.f32.gmra.mxu0 %v3156
    %v3253 = vpop.f32.mrf.mxu0
    %v3254 = vadd.f32 0.0, %v3253
    %v3255 = vpop.f32.mrf.mxu0
    %3256 = vmatprep.mubr.f32.mxu0 0.0
    %3257 = vmatmul.mubr.f32.gmra.mxu0 %v3159
    %v3258 = vpop.f32.mrf.mxu0
    %v3259 = vadd.f32 0.0, %v3258
    %v3260 = vpop.f32.mrf.mxu0
    %3261 = vmatprep.mubr.f32.mxu0 0.0
    %3262 = vmatmul.mubr.f32.gmra.mxu0 %v3162
    %v3263 = vpop.f32.mrf.mxu0
    %v3264 = vadd.f32 0.0, %v3263
    %v3265 = vpop.f32.mrf.mxu0
    %3266 = vmatprep.mubr.f32.mxu0 0.0
    %3267 = vmatmul.mubr.f32.gmra.mxu0 %v3165
    %v3268 = vpop.f32.mrf.mxu0
    %v3269 = vadd.f32 0.0, %v3268
    %v3270 = vpop.f32.mrf.mxu0
    %3271 = vmatprep.mubr.f32.mxu0 0.0
    %3272 = vmatmul.mubr.f32.gmra.mxu0 %v3168
    %v3273 = vpop.f32.mrf.mxu0
    %v3274 = vadd.f32 0.0, %v3273
    %v3275 = vpop.f32.mrf.mxu0
    %3276 = vmatprep.mubr.f32.mxu0 0.0
    %3277 = vmatmul.mubr.f32.gmra.mxu0 %v3171
    %v3278 = vpop.f32.mrf.mxu0
    %v3279 = vadd.f32 0.0, %v3278
    %v3280 = vpop.f32.mrf.mxu0
    %3281 = vmatprep.mubr.f32.mxu0 0.0
    %3282 = vmatmul.mubr.f32.gmra.mxu0 %v3174
    %v3283 = vpop.f32.mrf.mxu0
    %v3284 = vadd.f32 0.0, %v3283
    %v3285 = vpop.f32.mrf.mxu0
    %3286 = vdwg.mxu0
    %v3287 = vmul.f32 %v3249, 0.35355338
    %v3288 = vmul.f32 %v3254, 0.35355338
    %v3289 = vmul.f32 %v3259, 0.35355338
    %v3290 = vmul.f32 %v3264, 0.35355338
    %v3291 = vmul.f32 %v3269, 0.35355338
    %v3292 = vmul.f32 %v3274, 0.35355338
    %v3293 = vmul.f32 %v3279, 0.35355338
    %v3294 = vmul.f32 %v3284, 0.35355338
    %v3295 = vadd.f32 %v3287, %v163
    %v3296 = vadd.f32 %v3288, %v164
    %v3297 = vadd.f32 %v3289, %v165
    %v3298 = vadd.f32 %v3290, %v166
    %v3299 = vadd.f32 %v3291, %v167
    %v3300 = vadd.f32 %v3292, %v168
    %v3301 = vadd.f32 %v3293, %v169
    %v3302 = vadd.f32 %v3294, %v170
    %v3303 = vsel %vm661, %v3295, -inf
    %3304 = vmax.xlane.f32.xlu0 %v3303
    %v3305 = vpop.xlane.xlu0 %3304
    %v3306 = vsel %vm661, %v3296, -inf
    %3307 = vmax.xlane.f32.xlu0 %v3306
    %v3308 = vpop.xlane.xlu0 %3307
    %v3309 = vsel %vm661, %v3297, -inf
    %3310 = vmax.xlane.f32.xlu0 %v3309
    %v3311 = vpop.xlane.xlu0 %3310
    %v3312 = vsel %vm661, %v3298, -inf
    %3313 = vmax.xlane.f32.xlu0 %v3312
    %v3314 = vpop.xlane.xlu0 %3313
    %v3315 = vsel %vm661, %v3299, -inf
    %3316 = vmax.xlane.f32.xlu0 %v3315
    %v3317 = vpop.xlane.xlu0 %3316
    %v3318 = vsel %vm661, %v3300, -inf
    %3319 = vmax.xlane.f32.xlu0 %v3318
    %v3320 = vpop.xlane.xlu0 %3319
    %v3321 = vsel %vm661, %v3301, -inf
    %3322 = vmax.xlane.f32.xlu0 %v3321
    %v3323 = vpop.xlane.xlu0 %3322
    %v3324 = vsel %vm661, %v3302, -inf
    %3325 = vmax.xlane.f32.xlu0 %v3324
    %v3326 = vpop.xlane.xlu0 %3325
    %v3327 = vsub.f32 %v3295, %v3305
    %v3328 = vsub.f32 %v3296, %v3308
    %v3329 = vsub.f32 %v3297, %v3311
    %v3330 = vsub.f32 %v3298, %v3314
    %v3331 = vsub.f32 %v3299, %v3317
    %v3332 = vsub.f32 %v3300, %v3320
    %v3333 = vsub.f32 %v3301, %v3323
    %v3334 = vsub.f32 %v3302, %v3326
    %v3335 = vmul.f32 %v3327, 1.442695
    %v3336 = vpow.pop %v3335
    %v3337 = vmul.f32 %v3328, 1.442695
    %v3338 = vpow.pop %v3337
    %v3339 = vmul.f32 %v3329, 1.442695
    %v3340 = vpow.pop %v3339
    %v3341 = vmul.f32 %v3330, 1.442695
    %v3342 = vpow.pop %v3341
    %v3343 = vmul.f32 %v3331, 1.442695
    %v3344 = vpow.pop %v3343
    %v3345 = vmul.f32 %v3332, 1.442695
    %v3346 = vpow.pop %v3345
    %v3347 = vmul.f32 %v3333, 1.442695
    %v3348 = vpow.pop %v3347
    %v3349 = vmul.f32 %v3334, 1.442695
    %v3350 = vpow.pop %v3349
    %v3351 = vsel %vm661, %v3336, 0.0
    %3352 = vadd.xlane.f32.xlu0 %v3351
    %v3353 = vpop.xlane.xlu0 %3352
    %v3354 = vsel %vm661, %v3338, 0.0
    %3355 = vadd.xlane.f32.xlu0 %v3354
    %v3356 = vpop.xlane.xlu0 %3355
    %v3357 = vsel %vm661, %v3340, 0.0
    %3358 = vadd.xlane.f32.xlu0 %v3357
    %v3359 = vpop.xlane.xlu0 %3358
    %v3360 = vsel %vm661, %v3342, 0.0
    %3361 = vadd.xlane.f32.xlu0 %v3360
    %v3362 = vpop.xlane.xlu0 %3361
    %v3363 = vsel %vm661, %v3344, 0.0
    %3364 = vadd.xlane.f32.xlu0 %v3363
    %v3365 = vpop.xlane.xlu0 %3364
    %v3366 = vsel %vm661, %v3346, 0.0
    %3367 = vadd.xlane.f32.xlu0 %v3366
    %v3368 = vpop.xlane.xlu0 %3367
    %v3369 = vsel %vm661, %v3348, 0.0
    %3370 = vadd.xlane.f32.xlu0 %v3369
    %v3371 = vpop.xlane.xlu0 %3370
    %v3372 = vsel %vm661, %v3350, 0.0
    %3373 = vadd.xlane.f32.xlu0 %v3372
    %v3374 = vpop.xlane.xlu0 %3373
    %v3375 = vrcp.pop %v3353
    %v3376 = vrcp.pop %v3356
    %v3377 = vrcp.pop %v3359
    %v3378 = vrcp.pop %v3362
    %v3379 = vrcp.pop %v3365
    %v3380 = vrcp.pop %v3368
    %v3381 = vrcp.pop %v3371
    %v3382 = vrcp.pop %v3374
    %v3383 = vmul.f32 %v3336, %v3375
    %v3384 = vmul.f32 %v3338, %v3376
    %v3385 = vmul.f32 %v3340, %v3377
    %v3386 = vmul.f32 %v3342, %v3378
    %v3387 = vmul.f32 %v3344, %v3379
    %v3388 = vmul.f32 %v3346, %v3380
    %v3389 = vmul.f32 %v3348, %v3381
    %v3390 = vmul.f32 %v3350, %v3382
    %v3392 = vsel %vm661, %v3383, 0
    %v3395 = vsel %vm661, %v3384, 0
    %v3398 = vsel %vm661, %v3385, 0
    %v3401 = vsel %vm661, %v3386, 0
    %v3404 = vsel %vm661, %v3387, 0
    %v3407 = vsel %vm661, %v3388, 0
    %v3410 = vsel %vm661, %v3389, 0
    %v3413 = vsel %vm661, %v3390, 0
    %3415 = vmatprep.subr.mxu0 0.0
    %3416 = vmatpush1.msra.mxu0 0.0
    %3417 = vmatprep.subr.mxu0 0.0
    %3418 = vmatpush1.msra.mxu0 0.0
    %3419 = vmatprep.subr.mxu0 0.0
    %3420 = vmatpush1.msra.mxu0 0.0
    %3421 = vmatprep.subr.mxu0 0.0
    %3422 = vmatpush1.msra.mxu0 0.0
    %3423 = vmatprep.subr.mxu0 0.0
    %3424 = vmatpush1.msra.mxu0 0.0
    %3425 = vmatprep.subr.mxu0 0.0
    %3426 = vmatpush1.msra.mxu0 0.0
    %3427 = vmatprep.subr.mxu0 0.0
    %3428 = vmatpush1.msra.mxu0 0.0
    %3429 = vmatprep.subr.mxu0 0.0
    %3430 = vmatpush1.msra.mxu0 0.0
    %3431 = vmatprep.subr.mxu0 0.0
    %3432 = vmatpush1.msra.mxu0 0.0
    %3433 = vmatprep.subr.mxu0 0.0
    %3434 = vmatpush1.msra.mxu0 0.0
    %3435 = vmatprep.subr.mxu0 0.0
    %3436 = vmatpush1.msra.mxu0 0.0
    %3437 = vmatprep.subr.mxu0 0.0
    %3438 = vmatpush1.msra.mxu0 0.0
    %3439 = vmatprep.subr.mxu0 0.0
    %3440 = vmatpush1.msra.mxu0 0.0
    %3441 = vmatprep.subr.mxu0 0.0
    %3442 = vmatpush1.msra.mxu0 0.0
    %3443 = vmatprep.subr.mxu0 0.0
    %3444 = vmatpush1.msra.mxu0 %v3141
    %3445 = vmatprep.subr.mxu0 0.0
    %3446 = vmatpush1.msra.mxu0 %v3136
    %3447 = vmatprep.subr.mxu0 0.0
    %3448 = vmatpush2.msra.mxu0 0.0
    %3449 = vmatprep.subr.mxu0 0.0
    %3450 = vmatpush2.msra.mxu0 0.0
    %3451 = vmatprep.subr.mxu0 0.0
    %3452 = vmatpush2.msra.mxu0 0.0
    %3453 = vmatprep.subr.mxu0 0.0
    %3454 = vmatpush2.msra.mxu0 0.0
    %3455 = vmatprep.subr.mxu0 0.0
    %3456 = vmatpush2.msra.mxu0 0.0
    %3457 = vmatprep.subr.mxu0 0.0
    %3458 = vmatpush2.msra.mxu0 0.0
    %3459 = vmatprep.subr.mxu0 0.0
    %3460 = vmatpush2.msra.mxu0 0.0
    %3461 = vmatprep.subr.mxu0 0.0
    %3462 = vmatpush2.msra.mxu0 0.0
    %3463 = vmatprep.subr.mxu0 0.0
    %3464 = vmatpush2.msra.mxu0 0.0
    %3465 = vmatprep.subr.mxu0 0.0
    %3466 = vmatpush2.msra.mxu0 0.0
    %3467 = vmatprep.subr.mxu0 0.0
    %3468 = vmatpush2.msra.mxu0 0.0
    %3469 = vmatprep.subr.mxu0 0.0
    %3470 = vmatpush2.msra.mxu0 0.0
    %3471 = vmatprep.subr.mxu0 0.0
    %3472 = vmatpush2.msra.mxu0 0.0
    %3473 = vmatprep.subr.mxu0 0.0
    %3474 = vmatpush2.msra.mxu0 0.0
    %3475 = vmatprep.subr.mxu0 0.0
    %3476 = vmatpush2.msra.mxu0 0.0
    %3477 = vmatprep.subr.mxu0 0.0
    %3478 = vmatpush2.msra.mxu0 0.0
    %3479 = vmatprep.mubr.f32.mxu0 0.0
    %3480 = vmatmul.mubr.f32.gmra.mxu0 %v3392
    %v3481 = vpop.f32.mrf.mxu0
    %v3482 = vadd.f32 0.0, %v3481
    %v3483 = vpop.f32.mrf.mxu0
    %3484 = vmatprep.mubr.f32.mxu0 0.0
    %3485 = vmatmul.mubr.f32.gmra.mxu0 %v3395
    %v3486 = vpop.f32.mrf.mxu0
    %v3487 = vadd.f32 0.0, %v3486
    %v3488 = vpop.f32.mrf.mxu0
    %3489 = vmatprep.mubr.f32.mxu0 0.0
    %3490 = vmatmul.mubr.f32.gmra.mxu0 %v3398
    %v3491 = vpop.f32.mrf.mxu0
    %v3492 = vadd.f32 0.0, %v3491
    %v3493 = vpop.f32.mrf.mxu0
    %3494 = vmatprep.mubr.f32.mxu0 0.0
    %3495 = vmatmul.mubr.f32.gmra.mxu0 %v3401
    %v3496 = vpop.f32.mrf.mxu0
    %v3497 = vadd.f32 0.0, %v3496
    %v3498 = vpop.f32.mrf.mxu0
    %3499 = vmatprep.mubr.f32.mxu0 0.0
    %3500 = vmatmul.mubr.f32.gmra.mxu0 %v3404
    %v3501 = vpop.f32.mrf.mxu0
    %v3502 = vadd.f32 0.0, %v3501
    %v3503 = vpop.f32.mrf.mxu0
    %3504 = vmatprep.mubr.f32.mxu0 0.0
    %3505 = vmatmul.mubr.f32.gmra.mxu0 %v3407
    %v3506 = vpop.f32.mrf.mxu0
    %v3507 = vadd.f32 0.0, %v3506
    %v3508 = vpop.f32.mrf.mxu0
    %3509 = vmatprep.mubr.f32.mxu0 0.0
    %3510 = vmatmul.mubr.f32.gmra.mxu0 %v3410
    %v3511 = vpop.f32.mrf.mxu0
    %v3512 = vadd.f32 0.0, %v3511
    %v3513 = vpop.f32.mrf.mxu0
    %3514 = vmatprep.mubr.f32.mxu0 0.0
    %3515 = vmatmul.mubr.f32.gmra.mxu0 %v3413
    %v3516 = vpop.f32.mrf.mxu0
    %v3517 = vadd.f32 0.0, %v3516
    %v3518 = vpop.f32.mrf.mxu0
    %3519 = vdwg.mxu0
    %v3520 = vmul.f32 %v3482, %v179
    %v3521 = vmul.f32 %v3487, %v180
    %v3522 = vmul.f32 %v3492, %v181
    %v3523 = vmul.f32 %v3497, %v182
    %v3524 = vmul.f32 %v3502, %v183
    %v3525 = vmul.f32 %v3507, %v184
    %v3526 = vmul.f32 %v3512, %v185
    %v3527 = vmul.f32 %v3517, %v186
    %v3528 = vadd.f32 %v3520, %v3522
    %v3529 = vadd.f32 %v3521, %v3523
    %v3530 = vadd.f32 %v3528, %v3524
    %v3531 = vadd.f32 %v3529, %v3525
    %v3532 = vadd.f32 %v3530, %v3526
    %v3533 = vadd.f32 %v3531, %v3527
    %v3535 = vlaneseq
    %v3536 = vshrl.u32 %v3535, 7
    %v3537 = vsub.s32 0, %v3536
    %v3538 = vrot.slane %v2894, %v3537
    %v3541 = vsel %vm189, %v3532, 0
    %v3544 = vsel %vm189, %v3533, 0
    %3546 = vmatprep.subr.mxu0 0.0
    %3547 = vmatpush1.msra.mxu0 0.0
    %3548 = vmatprep.subr.mxu0 0.0
    %3549 = vmatpush1.msra.mxu0 0.0
    %3550 = vmatprep.subr.mxu0 0.0
    %3551 = vmatpush1.msra.mxu0 0.0
    %3552 = vmatprep.subr.mxu0 0.0
    %3553 = vmatpush1.msra.mxu0 0.0
    %3554 = vmatprep.subr.mxu0 0.0
    %3555 = vmatpush1.msra.mxu0 0.0
    %3556 = vmatprep.subr.mxu0 0.0
    %3557 = vmatpush1.msra.mxu0 0.0
    %3558 = vmatprep.subr.mxu0 0.0
    %3559 = vmatpush1.msra.mxu0 0.0
    %3560 = vmatprep.subr.mxu0 0.0
    %3561 = vmatpush1.msra.mxu0 0.0
    %3562 = vmatprep.subr.mxu0 0.0
    %3563 = vmatpush1.msra.mxu0 0.0
    %3564 = vmatprep.subr.mxu0 0.0
    %3565 = vmatpush1.msra.mxu0 0.0
    %3566 = vmatprep.subr.mxu0 0.0
    %3567 = vmatpush1.msra.mxu0 0.0
    %3568 = vmatprep.subr.mxu0 0.0
    %3569 = vmatpush1.msra.mxu0 0.0
    %3570 = vmatprep.subr.mxu0 0.0
    %3571 = vmatpush1.msra.mxu0 %v2892
    %3572 = vmatprep.subr.mxu0 0.0
    %3573 = vmatpush1.msra.mxu0 %v2891
    %3574 = vmatprep.subr.mxu0 0.0
    %3575 = vmatpush1.msra.mxu0 %v2890
    %3576 = vmatprep.subr.mxu0 0.0
    %3577 = vmatpush1.msra.mxu0 %v2889
    %3578 = vmatprep.subr.mxu0 0.0
    %3579 = vmatpush2.msra.mxu0 0.0
    %3580 = vmatprep.subr.mxu0 0.0
    %3581 = vmatpush2.msra.mxu0 0.0
    %3582 = vmatprep.subr.mxu0 0.0
    %3583 = vmatpush2.msra.mxu0 0.0
    %3584 = vmatprep.subr.mxu0 0.0
    %3585 = vmatpush2.msra.mxu0 0.0
    %3586 = vmatprep.subr.mxu0 0.0
    %3587 = vmatpush2.msra.mxu0 0.0
    %3588 = vmatprep.subr.mxu0 0.0
    %3589 = vmatpush2.msra.mxu0 0.0
    %3590 = vmatprep.subr.mxu0 0.0
    %3591 = vmatpush2.msra.mxu0 0.0
    %3592 = vmatprep.subr.mxu0 0.0
    %3593 = vmatpush2.msra.mxu0 0.0
    %3594 = vmatprep.subr.mxu0 0.0
    %3595 = vmatpush2.msra.mxu0 0.0
    %3596 = vmatprep.subr.mxu0 0.0
    %3597 = vmatpush2.msra.mxu0 0.0
    %3598 = vmatprep.subr.mxu0 0.0
    %3599 = vmatpush2.msra.mxu0 0.0
    %3600 = vmatprep.subr.mxu0 0.0
    %3601 = vmatpush2.msra.mxu0 0.0
    %3602 = vmatprep.subr.mxu0 0.0
    %3603 = vmatpush2.msra.mxu0 0.0
    %3604 = vmatprep.subr.mxu0 0.0
    %3605 = vmatpush2.msra.mxu0 0.0
    %3606 = vmatprep.subr.mxu0 0.0
    %3607 = vmatpush2.msra.mxu0 0.0
    %3608 = vmatprep.subr.mxu0 0.0
    %3609 = vmatpush2.msra.mxu0 0.0
    %3610 = vmatprep.mubr.f32.mxu0 0.0
    %3611 = vmatmul.mubr.f32.gmra.mxu0 %v3541
    %v3612 = vpop.f32.mrf.mxu0
    %v3613 = vadd.f32 %v3538, %v3612
    %v3614 = vpop.f32.mrf.mxu0
    %3615 = vmatprep.mubr.f32.mxu0 0.0
    %3616 = vmatmul.mubr.f32.gmra.mxu0 %v3544
    %v3617 = vpop.f32.mrf.mxu0
    %v3618 = vadd.f32 %v3538, %v3617
    %v3619 = vpop.f32.mrf.mxu0
    %3620 = vdwg.mxu0
    %v3621 = vadd.f32 %v2819, %v3613
    %v3622 = vadd.f32 %v2820, %v3618
    %s3623 = scalar_lea.vmem %s53, 1
    %v3624 = vld [vmem:[%s3623] sm:$0x1]
    %s3625 = scalar_lea.vmem %s55, 1
    %v3626 = vld [vmem:[%s3625] sm:$0x1]
    %v3627 = vsel %vm189, %v3621, 0.0
    %3628 = vadd.xlane.f32.xlu0 %v3627
    %v3629 = vpop.xlane.xlu0 %3628
    %v3630 = vsel %vm189, %v3622, 0.0
    %3631 = vadd.xlane.f32.xlu0 %v3630
    %v3632 = vpop.xlane.xlu0 %3631
    %v3633 = vmul.f32 %v3629, %v196
    %v3634 = vmul.f32 %v3632, %v196
    %v3635 = vsub.f32 %v3621, %v3633
    %v3636 = vsub.f32 %v3622, %v3634
    %v3637 = vmul.f32 %v3635, %v3635
    %v3638 = vmul.f32 %v3636, %v3636
    %v3639 = vsel %vm189, %v3637, 0.0
    %3640 = vadd.xlane.f32.xlu0 %v3639
    %v3641 = vpop.xlane.xlu0 %3640
    %v3642 = vsel %vm189, %v3638, 0.0
    %3643 = vadd.xlane.f32.xlu0 %v3642
    %v3644 = vpop.xlane.xlu0 %3643
    %v3645 = vmul.f32 %v3641, %v196
    %v3646 = vmul.f32 %v3644, %v196
    %v3647 = vadd.f32 %v3645, 1e-05
    %v3648 = vadd.f32 %v3646, 1e-05
    %v3649 = vrsqrt.pop %v3647
    %v3650 = vrsqrt.pop %v3648
    %v3651 = vmul.f32 %v3635, %v3649
    %v3652 = vmul.f32 %v3636, %v3650
    %v3654 = vlaneseq
    %v3655 = vshrl.u32 %v3654, 7
    %v3656 = vsub.s32 0, %v3655
    %v3657 = vrot.slane %v3624, %v3656
    %v3659 = vmul.f32 %v3651, %v3657
    %v3660 = vmul.f32 %v3652, %v3657
    %v3662 = vlaneseq
    %v3663 = vshrl.u32 %v3662, 7
    %v3664 = vsub.s32 0, %v3663
    %v3665 = vrot.slane %v3626, %v3664
    %v3667 = vadd.f32 %v3659, %v3665
    %v3668 = vadd.f32 %v3660, %v3665
    %s3669 = scalar_lea.vmem %s57, 32
    %v3670 = vld [vmem:[%s3669] sm:$0xff]
    %v3671 = vld [vmem:[%s3669 + $0x8] sm:$0xff]
    %v3672 = vld [vmem:[%s3669 + $0x10] sm:$0xff]
    %v3673 = vld [vmem:[%s3669 + $0x18] sm:$0xff]
    %s3674 = scalar_lea.vmem %s59, 1
    %v3675 = vld [vmem:[%s3674] sm:$0x1]
    %v3677 = vlaneseq
    %v3678 = vshrl.u32 %v3677, 7
    %v3679 = vsub.s32 0, %v3678
    %v3680 = vrot.slane %v3675, %v3679
    %v3683 = vsel %vm189, %v3667, 0
    %v3686 = vsel %vm189, %v3668, 0
    %3688 = vmatprep.subr.mxu0 0.0
    %3689 = vmatpush1.msra.mxu0 0.0
    %3690 = vmatprep.subr.mxu0 0.0
    %3691 = vmatpush1.msra.mxu0 0.0
    %3692 = vmatprep.subr.mxu0 0.0
    %3693 = vmatpush1.msra.mxu0 0.0
    %3694 = vmatprep.subr.mxu0 0.0
    %3695 = vmatpush1.msra.mxu0 0.0
    %3696 = vmatprep.subr.mxu0 0.0
    %3697 = vmatpush1.msra.mxu0 0.0
    %3698 = vmatprep.subr.mxu0 0.0
    %3699 = vmatpush1.msra.mxu0 0.0
    %3700 = vmatprep.subr.mxu0 0.0
    %3701 = vmatpush1.msra.mxu0 0.0
    %3702 = vmatprep.subr.mxu0 0.0
    %3703 = vmatpush1.msra.mxu0 0.0
    %3704 = vmatprep.subr.mxu0 0.0
    %3705 = vmatpush1.msra.mxu0 0.0
    %3706 = vmatprep.subr.mxu0 0.0
    %3707 = vmatpush1.msra.mxu0 0.0
    %3708 = vmatprep.subr.mxu0 0.0
    %3709 = vmatpush1.msra.mxu0 0.0
    %3710 = vmatprep.subr.mxu0 0.0
    %3711 = vmatpush1.msra.mxu0 0.0
    %3712 = vmatprep.subr.mxu0 0.0
    %3713 = vmatpush1.msra.mxu0 %v3673
    %3714 = vmatprep.subr.mxu0 0.0
    %3715 = vmatpush1.msra.mxu0 %v3672
    %3716 = vmatprep.subr.mxu0 0.0
    %3717 = vmatpush1.msra.mxu0 %v3671
    %3718 = vmatprep.subr.mxu0 0.0
    %3719 = vmatpush1.msra.mxu0 %v3670
    %3720 = vmatprep.subr.mxu0 0.0
    %3721 = vmatpush2.msra.mxu0 0.0
    %3722 = vmatprep.subr.mxu0 0.0
    %3723 = vmatpush2.msra.mxu0 0.0
    %3724 = vmatprep.subr.mxu0 0.0
    %3725 = vmatpush2.msra.mxu0 0.0
    %3726 = vmatprep.subr.mxu0 0.0
    %3727 = vmatpush2.msra.mxu0 0.0
    %3728 = vmatprep.subr.mxu0 0.0
    %3729 = vmatpush2.msra.mxu0 0.0
    %3730 = vmatprep.subr.mxu0 0.0
    %3731 = vmatpush2.msra.mxu0 0.0
    %3732 = vmatprep.subr.mxu0 0.0
    %3733 = vmatpush2.msra.mxu0 0.0
    %3734 = vmatprep.subr.mxu0 0.0
    %3735 = vmatpush2.msra.mxu0 0.0
    %3736 = vmatprep.subr.mxu0 0.0
    %3737 = vmatpush2.msra.mxu0 0.0
    %3738 = vmatprep.subr.mxu0 0.0
    %3739 = vmatpush2.msra.mxu0 0.0
    %3740 = vmatprep.subr.mxu0 0.0
    %3741 = vmatpush2.msra.mxu0 0.0
    %3742 = vmatprep.subr.mxu0 0.0
    %3743 = vmatpush2.msra.mxu0 0.0
    %3744 = vmatprep.subr.mxu0 0.0
    %3745 = vmatpush2.msra.mxu0 0.0
    %3746 = vmatprep.subr.mxu0 0.0
    %3747 = vmatpush2.msra.mxu0 0.0
    %3748 = vmatprep.subr.mxu0 0.0
    %3749 = vmatpush2.msra.mxu0 0.0
    %3750 = vmatprep.subr.mxu0 0.0
    %3751 = vmatpush2.msra.mxu0 0.0
    %3752 = vmatprep.mubr.f32.mxu0 0.0
    %3753 = vmatmul.mubr.f32.gmra.mxu0 %v3683
    %v3754 = vpop.f32.mrf.mxu0
    %v3755 = vadd.f32 %v3680, %v3754
    %v3756 = vpop.f32.mrf.mxu0
    %3757 = vmatprep.mubr.f32.mxu0 0.0
    %3758 = vmatmul.mubr.f32.gmra.mxu0 %v3686
    %v3759 = vpop.f32.mrf.mxu0
    %v3760 = vadd.f32 %v3680, %v3759
    %v3761 = vpop.f32.mrf.mxu0
    %3762 = vdwg.mxu0
    %v3763 = vmax.f32 %v3755, 0.0
    %v3764 = vmax.f32 %v3760, 0.0
    %s3765 = scalar_lea.vmem %s61, 64
    %v3766 = vld [vmem:[%s3765] sm:$0xff]
    %v3767 = vld [vmem:[%s3765 + $0x8] sm:$0xff]
    %v3768 = vld [vmem:[%s3765 + $0x10] sm:$0xff]
    %v3769 = vld [vmem:[%s3765 + $0x18] sm:$0xff]
    %v3770 = vld [vmem:[%s3765 + $0x20] sm:$0xff]
    %v3771 = vld [vmem:[%s3765 + $0x28] sm:$0xff]
    %v3772 = vld [vmem:[%s3765 + $0x30] sm:$0xff]
    %v3773 = vld [vmem:[%s3765 + $0x38] sm:$0xff]
    %v3775 = vsel %vm1926, %v3763, 0
    %v3778 = vsel %vm1926, %v3764, 0
    %3780 = vmatprep.subr.mxu0 0.0
    %3781 = vmatpush1.msra.mxu0 0.0
    %3782 = vmatprep.subr.mxu0 0.0
    %3783 = vmatpush1.msra.mxu0 0.0
    %3784 = vmatprep.subr.mxu0 0.0
    %3785 = vmatpush1.msra.mxu0 0.0
    %3786 = vmatprep.subr.mxu0 0.0
    %3787 = vmatpush1.msra.mxu0 0.0
    %3788 = vmatprep.subr.mxu0 0.0
    %3789 = vmatpush1.msra.mxu0 0.0
    %3790 = vmatprep.subr.mxu0 0.0
    %3791 = vmatpush1.msra.mxu0 0.0
    %3792 = vmatprep.subr.mxu0 0.0
    %3793 = vmatpush1.msra.mxu0 0.0
    %3794 = vmatprep.subr.mxu0 0.0
    %3795 = vmatpush1.msra.mxu0 0.0
    %3796 = vmatprep.subr.mxu0 0.0
    %3797 = vmatpush1.msra.mxu0 %v3773
    %3798 = vmatprep.subr.mxu0 0.0
    %3799 = vmatpush1.msra.mxu0 %v3772
    %3800 = vmatprep.subr.mxu0 0.0
    %3801 = vmatpush1.msra.mxu0 %v3771
    %3802 = vmatprep.subr.mxu0 0.0
    %3803 = vmatpush1.msra.mxu0 %v3770
    %3804 = vmatprep.subr.mxu0 0.0
    %3805 = vmatpush1.msra.mxu0 %v3769
    %3806 = vmatprep.subr.mxu0 0.0
    %3807 = vmatpush1.msra.mxu0 %v3768
    %3808 = vmatprep.subr.mxu0 0.0
    %3809 = vmatpush1.msra.mxu0 %v3767
    %3810 = vmatprep.subr.mxu0 0.0
    %3811 = vmatpush1.msra.mxu0 %v3766
    %3812 = vmatprep.subr.mxu0 0.0
    %3813 = vmatpush2.msra.mxu0 0.0
    %3814 = vmatprep.subr.mxu0 0.0
    %3815 = vmatpush2.msra.mxu0 0.0
    %3816 = vmatprep.subr.mxu0 0.0
    %3817 = vmatpush2.msra.mxu0 0.0
    %3818 = vmatprep.subr.mxu0 0.0
    %3819 = vmatpush2.msra.mxu0 0.0
    %3820 = vmatprep.subr.mxu0 0.0
    %3821 = vmatpush2.msra.mxu0 0.0
    %3822 = vmatprep.subr.mxu0 0.0
    %3823 = vmatpush2.msra.mxu0 0.0
    %3824 = vmatprep.subr.mxu0 0.0
    %3825 = vmatpush2.msra.mxu0 0.0
    %3826 = vmatprep.subr.mxu0 0.0
    %3827 = vmatpush2.msra.mxu0 0.0
    %3828 = vmatprep.subr.mxu0 0.0
    %3829 = vmatpush2.msra.mxu0 0.0
    %3830 = vmatprep.subr.mxu0 0.0
    %3831 = vmatpush2.msra.mxu0 0.0
    %3832 = vmatprep.subr.mxu0 0.0
    %3833 = vmatpush2.msra.mxu0 0.0
    %3834 = vmatprep.subr.mxu0 0.0
    %3835 = vmatpush2.msra.mxu0 0.0
    %3836 = vmatprep.subr.mxu0 0.0
    %3837 = vmatpush2.msra.mxu0 0.0
    %3838 = vmatprep.subr.mxu0 0.0
    %3839 = vmatpush2.msra.mxu0 0.0
    %3840 = vmatprep.subr.mxu0 0.0
    %3841 = vmatpush2.msra.mxu0 0.0
    %3842 = vmatprep.subr.mxu0 0.0
    %3843 = vmatpush2.msra.mxu0 0.0
    %3844 = vmatprep.mubr.f32.mxu0 0.0
    %3845 = vmatmul.mubr.f32.gmra.mxu0 %v3775
    %v3846 = vpop.f32.mrf.mxu0
    %v3847 = vadd.f32 0.0, %v3846
    %v3848 = vpop.f32.mrf.mxu0
    %3849 = vmatprep.mubr.f32.mxu0 0.0
    %3850 = vmatmul.mubr.f32.gmra.mxu0 %v3778
    %v3851 = vpop.f32.mrf.mxu0
    %v3852 = vadd.f32 0.0, %v3851
    %v3853 = vpop.f32.mrf.mxu0
    %3854 = vdwg.mxu0
    %v3855 = vadd.f32 %v3621, %v3847
    %v3856 = vadd.f32 %v3622, %v3852
    %s3857 = scalar_lea.vmem %s63, 1
    %v3858 = vld [vmem:[%s3857] sm:$0x1]
    %v3860 = vlaneseq
    %v3861 = vshrl.u32 %v3860, 7
    %v3862 = vsub.s32 0, %v3861
    %v3863 = vrot.slane %v3858, %v3862
    %v3865 = vadd.f32 %v3855, %v3863
    %v3866 = vadd.f32 %v3856, %v3863
    %v3867 = vld [vmem:[%s65] sm:$0x1]
    %v3868 = vld [vmem:[%s67] sm:$0x1]
    %v3869 = vsel %vm189, %v3865, 0.0
    %3870 = vadd.xlane.f32.xlu0 %v3869
    %v3871 = vpop.xlane.xlu0 %3870
    %v3872 = vsel %vm189, %v3866, 0.0
    %3873 = vadd.xlane.f32.xlu0 %v3872
    %v3874 = vpop.xlane.xlu0 %3873
    %v3875 = vmul.f32 %v3871, %v196
    %v3876 = vmul.f32 %v3874, %v196
    %v3877 = vsub.f32 %v3865, %v3875
    %v3878 = vsub.f32 %v3866, %v3876
    %v3879 = vmul.f32 %v3877, %v3877
    %v3880 = vmul.f32 %v3878, %v3878
    %v3881 = vsel %vm189, %v3879, 0.0
    %3882 = vadd.xlane.f32.xlu0 %v3881
    %v3883 = vpop.xlane.xlu0 %3882
    %v3884 = vsel %vm189, %v3880, 0.0
    %3885 = vadd.xlane.f32.xlu0 %v3884
    %v3886 = vpop.xlane.xlu0 %3885
    %v3887 = vmul.f32 %v3883, %v196
    %v3888 = vmul.f32 %v3886, %v196
    %v3889 = vadd.f32 %v3887, 1e-05
    %v3890 = vadd.f32 %v3888, 1e-05
    %v3891 = vrsqrt.pop %v3889
    %v3892 = vrsqrt.pop %v3890
    %v3893 = vmul.f32 %v3877, %v3891
    %v3894 = vmul.f32 %v3878, %v3892
    %v3896 = vlaneseq
    %v3897 = vshrl.u32 %v3896, 7
    %v3898 = vsub.s32 0, %v3897
    %v3899 = vrot.slane %v3867, %v3898
    %v3901 = vmul.f32 %v3893, %v3899
    %v3902 = vmul.f32 %v3894, %v3899
    %v3904 = vlaneseq
    %v3905 = vshrl.u32 %v3904, 7
    %v3906 = vsub.s32 0, %v3905
    %v3907 = vrot.slane %v3868, %v3906
    %v3909 = vadd.f32 %v3901, %v3907
    %v3910 = vadd.f32 %v3902, %v3907
    %v3911 = vld [vmem:[%s69] sm:$0xff]
    %v3912 = vld [vmem:[%s69 + $0x8] sm:$0xff]
    %v3913 = vld [vmem:[%s69 + $0x10] sm:$0xff]
    %v3914 = vld [vmem:[%s69 + $0x18] sm:$0xff]
    %v3915 = vld [vmem:[%s71] sm:$0x1]
    %v3917 = vlaneseq
    %v3918 = vshrl.u32 %v3917, 7
    %v3919 = vsub.s32 0, %v3918
    %v3920 = vrot.slane %v3915, %v3919
    %v3923 = vsel %vm189, %v3909, 0
    %v3926 = vsel %vm189, %v3910, 0
    %3928 = vmatprep.subr.mxu0 0.0
    %3929 = vmatpush1.msra.mxu0 0.0
    %3930 = vmatprep.subr.mxu0 0.0
    %3931 = vmatpush1.msra.mxu0 0.0
    %3932 = vmatprep.subr.mxu0 0.0
    %3933 = vmatpush1.msra.mxu0 0.0
    %3934 = vmatprep.subr.mxu0 0.0
    %3935 = vmatpush1.msra.mxu0 0.0
    %3936 = vmatprep.subr.mxu0 0.0
    %3937 = vmatpush1.msra.mxu0 0.0
    %3938 = vmatprep.subr.mxu0 0.0
    %3939 = vmatpush1.msra.mxu0 0.0
    %3940 = vmatprep.subr.mxu0 0.0
    %3941 = vmatpush1.msra.mxu0 0.0
    %3942 = vmatprep.subr.mxu0 0.0
    %3943 = vmatpush1.msra.mxu0 0.0
    %3944 = vmatprep.subr.mxu0 0.0
    %3945 = vmatpush1.msra.mxu0 0.0
    %3946 = vmatprep.subr.mxu0 0.0
    %3947 = vmatpush1.msra.mxu0 0.0
    %3948 = vmatprep.subr.mxu0 0.0
    %3949 = vmatpush1.msra.mxu0 0.0
    %3950 = vmatprep.subr.mxu0 0.0
    %3951 = vmatpush1.msra.mxu0 0.0
    %3952 = vmatprep.subr.mxu0 0.0
    %3953 = vmatpush1.msra.mxu0 %v3914
    %3954 = vmatprep.subr.mxu0 0.0
    %3955 = vmatpush1.msra.mxu0 %v3913
    %3956 = vmatprep.subr.mxu0 0.0
    %3957 = vmatpush1.msra.mxu0 %v3912
    %3958 = vmatprep.subr.mxu0 0.0
    %3959 = vmatpush1.msra.mxu0 %v3911
    %3960 = vmatprep.subr.mxu0 0.0
    %3961 = vmatpush2.msra.mxu0 0.0
    %3962 = vmatprep.subr.mxu0 0.0
    %3963 = vmatpush2.msra.mxu0 0.0
    %3964 = vmatprep.subr.mxu0 0.0
    %3965 = vmatpush2.msra.mxu0 0.0
    %3966 = vmatprep.subr.mxu0 0.0
    %3967 = vmatpush2.msra.mxu0 0.0
    %3968 = vmatprep.subr.mxu0 0.0
    %3969 = vmatpush2.msra.mxu0 0.0
    %3970 = vmatprep.subr.mxu0 0.0
    %3971 = vmatpush2.msra.mxu0 0.0
    %3972 = vmatprep.subr.mxu0 0.0
    %3973 = vmatpush2.msra.mxu0 0.0
    %3974 = vmatprep.subr.mxu0 0.0
    %3975 = vmatpush2.msra.mxu0 0.0
    %3976 = vmatprep.subr.mxu0 0.0
    %3977 = vmatpush2.msra.mxu0 0.0
    %3978 = vmatprep.subr.mxu0 0.0
    %3979 = vmatpush2.msra.mxu0 0.0
    %3980 = vmatprep.subr.mxu0 0.0
    %3981 = vmatpush2.msra.mxu0 0.0
    %3982 = vmatprep.subr.mxu0 0.0
    %3983 = vmatpush2.msra.mxu0 0.0
    %3984 = vmatprep.subr.mxu0 0.0
    %3985 = vmatpush2.msra.mxu0 0.0
    %3986 = vmatprep.subr.mxu0 0.0
    %3987 = vmatpush2.msra.mxu0 0.0
    %3988 = vmatprep.subr.mxu0 0.0
    %3989 = vmatpush2.msra.mxu0 0.0
    %3990 = vmatprep.subr.mxu0 0.0
    %3991 = vmatpush2.msra.mxu0 0.0
    %3992 = vmatprep.mubr.f32.mxu0 0.0
    %3993 = vmatmul.mubr.f32.gmra.mxu0 %v3923
    %v3994 = vpop.f32.mrf.mxu0
    %v3995 = vadd.f32 %v3920, %v3994
    %v3996 = vpop.f32.mrf.mxu0
    %3997 = vmatprep.mubr.f32.mxu0 0.0
    %3998 = vmatmul.mubr.f32.gmra.mxu0 %v3926
    %v3999 = vpop.f32.mrf.mxu0
    %v4000 = vadd.f32 %v3920, %v3999
    %v4001 = vpop.f32.mrf.mxu0
    %4002 = vdwg.mxu0
    %4003 = vst [vmem:[#allocation2] sm:$0xff] %v3995
    %4004 = vst [vmem:[#allocation2 + $0x8] sm:$0xff] %v4000
    // Predicated region
    $region146: #{fwd.1} parent=1 // pred_check
      _
    $region147: #{fwd.1} parent=1 // pred_check_branch
      %4006 = sbr.rel (0) target = $region149
    $region148: #{fwd.1} parent=1 // pred_region
      %s4008 = ssub.s32 256, 256
      %4009 = vsyncadd [#allocation3], %s4008
      %s4010 = sshll.u32 [#allocation2], 4
      %s4011 = int_to_ptr.vmem [resolvable:$true] %s4010
      %4016 = dma.vmem_to_hbm [thread:$0]  %s4011, 256, %s73, [#allocation3], 128, 128, 8
    $region149: #{fwd.1} parent=1 // pred_fallthru
      _
    // Predicated region
    $region150: #{fwd.1} parent=1 // pred_check
      _
    $region151: #{fwd.1} parent=1 // pred_check_branch
      %4018 = sbr.rel (0) target = $region153
    $region152: #{fwd.1} parent=1 // pred_region
      %4019 = dma.done [#allocation3], 256
    $region153: #{fwd.1} parent=1 // pred_fallthru
      _
    %4020 = vsyncpa [#allocation3], 1

</llo_original>
